<compile_context>
chip_gen: v5e
topology: v5e:2x2
jax: 0.10.0
libtpu: 0.0.40
codegen_flags: <defaults>
</compile_context>

<pallas_src>
import jax
import jax.numpy as jnp
from jax import lax
from jax.experimental import pallas as pl
from jax.experimental.pallas import tpu as pltpu

# -------------------- config (SMALL, consistent with the module) --------------------
NUM_DECODER_TOKENS = 16   # config.num_decoder_tokens
LATENT_DIM = 32           # config.latent_dim
BATCH = 2
SEQ = 8

_HP = lax.Precision.HIGHEST


# ------------------------------------ kernel ----------------------------------------
def _lstm_decoder_kernel(x_ref, s0_ref, wpack_ref, dpack_ref,
                         out_ref, sn_ref, xp_scr):
    """Single invocation: full LSTM recurrence + dense projection.

    x_ref     : (T*B, D_in)        time-major flattened inputs (row = t*B + b)
    s0_ref    : (2B, H)            rows [0:B) = h0, rows [B:2B) = c0
    wpack_ref : (D_in+H+1, 4H)     rows [0:D_in)=W_ih^T, [D_in:D_in+H)=W_hh^T,
                                   last row = bias_ih + bias_hh.
                                   Gate column order is (i, f, o, g).
    dpack_ref : (H+1, D_out)       rows [0:H) = dense.weight^T, last row = dense bias
    out_ref   : (B, T*D_out)       lane block t of row b = dense(h_t)[b]
    sn_ref    : (2B, H)            rows [0:B) = h_n, rows [B:2B) = c_n
    xp_scr    : VMEM (T*B, 4H)     precomputed input-projection gate pre-activations
    """
    D_in = x_ref.shape[1]
    B = s0_ref.shape[0] // 2
    H = s0_ref.shape[1]
    TB = x_ref.shape[0]
    T = TB // B
    D_out = dpack_ref.shape[1]

    # ---- unpack packed operands (static ref slices, zero runtime cost) -------------
    wih = wpack_ref[0:D_in, :]                       # (D_in, 4H)
    whh = wpack_ref[D_in:D_in + H, :]                # (H, 4H)   hoisted, reused T times
    bias = wpack_ref[D_in + H:D_in + H + 1, :]       # (1, 4H)
    wd = dpack_ref[0:H, :]                           # (H, D_out)
    bd = dpack_ref[H:H + 1, :]                       # (1, D_out)

    # ---- phase 1: input projection for every timestep, one MXU matmul (+ bias) -----
    xp_scr[...] = (jnp.dot(x_ref[...], wih,
                           preferred_element_type=jnp.float32, precision=_HP)
                   + bias)

    h = s0_ref[0:B, :]
    c = s0_ref[B:2 * B, :]

    # ---- phase 2: serial recurrence — only h @ W_hh is on the critical path --------
    # T is short & static: fully unrolled so the LLO scheduler sees across steps;
    # h/c stay in vregs, no hidden-state scratch.
    for t in range(T):
        gates = (xp_scr[t * B:(t + 1) * B, :]
                 + jnp.dot(h, whh, preferred_element_type=jnp.float32,
                           precision=_HP))
        # gate order (i, f, o, g): one sigmoid over 3H lanes, one tanh over H lanes
        sig = jax.nn.sigmoid(gates[:, 0:3 * H])
        g_g = jnp.tanh(gates[:, 3 * H:4 * H])
        i_g = sig[:, 0:H]
        f_g = sig[:, H:2 * H]
        o_g = sig[:, 2 * H:3 * H]
        c = f_g * c + i_g * g_g
        h = o_g * jnp.tanh(c)

        # ---- phase 3 (per step, off the serial chain): decoder_dense ---------------
        # Placed into lane block t of the lane-dense (B, T*D_out) output.
        y = (jnp.dot(h, wd, preferred_element_type=jnp.float32, precision=_HP)
             + bd)
        out_ref[:, t * D_out:(t + 1) * D_out] = y

    # final states, packed into one output buffer
    sn_ref[0:B, :] = h
    sn_ref[B:2 * B, :] = c


# ------------------------------------ wrapper ----------------------------------------
@jax.jit
def decoder_model_lstm_forward(decoder_inputs, encoder_states, params):
    """decoder_inputs: (B, T, D_in) float32 (batch_first, like PyTorch).
    encoder_states: tuple (h0, c0), each (1, B, H).
    params: (W_ih^T, W_hh^T, bias_ih+bias_hh (1,4H), W_d^T, b_d (1,D_out)),
            gate order (i, f, g, o) as in PyTorch.
    Returns (final_outputs (B, T, D_out), (h_n, c_n) each (1, B, H))."""
    h0_full, c0_full = encoder_states
    wih_t, whh_t, bias, wd_t, bd = params

    B, T, D_in = decoder_inputs.shape
    H = h0_full.shape[-1]
    D_out = wd_t.shape[-1]

    # Gate-column permutation (i, f, g, o) -> (i, f, o, g): sigmoid gates first,
    # tanh gate last (halves EUP passes on the serial path in-kernel).
    def perm(w):
        return jnp.concatenate(
            [w[..., 0:2 * H], w[..., 3 * H:4 * H], w[..., 2 * H:3 * H]], axis=-1)

    # Pack the tiny operands (done in XLA, outside the kernel — free).
    wpack = jnp.concatenate([perm(wih_t), perm(whh_t), perm(bias)], axis=0)  # (D_in+H+1, 4H)
    dpack = jnp.concatenate([wd_t, bd], axis=0)                              # (H+1, D_out)
    s0 = jnp.concatenate([h0_full[0], c0_full[0]], axis=0)                   # (2B, H)

    # Time-major flatten (tiny, ~2 KB) so the kernel sees contiguous B-row blocks
    # per timestep for the recurrence.
    x_tm = jnp.transpose(decoder_inputs, (1, 0, 2)).reshape(T * B, D_in)

    full2d = lambda i: (0, 0)

    # NOTE: at grid=(1,) there is nothing to pipeline; default buffering of these
    # tiny whole-array blocks is already negligible, so no pipeline_mode override.
    out, sn = pl.pallas_call(
        _lstm_decoder_kernel,
        out_shape=(
            jax.ShapeDtypeStruct((B, T * D_out), jnp.float32),
            jax.ShapeDtypeStruct((2 * B, H), jnp.float32),
        ),
        grid_spec=pltpu.PrefetchScalarGridSpec(
            num_scalar_prefetch=0,
            grid=(1,),                                       # whole problem, one step
            in_specs=[
                pl.BlockSpec((T * B, D_in), full2d),         # x (time-major, flat)
                pl.BlockSpec((2 * B, H), full2d),            # [h0; c0]
                pl.BlockSpec((D_in + H + 1, 4 * H), full2d), # [W_ih^T; W_hh^T; bias]
                pl.BlockSpec((H + 1, D_out), full2d),        # [W_d^T; b_d]
            ],
            out_specs=[
                pl.BlockSpec((B, T * D_out), full2d),        # lane-dense dense outputs
                pl.BlockSpec((2 * B, H), full2d),            # [h_n; c_n]
            ],
            scratch_shapes=[
                pltpu.VMEM((T * B, 4 * H), jnp.float32),     # input-projection gates
            ],
        ),
        compiler_params=pltpu.CompilerParams(
            dimension_semantics=("arbitrary",)),
    )(x_tm, s0, wpack, dpack)

    final_outputs = out.reshape(B, T, D_out)   # contiguous reshape, no transpose
    h_n = sn[0:B][None]                        # (1, B, H)
    c_n = sn[B:2 * B][None]
    return final_outputs, (h_n, c_n)


# --------------------------- pure-JAX reference (for check) --------------------------
def reference_forward(decoder_inputs, encoder_states, params):
    h0_full, c0_full = encoder_states
    wih_t, whh_t, bias, wd_t, bd = params
    H = h0_full.shape[-1]

    def step(carry, x_t):
        h, c = carry
        gates = (jnp.dot(x_t, wih_t, precision=_HP)
                 + jnp.dot(h, whh_t, precision=_HP) + bias)
        i = jax.nn.sigmoid(gates[:, 0 * H:1 * H])
        f = jax.nn.sigmoid(gates[:, 1 * H:2 * H])
        g = jnp.tanh(gates[:, 2 * H:3 * H])
        o = jax.nn.sigmoid(gates[:, 3 * H:4 * H])
        c_new = f * c + i * g
        h_new = o * jnp.tanh(c_new)
        return (h_new, c_new), h_new

    x_tbd = jnp.transpose(decoder_inputs, (1, 0, 2))
    (h_n, c_n), hs = lax.scan(step, (h0_full[0], c0_full[0]), x_tbd)
    outs = jnp.dot(hs, wd_t, precision=_HP) + bd          # (T, B, D_out)
    return jnp.transpose(outs, (1, 0, 2)), (h_n[None], c_n[None])


# ------------------------------------- main ------------------------------------------
if __name__ == "__main__":
    key = jax.random.PRNGKey(0)
    ks = jax.random.split(key, 10)

    D_in, H, D_out = NUM_DECODER_TOKENS, LATENT_DIM, NUM_DECODER_TOKENS
    bound = 1.0 / (H ** 0.5)   # PyTorch default LSTM/Linear init range

    # Parameters (PyTorch shapes noted; stored pre-transposed for x @ W)
    w_ih = jax.random.uniform(ks[0], (4 * H, D_in), jnp.float32, -bound, bound)  # weight_ih_l0
    w_hh = jax.random.uniform(ks[1], (4 * H, H), jnp.float32, -bound, bound)     # weight_hh_l0
    b_ih = jax.random.uniform(ks[2], (4 * H,), jnp.float32, -bound, bound)
    b_hh = jax.random.uniform(ks[3], (4 * H,), jnp.float32, -bound, bound)
    w_d = jax.random.uniform(ks[4], (D_out, H), jnp.float32, -bound, bound)      # dense.weight
    b_d = jax.random.uniform(ks[5], (D_out,), jnp.float32, -bound, bound)

    params = (w_ih.T, w_hh.T, (b_ih + b_hh)[None, :], w_d.T, b_d[None, :])

    # Inputs
    decoder_inputs = jax.random.normal(ks[6], (BATCH, SEQ, D_in), jnp.float32)
    h0 = jax.random.normal(ks[7], (1, BATCH, H), jnp.float32)
    c0 = jax.random.normal(ks[8], (1, BATCH, H), jnp.float32)
    encoder_states = (h0, c0)

    final_outputs, (h_n, c_n) = decoder_model_lstm_forward(
        decoder_inputs, encoder_states, params)
    jax.block_until_ready((final_outputs, h_n, c_n))

    ref_out, (ref_h, ref_c) = reference_forward(decoder_inputs, encoder_states, params)
    assert final_outputs.shape == (BATCH, SEQ, D_out)
    assert h_n.shape == (1, BATCH, H) and c_n.shape == (1, BATCH, H)
    assert jnp.allclose(final_outputs, ref_out, rtol=1e-3, atol=1e-3)
    assert jnp.allclose(h_n, ref_h, rtol=1e-3, atol=1e-3)
    assert jnp.allclose(c_n, ref_c, rtol=1e-3, atol=1e-3)

    print("KERNEL_OK")
</pallas_src>

<mosaic_0001>
module attributes {stable_mosaic.version = 11 : i64} {
  func.func @_lstm_decoder_kernel(%arg0: i32, %arg1: memref<16x16xf32, #tpu.memory_space<vmem>>, %arg2: memref<4x32xf32, #tpu.memory_space<vmem>>, %arg3: memref<49x128xf32, #tpu.memory_space<vmem>>, %arg4: memref<33x16xf32, #tpu.memory_space<vmem>>, %arg5: memref<2x128xf32, #tpu.memory_space<vmem>>, %arg6: memref<4x32xf32, #tpu.memory_space<vmem>>, %arg7: memref<16x128xf32, #tpu.memory_space<vmem>>) attributes {dimension_semantics = [#tpu.dimension_semantics<arbitrary>], iteration_bounds = array<i64: 1>, scalar_prefetch = 0 : i64, scratch_operands = 1 : i64, tpu.core_type = #tpu.core_type<tc>, window_params = [{pipeline_mode = #tpu.pipeline_mode<synchronous>, transform_indices = @transform_0, window_bounds = array<i64: 16, 16>}, {pipeline_mode = #tpu.pipeline_mode<synchronous>, transform_indices = @transform_1, window_bounds = array<i64: 4, 32>}, {pipeline_mode = #tpu.pipeline_mode<synchronous>, transform_indices = @transform_2, window_bounds = array<i64: 49, 128>}, {pipeline_mode = #tpu.pipeline_mode<synchronous>, transform_indices = @transform_3, window_bounds = array<i64: 33, 16>}, {pipeline_mode = #tpu.pipeline_mode<synchronous>, transform_indices = @transform_4, window_bounds = array<i64: 2, 128>}, {pipeline_mode = #tpu.pipeline_mode<synchronous>, transform_indices = @transform_5, window_bounds = array<i64: 4, 32>}]} {
    %c0 = arith.constant 0 : index
    %c0_0 = arith.constant 0 : index
    %0 = vector.load %arg3[%c0, %c0_0] : memref<49x128xf32, #tpu.memory_space<vmem>>, vector<16x128xf32>
    %c16 = arith.constant 16 : index
    %c0_1 = arith.constant 0 : index
    %1 = vector.load %arg3[%c16, %c0_1] : memref<49x128xf32, #tpu.memory_space<vmem>>, vector<32x128xf32>
    %c48 = arith.constant 48 : index
    %c0_2 = arith.constant 0 : index
    %2 = vector.load %arg3[%c48, %c0_2] : memref<49x128xf32, #tpu.memory_space<vmem>>, vector<1x128xf32>
    %c0_3 = arith.constant 0 : index
    %c0_4 = arith.constant 0 : index
    %3 = vector.load %arg4[%c0_3, %c0_4] : memref<33x16xf32, #tpu.memory_space<vmem>>, vector<32x16xf32>
    %c32 = arith.constant 32 : index
    %c0_5 = arith.constant 0 : index
    %4 = vector.load %arg4[%c32, %c0_5] : memref<33x16xf32, #tpu.memory_space<vmem>>, vector<1x16xf32>
    %c0_6 = arith.constant 0 : index
    %c0_7 = arith.constant 0 : index
    %5 = vector.load %arg1[%c0_6, %c0_7] : memref<16x16xf32, #tpu.memory_space<vmem>>, vector<16x16xf32>
    %cst = arith.constant dense<0.000000e+00> : vector<16x128xf32>
    %6 = tpu.matmul %5, %0, %cst {dimension_numbers = #tpu.dot_dimension_numbers<[1], [0], [0], [1], [0, 0, 1, 1], [], []>, precision = #tpu.contract_precision<fp32>} : vector<16x16xf32>, vector<16x128xf32>, vector<16x128xf32> -> vector<16x128xf32>
    %7 = vector.broadcast %2 : vector<1x128xf32> to vector<16x128xf32>
    %8 = arith.addf %6, %7 : vector<16x128xf32>
    %c0_8 = arith.constant 0 : index
    %c0_9 = arith.constant 0 : index
    %9 = vector.load %arg7[%c0_8, %c0_9] : memref<16x128xf32, #tpu.memory_space<vmem>>, vector<16x128xf32>
    tpu.vector_store %arg7[%c0_8, %c0_9], %8 {strides = array<i32>} : memref<16x128xf32, #tpu.memory_space<vmem>>, vector<16x128xf32>,
    %c0_10 = arith.constant 0 : index
    %c0_11 = arith.constant 0 : index
    %10 = vector.load %arg2[%c0_10, %c0_11] : memref<4x32xf32, #tpu.memory_space<vmem>>, vector<2x32xf32>
    %c2 = arith.constant 2 : index
    %c0_12 = arith.constant 0 : index
    %11 = vector.load %arg2[%c2, %c0_12] : memref<4x32xf32, #tpu.memory_space<vmem>>, vector<2x32xf32>
    %c0_13 = arith.constant 0 : index
    %c0_14 = arith.constant 0 : index
    %12 = vector.load %arg7[%c0_13, %c0_14] : memref<16x128xf32, #tpu.memory_space<vmem>>, vector<2x128xf32>
    %cst_15 = arith.constant dense<0.000000e+00> : vector<2x128xf32>
    %13 = tpu.matmul %10, %1, %cst_15 {dimension_numbers = #tpu.dot_dimension_numbers<[1], [0], [0], [1], [0, 0, 1, 1], [], []>, precision = #tpu.contract_precision<fp32>} : vector<2x32xf32>, vector<32x128xf32>, vector<2x128xf32> -> vector<2x128xf32>
    %14 = arith.addf %12, %13 : vector<2x128xf32>
    %15 = vector.extract_strided_slice %14 {offsets = [0, 0], sizes = [2, 96], strides = [1, 1]} : vector<2x128xf32> to vector<2x96xf32>
    %16 = arith.negf %15 : vector<2x96xf32>
    %17 = math.exp %16 : vector<2x96xf32>
    %cst_16 = arith.constant 1.000000e+00 : f32
    %18 = vector.broadcast %cst_16 : f32 to vector<2x96xf32>
    %19 = arith.addf %18, %17 : vector<2x96xf32>
    %20 = arith.divf %18, %19 : vector<2x96xf32>
    %21 = vector.extract_strided_slice %14 {offsets = [0, 96], sizes = [2, 32], strides = [1, 1]} : vector<2x128xf32> to vector<2x32xf32>
    %22 = math.tanh %21 : vector<2x32xf32>
    %23 = vector.extract_strided_slice %20 {offsets = [0, 0], sizes = [2, 32], strides = [1, 1]} : vector<2x96xf32> to vector<2x32xf32>
    %24 = vector.extract_strided_slice %20 {offsets = [0, 32], sizes = [2, 32], strides = [1, 1]} : vector<2x96xf32> to vector<2x32xf32>
    %25 = vector.extract_strided_slice %20 {offsets = [0, 64], sizes = [2, 32], strides = [1, 1]} : vector<2x96xf32> to vector<2x32xf32>
    %26 = arith.mulf %24, %11 : vector<2x32xf32>
    %27 = arith.mulf %23, %22 : vector<2x32xf32>
    %28 = arith.addf %26, %27 : vector<2x32xf32>
    %29 = math.tanh %28 : vector<2x32xf32>
    %30 = arith.mulf %25, %29 : vector<2x32xf32>
    %cst_17 = arith.constant dense<0.000000e+00> : vector<2x16xf32>
    %31 = tpu.matmul %30, %3, %cst_17 {dimension_numbers = #tpu.dot_dimension_numbers<[1], [0], [0], [1], [0, 0, 1, 1], [], []>, precision = #tpu.contract_precision<fp32>} : vector<2x32xf32>, vector<32x16xf32>, vector<2x16xf32> -> vector<2x16xf32>
    %32 = vector.broadcast %4 : vector<1x16xf32> to vector<2x16xf32>
    %33 = arith.addf %31, %32 : vector<2x16xf32>
    %c0_18 = arith.constant 0 : index
    %c0_19 = arith.constant 0 : index
    %34 = vector.load %arg5[%c0_18, %c0_19] : memref<2x128xf32, #tpu.memory_space<vmem>>, vector<2x16xf32>
    tpu.vector_store %arg5[%c0_18, %c0_19], %33 {strides = array<i32>} : memref<2x128xf32, #tpu.memory_space<vmem>>, vector<2x16xf32>,
    %c2_20 = arith.constant 2 : index
    %c0_21 = arith.constant 0 : index
    %35 = vector.load %arg7[%c2_20, %c0_21] : memref<16x128xf32, #tpu.memory_space<vmem>>, vector<2x128xf32>
    %cst_22 = arith.constant dense<0.000000e+00> : vector<2x128xf32>
    %36 = tpu.matmul %30, %1, %cst_22 {dimension_numbers = #tpu.dot_dimension_numbers<[1], [0], [0], [1], [0, 0, 1, 1], [], []>, precision = #tpu.contract_precision<fp32>} : vector<2x32xf32>, vector<32x128xf32>, vector<2x128xf32> -> vector<2x128xf32>
    %37 = arith.addf %35, %36 : vector<2x128xf32>
    %38 = vector.extract_strided_slice %37 {offsets = [0, 0], sizes = [2, 96], strides = [1, 1]} : vector<2x128xf32> to vector<2x96xf32>
    %39 = arith.negf %38 : vector<2x96xf32>
    %40 = math.exp %39 : vector<2x96xf32>
    %cst_23 = arith.constant 1.000000e+00 : f32
    %41 = vector.broadcast %cst_23 : f32 to vector<2x96xf32>
    %42 = arith.addf %41, %40 : vector<2x96xf32>
    %43 = arith.divf %41, %42 : vector<2x96xf32>
    %44 = vector.extract_strided_slice %37 {offsets = [0, 96], sizes = [2, 32], strides = [1, 1]} : vector<2x128xf32> to vector<2x32xf32>
    %45 = math.tanh %44 : vector<2x32xf32>
    %46 = vector.extract_strided_slice %43 {offsets = [0, 0], sizes = [2, 32], strides = [1, 1]} : vector<2x96xf32> to vector<2x32xf32>
    %47 = vector.extract_strided_slice %43 {offsets = [0, 32], sizes = [2, 32], strides = [1, 1]} : vector<2x96xf32> to vector<2x32xf32>
    %48 = vector.extract_strided_slice %43 {offsets = [0, 64], sizes = [2, 32], strides = [1, 1]} : vector<2x96xf32> to vector<2x32xf32>
    %49 = arith.mulf %47, %28 : vector<2x32xf32>
    %50 = arith.mulf %46, %45 : vector<2x32xf32>
    %51 = arith.addf %49, %50 : vector<2x32xf32>
    %52 = math.tanh %51 : vector<2x32xf32>
    %53 = arith.mulf %48, %52 : vector<2x32xf32>
    %cst_24 = arith.constant dense<0.000000e+00> : vector<2x16xf32>
    %54 = tpu.matmul %53, %3, %cst_24 {dimension_numbers = #tpu.dot_dimension_numbers<[1], [0], [0], [1], [0, 0, 1, 1], [], []>, precision = #tpu.contract_precision<fp32>} : vector<2x32xf32>, vector<32x16xf32>, vector<2x16xf32> -> vector<2x16xf32>
    %55 = vector.broadcast %4 : vector<1x16xf32> to vector<2x16xf32>
    %56 = arith.addf %54, %55 : vector<2x16xf32>
    %c0_25 = arith.constant 0 : index
    %c16_26 = arith.constant 16 : index
    %57 = vector.load %arg5[%c0_25, %c16_26] : memref<2x128xf32, #tpu.memory_space<vmem>>, vector<2x16xf32>
    tpu.vector_store %arg5[%c0_25, %c16_26], %56 {strides = array<i32>} : memref<2x128xf32, #tpu.memory_space<vmem>>, vector<2x16xf32>,
    %c4 = arith.constant 4 : index
    %c0_27 = arith.constant 0 : index
    %58 = vector.load %arg7[%c4, %c0_27] : memref<16x128xf32, #tpu.memory_space<vmem>>, vector<2x128xf32>
    %cst_28 = arith.constant dense<0.000000e+00> : vector<2x128xf32>
    %59 = tpu.matmul %53, %1, %cst_28 {dimension_numbers = #tpu.dot_dimension_numbers<[1], [0], [0], [1], [0, 0, 1, 1], [], []>, precision = #tpu.contract_precision<fp32>} : vector<2x32xf32>, vector<32x128xf32>, vector<2x128xf32> -> vector<2x128xf32>
    %60 = arith.addf %58, %59 : vector<2x128xf32>
    %61 = vector.extract_strided_slice %60 {offsets = [0, 0], sizes = [2, 96], strides = [1, 1]} : vector<2x128xf32> to vector<2x96xf32>
    %62 = arith.negf %61 : vector<2x96xf32>
    %63 = math.exp %62 : vector<2x96xf32>
    %cst_29 = arith.constant 1.000000e+00 : f32
    %64 = vector.broadcast %cst_29 : f32 to vector<2x96xf32>
    %65 = arith.addf %64, %63 : vector<2x96xf32>
    %66 = arith.divf %64, %65 : vector<2x96xf32>
    %67 = vector.extract_strided_slice %60 {offsets = [0, 96], sizes = [2, 32], strides = [1, 1]} : vector<2x128xf32> to vector<2x32xf32>
    %68 = math.tanh %67 : vector<2x32xf32>
    %69 = vector.extract_strided_slice %66 {offsets = [0, 0], sizes = [2, 32], strides = [1, 1]} : vector<2x96xf32> to vector<2x32xf32>
    %70 = vector.extract_strided_slice %66 {offsets = [0, 32], sizes = [2, 32], strides = [1, 1]} : vector<2x96xf32> to vector<2x32xf32>
    %71 = vector.extract_strided_slice %66 {offsets = [0, 64], sizes = [2, 32], strides = [1, 1]} : vector<2x96xf32> to vector<2x32xf32>
    %72 = arith.mulf %70, %51 : vector<2x32xf32>
    %73 = arith.mulf %69, %68 : vector<2x32xf32>
    %74 = arith.addf %72, %73 : vector<2x32xf32>
    %75 = math.tanh %74 : vector<2x32xf32>
    %76 = arith.mulf %71, %75 : vector<2x32xf32>
    %cst_30 = arith.constant dense<0.000000e+00> : vector<2x16xf32>
    %77 = tpu.matmul %76, %3, %cst_30 {dimension_numbers = #tpu.dot_dimension_numbers<[1], [0], [0], [1], [0, 0, 1, 1], [], []>, precision = #tpu.contract_precision<fp32>} : vector<2x32xf32>, vector<32x16xf32>, vector<2x16xf32> -> vector<2x16xf32>
    %78 = vector.broadcast %4 : vector<1x16xf32> to vector<2x16xf32>
    %79 = arith.addf %77, %78 : vector<2x16xf32>
    %c0_31 = arith.constant 0 : index
    %c32_32 = arith.constant 32 : index
    %80 = vector.load %arg5[%c0_31, %c32_32] : memref<2x128xf32, #tpu.memory_space<vmem>>, vector<2x16xf32>
    tpu.vector_store %arg5[%c0_31, %c32_32], %79 {strides = array<i32>} : memref<2x128xf32, #tpu.memory_space<vmem>>, vector<2x16xf32>,
    %c6 = arith.constant 6 : index
    %c0_33 = arith.constant 0 : index
    %81 = vector.load %arg7[%c6, %c0_33] : memref<16x128xf32, #tpu.memory_space<vmem>>, vector<2x128xf32>
    %cst_34 = arith.constant dense<0.000000e+00> : vector<2x128xf32>
    %82 = tpu.matmul %76, %1, %cst_34 {dimension_numbers = #tpu.dot_dimension_numbers<[1], [0], [0], [1], [0, 0, 1, 1], [], []>, precision = #tpu.contract_precision<fp32>} : vector<2x32xf32>, vector<32x128xf32>, vector<2x128xf32> -> vector<2x128xf32>
    %83 = arith.addf %81, %82 : vector<2x128xf32>
    %84 = vector.extract_strided_slice %83 {offsets = [0, 0], sizes = [2, 96], strides = [1, 1]} : vector<2x128xf32> to vector<2x96xf32>
    %85 = arith.negf %84 : vector<2x96xf32>
    %86 = math.exp %85 : vector<2x96xf32>
    %cst_35 = arith.constant 1.000000e+00 : f32
    %87 = vector.broadcast %cst_35 : f32 to vector<2x96xf32>
    %88 = arith.addf %87, %86 : vector<2x96xf32>
    %89 = arith.divf %87, %88 : vector<2x96xf32>
    %90 = vector.extract_strided_slice %83 {offsets = [0, 96], sizes = [2, 32], strides = [1, 1]} : vector<2x128xf32> to vector<2x32xf32>
    %91 = math.tanh %90 : vector<2x32xf32>
    %92 = vector.extract_strided_slice %89 {offsets = [0, 0], sizes = [2, 32], strides = [1, 1]} : vector<2x96xf32> to vector<2x32xf32>
    %93 = vector.extract_strided_slice %89 {offsets = [0, 32], sizes = [2, 32], strides = [1, 1]} : vector<2x96xf32> to vector<2x32xf32>
    %94 = vector.extract_strided_slice %89 {offsets = [0, 64], sizes = [2, 32], strides = [1, 1]} : vector<2x96xf32> to vector<2x32xf32>
    %95 = arith.mulf %93, %74 : vector<2x32xf32>
    %96 = arith.mulf %92, %91 : vector<2x32xf32>
    %97 = arith.addf %95, %96 : vector<2x32xf32>
    %98 = math.tanh %97 : vector<2x32xf32>
    %99 = arith.mulf %94, %98 : vector<2x32xf32>
    %cst_36 = arith.constant dense<0.000000e+00> : vector<2x16xf32>
    %100 = tpu.matmul %99, %3, %cst_36 {dimension_numbers = #tpu.dot_dimension_numbers<[1], [0], [0], [1], [0, 0, 1, 1], [], []>, precision = #tpu.contract_precision<fp32>} : vector<2x32xf32>, vector<32x16xf32>, vector<2x16xf32> -> vector<2x16xf32>
    %101 = vector.broadcast %4 : vector<1x16xf32> to vector<2x16xf32>
    %102 = arith.addf %100, %101 : vector<2x16xf32>
    %c0_37 = arith.constant 0 : index
    %c48_38 = arith.constant 48 : index
    %103 = vector.load %arg5[%c0_37, %c48_38] : memref<2x128xf32, #tpu.memory_space<vmem>>, vector<2x16xf32>
    tpu.vector_store %arg5[%c0_37, %c48_38], %102 {strides = array<i32>} : memref<2x128xf32, #tpu.memory_space<vmem>>, vector<2x16xf32>,
    %c8 = arith.constant 8 : index
    %c0_39 = arith.constant 0 : index
    %104 = vector.load %arg7[%c8, %c0_39] : memref<16x128xf32, #tpu.memory_space<vmem>>, vector<2x128xf32>
    %cst_40 = arith.constant dense<0.000000e+00> : vector<2x128xf32>
    %105 = tpu.matmul %99, %1, %cst_40 {dimension_numbers = #tpu.dot_dimension_numbers<[1], [0], [0], [1], [0, 0, 1, 1], [], []>, precision = #tpu.contract_precision<fp32>} : vector<2x32xf32>, vector<32x128xf32>, vector<2x128xf32> -> vector<2x128xf32>
    %106 = arith.addf %104, %105 : vector<2x128xf32>
    %107 = vector.extract_strided_slice %106 {offsets = [0, 0], sizes = [2, 96], strides = [1, 1]} : vector<2x128xf32> to vector<2x96xf32>
    %108 = arith.negf %107 : vector<2x96xf32>
    %109 = math.exp %108 : vector<2x96xf32>
    %cst_41 = arith.constant 1.000000e+00 : f32
    %110 = vector.broadcast %cst_41 : f32 to vector<2x96xf32>
    %111 = arith.addf %110, %109 : vector<2x96xf32>
    %112 = arith.divf %110, %111 : vector<2x96xf32>
    %113 = vector.extract_strided_slice %106 {offsets = [0, 96], sizes = [2, 32], strides = [1, 1]} : vector<2x128xf32> to vector<2x32xf32>
    %114 = math.tanh %113 : vector<2x32xf32>
    %115 = vector.extract_strided_slice %112 {offsets = [0, 0], sizes = [2, 32], strides = [1, 1]} : vector<2x96xf32> to vector<2x32xf32>
    %116 = vector.extract_strided_slice %112 {offsets = [0, 32], sizes = [2, 32], strides = [1, 1]} : vector<2x96xf32> to vector<2x32xf32>
    %117 = vector.extract_strided_slice %112 {offsets = [0, 64], sizes = [2, 32], strides = [1, 1]} : vector<2x96xf32> to vector<2x32xf32>
    %118 = arith.mulf %116, %97 : vector<2x32xf32>
    %119 = arith.mulf %115, %114 : vector<2x32xf32>
    %120 = arith.addf %118, %119 : vector<2x32xf32>
    %121 = math.tanh %120 : vector<2x32xf32>
    %122 = arith.mulf %117, %121 : vector<2x32xf32>
    %cst_42 = arith.constant dense<0.000000e+00> : vector<2x16xf32>
    %123 = tpu.matmul %122, %3, %cst_42 {dimension_numbers = #tpu.dot_dimension_numbers<[1], [0], [0], [1], [0, 0, 1, 1], [], []>, precision = #tpu.contract_precision<fp32>} : vector<2x32xf32>, vector<32x16xf32>, vector<2x16xf32> -> vector<2x16xf32>
    %124 = vector.broadcast %4 : vector<1x16xf32> to vector<2x16xf32>
    %125 = arith.addf %123, %124 : vector<2x16xf32>
    %c0_43 = arith.constant 0 : index
    %c64 = arith.constant 64 : index
    %126 = vector.load %arg5[%c0_43, %c64] : memref<2x128xf32, #tpu.memory_space<vmem>>, vector<2x16xf32>
    tpu.vector_store %arg5[%c0_43, %c64], %125 {strides = array<i32>} : memref<2x128xf32, #tpu.memory_space<vmem>>, vector<2x16xf32>,
    %c10 = arith.constant 10 : index
    %c0_44 = arith.constant 0 : index
    %127 = vector.load %arg7[%c10, %c0_44] : memref<16x128xf32, #tpu.memory_space<vmem>>, vector<2x128xf32>
    %cst_45 = arith.constant dense<0.000000e+00> : vector<2x128xf32>
    %128 = tpu.matmul %122, %1, %cst_45 {dimension_numbers = #tpu.dot_dimension_numbers<[1], [0], [0], [1], [0, 0, 1, 1], [], []>, precision = #tpu.contract_precision<fp32>} : vector<2x32xf32>, vector<32x128xf32>, vector<2x128xf32> -> vector<2x128xf32>
    %129 = arith.addf %127, %128 : vector<2x128xf32>
    %130 = vector.extract_strided_slice %129 {offsets = [0, 0], sizes = [2, 96], strides = [1, 1]} : vector<2x128xf32> to vector<2x96xf32>
    %131 = arith.negf %130 : vector<2x96xf32>
    %132 = math.exp %131 : vector<2x96xf32>
    %cst_46 = arith.constant 1.000000e+00 : f32
    %133 = vector.broadcast %cst_46 : f32 to vector<2x96xf32>
    %134 = arith.addf %133, %132 : vector<2x96xf32>
    %135 = arith.divf %133, %134 : vector<2x96xf32>
    %136 = vector.extract_strided_slice %129 {offsets = [0, 96], sizes = [2, 32], strides = [1, 1]} : vector<2x128xf32> to vector<2x32xf32>
    %137 = math.tanh %136 : vector<2x32xf32>
    %138 = vector.extract_strided_slice %135 {offsets = [0, 0], sizes = [2, 32], strides = [1, 1]} : vector<2x96xf32> to vector<2x32xf32>
    %139 = vector.extract_strided_slice %135 {offsets = [0, 32], sizes = [2, 32], strides = [1, 1]} : vector<2x96xf32> to vector<2x32xf32>
    %140 = vector.extract_strided_slice %135 {offsets = [0, 64], sizes = [2, 32], strides = [1, 1]} : vector<2x96xf32> to vector<2x32xf32>
    %141 = arith.mulf %139, %120 : vector<2x32xf32>
    %142 = arith.mulf %138, %137 : vector<2x32xf32>
    %143 = arith.addf %141, %142 : vector<2x32xf32>
    %144 = math.tanh %143 : vector<2x32xf32>
    %145 = arith.mulf %140, %144 : vector<2x32xf32>
    %cst_47 = arith.constant dense<0.000000e+00> : vector<2x16xf32>
    %146 = tpu.matmul %145, %3, %cst_47 {dimension_numbers = #tpu.dot_dimension_numbers<[1], [0], [0], [1], [0, 0, 1, 1], [], []>, precision = #tpu.contract_precision<fp32>} : vector<2x32xf32>, vector<32x16xf32>, vector<2x16xf32> -> vector<2x16xf32>
    %147 = vector.broadcast %4 : vector<1x16xf32> to vector<2x16xf32>
    %148 = arith.addf %146, %147 : vector<2x16xf32>
    %c0_48 = arith.constant 0 : index
    %c80 = arith.constant 80 : index
    %149 = vector.load %arg5[%c0_48, %c80] : memref<2x128xf32, #tpu.memory_space<vmem>>, vector<2x16xf32>
    tpu.vector_store %arg5[%c0_48, %c80], %148 {strides = array<i32>} : memref<2x128xf32, #tpu.memory_space<vmem>>, vector<2x16xf32>,
    %c12 = arith.constant 12 : index
    %c0_49 = arith.constant 0 : index
    %150 = vector.load %arg7[%c12, %c0_49] : memref<16x128xf32, #tpu.memory_space<vmem>>, vector<2x128xf32>
    %cst_50 = arith.constant dense<0.000000e+00> : vector<2x128xf32>
    %151 = tpu.matmul %145, %1, %cst_50 {dimension_numbers = #tpu.dot_dimension_numbers<[1], [0], [0], [1], [0, 0, 1, 1], [], []>, precision = #tpu.contract_precision<fp32>} : vector<2x32xf32>, vector<32x128xf32>, vector<2x128xf32> -> vector<2x128xf32>
    %152 = arith.addf %150, %151 : vector<2x128xf32>
    %153 = vector.extract_strided_slice %152 {offsets = [0, 0], sizes = [2, 96], strides = [1, 1]} : vector<2x128xf32> to vector<2x96xf32>
    %154 = arith.negf %153 : vector<2x96xf32>
    %155 = math.exp %154 : vector<2x96xf32>
    %cst_51 = arith.constant 1.000000e+00 : f32
    %156 = vector.broadcast %cst_51 : f32 to vector<2x96xf32>
    %157 = arith.addf %156, %155 : vector<2x96xf32>
    %158 = arith.divf %156, %157 : vector<2x96xf32>
    %159 = vector.extract_strided_slice %152 {offsets = [0, 96], sizes = [2, 32], strides = [1, 1]} : vector<2x128xf32> to vector<2x32xf32>
    %160 = math.tanh %159 : vector<2x32xf32>
    %161 = vector.extract_strided_slice %158 {offsets = [0, 0], sizes = [2, 32], strides = [1, 1]} : vector<2x96xf32> to vector<2x32xf32>
    %162 = vector.extract_strided_slice %158 {offsets = [0, 32], sizes = [2, 32], strides = [1, 1]} : vector<2x96xf32> to vector<2x32xf32>
    %163 = vector.extract_strided_slice %158 {offsets = [0, 64], sizes = [2, 32], strides = [1, 1]} : vector<2x96xf32> to vector<2x32xf32>
    %164 = arith.mulf %162, %143 : vector<2x32xf32>
    %165 = arith.mulf %161, %160 : vector<2x32xf32>
    %166 = arith.addf %164, %165 : vector<2x32xf32>
    %167 = math.tanh %166 : vector<2x32xf32>
    %168 = arith.mulf %163, %167 : vector<2x32xf32>
    %cst_52 = arith.constant dense<0.000000e+00> : vector<2x16xf32>
    %169 = tpu.matmul %168, %3, %cst_52 {dimension_numbers = #tpu.dot_dimension_numbers<[1], [0], [0], [1], [0, 0, 1, 1], [], []>, precision = #tpu.contract_precision<fp32>} : vector<2x32xf32>, vector<32x16xf32>, vector<2x16xf32> -> vector<2x16xf32>
    %170 = vector.broadcast %4 : vector<1x16xf32> to vector<2x16xf32>
    %171 = arith.addf %169, %170 : vector<2x16xf32>
    %c0_53 = arith.constant 0 : index
    %c96 = arith.constant 96 : index
    %172 = vector.load %arg5[%c0_53, %c96] : memref<2x128xf32, #tpu.memory_space<vmem>>, vector<2x16xf32>
    tpu.vector_store %arg5[%c0_53, %c96], %171 {strides = array<i32>} : memref<2x128xf32, #tpu.memory_space<vmem>>, vector<2x16xf32>,
    %c14 = arith.constant 14 : index
    %c0_54 = arith.constant 0 : index
    %173 = vector.load %arg7[%c14, %c0_54] : memref<16x128xf32, #tpu.memory_space<vmem>>, vector<2x128xf32>
    %cst_55 = arith.constant dense<0.000000e+00> : vector<2x128xf32>
    %174 = tpu.matmul %168, %1, %cst_55 {dimension_numbers = #tpu.dot_dimension_numbers<[1], [0], [0], [1], [0, 0, 1, 1], [], []>, precision = #tpu.contract_precision<fp32>} : vector<2x32xf32>, vector<32x128xf32>, vector<2x128xf32> -> vector<2x128xf32>
    %175 = arith.addf %173, %174 : vector<2x128xf32>
    %176 = vector.extract_strided_slice %175 {offsets = [0, 0], sizes = [2, 96], strides = [1, 1]} : vector<2x128xf32> to vector<2x96xf32>
    %177 = arith.negf %176 : vector<2x96xf32>
    %178 = math.exp %177 : vector<2x96xf32>
    %cst_56 = arith.constant 1.000000e+00 : f32
    %179 = vector.broadcast %cst_56 : f32 to vector<2x96xf32>
    %180 = arith.addf %179, %178 : vector<2x96xf32>
    %181 = arith.divf %179, %180 : vector<2x96xf32>
    %182 = vector.extract_strided_slice %175 {offsets = [0, 96], sizes = [2, 32], strides = [1, 1]} : vector<2x128xf32> to vector<2x32xf32>
    %183 = math.tanh %182 : vector<2x32xf32>
    %184 = vector.extract_strided_slice %181 {offsets = [0, 0], sizes = [2, 32], strides = [1, 1]} : vector<2x96xf32> to vector<2x32xf32>
    %185 = vector.extract_strided_slice %181 {offsets = [0, 32], sizes = [2, 32], strides = [1, 1]} : vector<2x96xf32> to vector<2x32xf32>
    %186 = vector.extract_strided_slice %181 {offsets = [0, 64], sizes = [2, 32], strides = [1, 1]} : vector<2x96xf32> to vector<2x32xf32>
    %187 = arith.mulf %185, %166 : vector<2x32xf32>
    %188 = arith.mulf %184, %183 : vector<2x32xf32>
    %189 = arith.addf %187, %188 : vector<2x32xf32>
    %190 = math.tanh %189 : vector<2x32xf32>
    %191 = arith.mulf %186, %190 : vector<2x32xf32>
    %cst_57 = arith.constant dense<0.000000e+00> : vector<2x16xf32>
    %192 = tpu.matmul %191, %3, %cst_57 {dimension_numbers = #tpu.dot_dimension_numbers<[1], [0], [0], [1], [0, 0, 1, 1], [], []>, precision = #tpu.contract_precision<fp32>} : vector<2x32xf32>, vector<32x16xf32>, vector<2x16xf32> -> vector<2x16xf32>
    %193 = vector.broadcast %4 : vector<1x16xf32> to vector<2x16xf32>
    %194 = arith.addf %192, %193 : vector<2x16xf32>
    %c0_58 = arith.constant 0 : index
    %c112 = arith.constant 112 : index
    %195 = vector.load %arg5[%c0_58, %c112] : memref<2x128xf32, #tpu.memory_space<vmem>>, vector<2x16xf32>
    tpu.vector_store %arg5[%c0_58, %c112], %194 {strides = array<i32>} : memref<2x128xf32, #tpu.memory_space<vmem>>, vector<2x16xf32>,
    %c0_59 = arith.constant 0 : index
    %c0_60 = arith.constant 0 : index
    %196 = vector.load %arg6[%c0_59, %c0_60] : memref<4x32xf32, #tpu.memory_space<vmem>>, vector<2x32xf32>
    tpu.vector_store %arg6[%c0_59, %c0_60], %191 {strides = array<i32>} : memref<4x32xf32, #tpu.memory_space<vmem>>, vector<2x32xf32>,
    %c2_61 = arith.constant 2 : index
    %c0_62 = arith.constant 0 : index
    %197 = vector.load %arg6[%c2_61, %c0_62] : memref<4x32xf32, #tpu.memory_space<vmem>>, vector<2x32xf32>
    tpu.vector_store %arg6[%c2_61, %c0_62], %189 {strides = array<i32>} : memref<4x32xf32, #tpu.memory_space<vmem>>, vector<2x32xf32>,
    return
  }
  func.func @transform_0(%arg0: i32) -> (i32, i32) {
    %c0_i32 = arith.constant 0 : i32
    %c0_i32_0 = arith.constant 0 : i32
    %c0_i32_1 = arith.constant 0 : i32
    return %c0_i32, %c0_i32_0 : i32, i32
  }
  func.func @transform_1(%arg0: i32) -> (i32, i32) {
    %c0_i32 = arith.constant 0 : i32
    %c0_i32_0 = arith.constant 0 : i32
    %c0_i32_1 = arith.constant 0 : i32
    return %c0_i32, %c0_i32_0 : i32, i32
  }
  func.func @transform_2(%arg0: i32) -> (i32, i32) {
    %c0_i32 = arith.constant 0 : i32
    %c0_i32_0 = arith.constant 0 : i32
    %c0_i32_1 = arith.constant 0 : i32
    return %c0_i32, %c0_i32_0 : i32, i32
  }
  func.func @transform_3(%arg0: i32) -> (i32, i32) {
    %c0_i32 = arith.constant 0 : i32
    %c0_i32_0 = arith.constant 0 : i32
    %c0_i32_1 = arith.constant 0 : i32
    return %c0_i32, %c0_i32_0 : i32, i32
  }
  func.func @transform_4(%arg0: i32) -> (i32, i32) {
    %c0_i32 = arith.constant 0 : i32
    %c0_i32_0 = arith.constant 0 : i32
    %c0_i32_1 = arith.constant 0 : i32
    return %c0_i32, %c0_i32_0 : i32, i32
  }
  func.func @transform_5(%arg0: i32) -> (i32, i32) {
    %c0_i32 = arith.constant 0 : i32
    %c0_i32_0 = arith.constant 0 : i32
    %c0_i32_1 = arith.constant 0 : i32
    return %c0_i32, %c0_i32_0 : i32, i32
  }
}

</mosaic_0001>

<llo_original>
// kernel: decoder_model_lstm_forward.1
$region0: #{decoder_model_lstm_forward.1}
  #allocation0 [shape = 'u32[]', space=smem, size = 0x4, offset = 0x4, fixed_abs, tag = 'smem constant byte address 0x4 - core index']
  #allocation1 [shape = 'u32[72,128]{1,0:T(1,128)}', space=vmem, size = 0x9000, scoped, tag = 'internal scratch']
  #allocation2 [shape = 'f32[16,128]{1,0:T(8,128)}', space=vmem, size = 0x2000, scoped, tag = 'scratch operand']
  %s0 = inlined_call_operand.vmem [shape: f32[16,16], index: 0, kind: input, shape index: {}]
  %s1 = inlined_call_operand.vmem [shape: f32[4,32], index: 1, kind: input, shape index: {}]
  %s2 = inlined_call_operand.vmem [shape: f32[49,128], index: 2, kind: input, shape index: {}]
  %s3 = inlined_call_operand.vmem [shape: f32[33,16], index: 3, kind: input, shape index: {}]
  %s4 = inlined_call_operand.vmem [shape: f32[2,128], index: 4, kind: output, shape index: {0}]
  %s5 = inlined_call_operand.vmem [shape: f32[4,32], index: 5, kind: output, shape index: {1}]
  %6 = xla_tuple %s4, %s5
  %s7 = sld [smem:[#allocation0]]
  $region34: #{decoder_model_lstm_forward.1} parent=0
    _
  %s9 = ssub.s32 1, %s7
  %s10 = scalar_select 0, %s9, %s7
  // Predicated region
  $region2: #{decoder_model_lstm_forward.1} parent=0 // pred_check
    _
  $region3: #{decoder_model_lstm_forward.1} parent=0 // pred_check_branch
    %12 = sbr.rel (0) target = $region5
  $region4: #{decoder_model_lstm_forward.1} parent=0 // pred_region
    _
  $region5: #{decoder_model_lstm_forward.1} parent=0 // pred_fallthru
    _
  // Predicated region
  $region6: #{decoder_model_lstm_forward.1} parent=0 // pred_check
    _
  $region7: #{decoder_model_lstm_forward.1} parent=0 // pred_check_branch
    %14 = sbr.rel (0) target = $region9
  $region8: #{decoder_model_lstm_forward.1} parent=0 // pred_region
    _
  $region9: #{decoder_model_lstm_forward.1} parent=0 // pred_fallthru
    _
  // Predicated region
  $region10: #{decoder_model_lstm_forward.1} parent=0 // pred_check
    _
  $region11: #{decoder_model_lstm_forward.1} parent=0 // pred_check_branch
    %16 = sbr.rel (0) target = $region13
  $region12: #{decoder_model_lstm_forward.1} parent=0 // pred_region
    _
  $region13: #{decoder_model_lstm_forward.1} parent=0 // pred_fallthru
    _
  // Predicated region
  $region14: #{decoder_model_lstm_forward.1} parent=0 // pred_check
    _
  $region15: #{decoder_model_lstm_forward.1} parent=0 // pred_check_branch
    %18 = sbr.rel (0) target = $region17
  $region16: #{decoder_model_lstm_forward.1} parent=0 // pred_region
    _
  $region17: #{decoder_model_lstm_forward.1} parent=0 // pred_fallthru
    _
  %v19 = vld [vmem:[%s2] sm:$0xff]
  %v20 = vld [vmem:[%s2 + $0x8] sm:$0xff]
  %v21 = vld [vmem:[%s2 + $0x10] sm:$0xff]
  %v22 = vld [vmem:[%s2 + $0x18] sm:$0xff]
  %v23 = vld [vmem:[%s2 + $0x20] sm:$0xff]
  %v24 = vld [vmem:[%s2 + $0x28] sm:$0xff]
  %v25 = vld [vmem:[%s2 + $0x30] sm:$0x1]
  %v26 = vld [vmem:[%s3] sm:$0xff]
  %v27 = vld [vmem:[%s3 + $0x8] sm:$0xff]
  %v28 = vld [vmem:[%s3 + $0x10] sm:$0xff]
  %v29 = vld [vmem:[%s3 + $0x18] sm:$0xff]
  %v30 = vld [vmem:[%s3 + $0x20] sm:$0x1]
  %v31 = vld [vmem:[%s0] sm:$0xff]
  %v32 = vld [vmem:[%s0 + $0x8] sm:$0xff]
  %v33 = vperm.slane %v25, 0
  %vm34 = vcmask 130048
  %v36 = vsel %vm34, %v31, 0
  %v39 = vsel %vm34, %v32, 0
  %41 = vmatpush.msra.mxu0 0.0
  %42 = vmatpush.msra.mxu0 0.0
  %43 = vmatpush.msra.mxu0 0.0
  %44 = vmatpush.msra.mxu0 0.0
  %45 = vmatpush.msra.mxu0 0.0
  %46 = vmatpush.msra.mxu0 0.0
  %47 = vmatpush.msra.mxu0 0.0
  %48 = vmatpush.msra.mxu0 0.0
  %49 = vmatpush.msra.mxu0 0.0
  %50 = vmatpush.msra.mxu0 0.0
  %51 = vmatpush.msra.mxu0 0.0
  %52 = vmatpush.msra.mxu0 0.0
  %53 = vmatpush.msra.mxu0 0.0
  %54 = vmatpush.msra.mxu0 0.0
  %v55 = vand.u32 %v20, 4294901760
  %56 = vmatpush.msra.mxu0 %v55
  %v57 = vand.u32 %v19, 4294901760
  %58 = vmatpush.msra.mxu0 %v57
  %v59 = vand.u32 %v36, 4294901760
  %v60 = vsub.f32 %v36, %v59
  %v61 = vand.u32 %v60, 4294901760
  %v62 = vsub.f32 %v60, %v61
  %v63 = vand.u32 %v62, 4294901760
  %64 = vmatmul.f32.gmra.mxu0 %v63
  %v65 = vpop.f32.mrf.mxu0
  %v66 = vadd.f32 %v33, %v65
  %v67 = vand.u32 %v39, 4294901760
  %v68 = vsub.f32 %v39, %v67
  %v69 = vand.u32 %v68, 4294901760
  %v70 = vsub.f32 %v68, %v69
  %v71 = vand.u32 %v70, 4294901760
  %72 = vmatmul.f32.gmra.mxu0 %v71
  %v73 = vpop.f32.mrf.mxu0
  %v74 = vadd.f32 %v33, %v73
  %75 = vdwg.mxu0
  %76 = vmatpush.msra.mxu0 0.0
  %77 = vmatpush.msra.mxu0 0.0
  %78 = vmatpush.msra.mxu0 0.0
  %79 = vmatpush.msra.mxu0 0.0
  %80 = vmatpush.msra.mxu0 0.0
  %81 = vmatpush.msra.mxu0 0.0
  %82 = vmatpush.msra.mxu0 0.0
  %83 = vmatpush.msra.mxu0 0.0
  %84 = vmatpush.msra.mxu0 0.0
  %85 = vmatpush.msra.mxu0 0.0
  %86 = vmatpush.msra.mxu0 0.0
  %87 = vmatpush.msra.mxu0 0.0
  %88 = vmatpush.msra.mxu0 0.0
  %89 = vmatpush.msra.mxu0 0.0
  %v90 = vand.u32 %v20, 4294901760
  %v91 = vsub.f32 %v20, %v90
  %v92 = vand.u32 %v91, 4294901760
  %v93 = vsub.f32 %v91, %v92
  %v94 = vand.u32 %v93, 4294901760
  %95 = vmatpush.msra.mxu0 %v94
  %v96 = vand.u32 %v19, 4294901760
  %v97 = vsub.f32 %v19, %v96
  %v98 = vand.u32 %v97, 4294901760
  %v99 = vsub.f32 %v97, %v98
  %v100 = vand.u32 %v99, 4294901760
  %101 = vmatpush.msra.mxu0 %v100
  %v102 = vand.u32 %v36, 4294901760
  %103 = vmatmul.f32.gmra.mxu0 %v102
  %v104 = vpop.f32.mrf.mxu0
  %v105 = vadd.f32 %v66, %v104
  %v106 = vand.u32 %v39, 4294901760
  %107 = vmatmul.f32.gmra.mxu0 %v106
  %v108 = vpop.f32.mrf.mxu0
  %v109 = vadd.f32 %v74, %v108
  %110 = vdwg.mxu0
  %111 = vmatpush.msra.mxu0 0.0
  %112 = vmatpush.msra.mxu0 0.0
  %113 = vmatpush.msra.mxu0 0.0
  %114 = vmatpush.msra.mxu0 0.0
  %115 = vmatpush.msra.mxu0 0.0
  %116 = vmatpush.msra.mxu0 0.0
  %117 = vmatpush.msra.mxu0 0.0
  %118 = vmatpush.msra.mxu0 0.0
  %119 = vmatpush.msra.mxu0 0.0
  %120 = vmatpush.msra.mxu0 0.0
  %121 = vmatpush.msra.mxu0 0.0
  %122 = vmatpush.msra.mxu0 0.0
  %123 = vmatpush.msra.mxu0 0.0
  %124 = vmatpush.msra.mxu0 0.0
  %v125 = vand.u32 %v20, 4294901760
  %v126 = vsub.f32 %v20, %v125
  %127 = vmatpush.msra.mxu0 %v126
  %v128 = vand.u32 %v19, 4294901760
  %v129 = vsub.f32 %v19, %v128
  %130 = vmatpush.msra.mxu0 %v129
  %v131 = vand.u32 %v36, 4294901760
  %v132 = vsub.f32 %v36, %v131
  %133 = vmatmul.f32.gmra.mxu0 %v132
  %v134 = vpop.f32.mrf.mxu0
  %v135 = vadd.f32 %v105, %v134
  %v136 = vand.u32 %v39, 4294901760
  %v137 = vsub.f32 %v39, %v136
  %138 = vmatmul.f32.gmra.mxu0 %v137
  %v139 = vpop.f32.mrf.mxu0
  %v140 = vadd.f32 %v109, %v139
  %141 = vdwg.mxu0
  %142 = vmatpush.msra.mxu0 0.0
  %143 = vmatpush.msra.mxu0 0.0
  %144 = vmatpush.msra.mxu0 0.0
  %145 = vmatpush.msra.mxu0 0.0
  %146 = vmatpush.msra.mxu0 0.0
  %147 = vmatpush.msra.mxu0 0.0
  %148 = vmatpush.msra.mxu0 0.0
  %149 = vmatpush.msra.mxu0 0.0
  %150 = vmatpush.msra.mxu0 0.0
  %151 = vmatpush.msra.mxu0 0.0
  %152 = vmatpush.msra.mxu0 0.0
  %153 = vmatpush.msra.mxu0 0.0
  %154 = vmatpush.msra.mxu0 0.0
  %155 = vmatpush.msra.mxu0 0.0
  %v156 = vand.u32 %v20, 4294901760
  %157 = vmatpush.msra.mxu0 %v156
  %v158 = vand.u32 %v19, 4294901760
  %159 = vmatpush.msra.mxu0 %v158
  %v160 = vand.u32 %v36, 4294901760
  %v161 = vsub.f32 %v36, %v160
  %v162 = vand.u32 %v161, 4294901760
  %163 = vmatmul.f32.gmra.mxu0 %v162
  %v164 = vpop.f32.mrf.mxu0
  %v165 = vadd.f32 %v135, %v164
  %v166 = vand.u32 %v39, 4294901760
  %v167 = vsub.f32 %v39, %v166
  %v168 = vand.u32 %v167, 4294901760
  %169 = vmatmul.f32.gmra.mxu0 %v168
  %v170 = vpop.f32.mrf.mxu0
  %v171 = vadd.f32 %v140, %v170
  %172 = vdwg.mxu0
  %173 = vmatpush.msra.mxu0 0.0
  %174 = vmatpush.msra.mxu0 0.0
  %175 = vmatpush.msra.mxu0 0.0
  %176 = vmatpush.msra.mxu0 0.0
  %177 = vmatpush.msra.mxu0 0.0
  %178 = vmatpush.msra.mxu0 0.0
  %179 = vmatpush.msra.mxu0 0.0
  %180 = vmatpush.msra.mxu0 0.0
  %181 = vmatpush.msra.mxu0 0.0
  %182 = vmatpush.msra.mxu0 0.0
  %183 = vmatpush.msra.mxu0 0.0
  %184 = vmatpush.msra.mxu0 0.0
  %185 = vmatpush.msra.mxu0 0.0
  %186 = vmatpush.msra.mxu0 0.0
  %v187 = vand.u32 %v20, 4294901760
  %v188 = vsub.f32 %v20, %v187
  %v189 = vand.u32 %v188, 4294901760
  %190 = vmatpush.msra.mxu0 %v189
  %v191 = vand.u32 %v19, 4294901760
  %v192 = vsub.f32 %v19, %v191
  %v193 = vand.u32 %v192, 4294901760
  %194 = vmatpush.msra.mxu0 %v193
  %v195 = vand.u32 %v36, 4294901760
  %196 = vmatmul.f32.gmra.mxu0 %v195
  %v197 = vpop.f32.mrf.mxu0
  %v198 = vadd.f32 %v165, %v197
  %v199 = vand.u32 %v39, 4294901760
  %200 = vmatmul.f32.gmra.mxu0 %v199
  %v201 = vpop.f32.mrf.mxu0
  %v202 = vadd.f32 %v171, %v201
  %203 = vdwg.mxu0
  %204 = vmatpush.msra.mxu0 0.0
  %205 = vmatpush.msra.mxu0 0.0
  %206 = vmatpush.msra.mxu0 0.0
  %207 = vmatpush.msra.mxu0 0.0
  %208 = vmatpush.msra.mxu0 0.0
  %209 = vmatpush.msra.mxu0 0.0
  %210 = vmatpush.msra.mxu0 0.0
  %211 = vmatpush.msra.mxu0 0.0
  %212 = vmatpush.msra.mxu0 0.0
  %213 = vmatpush.msra.mxu0 0.0
  %214 = vmatpush.msra.mxu0 0.0
  %215 = vmatpush.msra.mxu0 0.0
  %216 = vmatpush.msra.mxu0 0.0
  %217 = vmatpush.msra.mxu0 0.0
  %v218 = vand.u32 %v20, 4294901760
  %219 = vmatpush.msra.mxu0 %v218
  %v220 = vand.u32 %v19, 4294901760
  %221 = vmatpush.msra.mxu0 %v220
  %v222 = vand.u32 %v36, 4294901760
  %223 = vmatmul.f32.gmra.mxu0 %v222
  %v224 = vpop.f32.mrf.mxu0
  %v225 = vadd.f32 %v198, %v224
  %v226 = vand.u32 %v39, 4294901760
  %227 = vmatmul.f32.gmra.mxu0 %v226
  %v228 = vpop.f32.mrf.mxu0
  %v229 = vadd.f32 %v202, %v228
  %230 = vdwg.mxu0
  %231 = vst [vmem:[#allocation2] sm:$0xff] %v225
  %232 = vst [vmem:[#allocation2 + $0x8] sm:$0xff] %v229
  %v233 = vld [vmem:[%s1] sm:$0x3]
  %v234 = vld [vmem:[%s1 + $0x2] sm:$0x3]
  %v235 = vld [vmem:[#allocation2] sm:$0x3]
  %vm236 = vcmask 261120
  %v238 = vsel %vm236, %v233, 0
  %240 = vmatpush.msra.mxu0 0.0
  %241 = vmatpush.msra.mxu0 0.0
  %242 = vmatpush.msra.mxu0 0.0
  %243 = vmatpush.msra.mxu0 0.0
  %244 = vmatpush.msra.mxu0 0.0
  %245 = vmatpush.msra.mxu0 0.0
  %246 = vmatpush.msra.mxu0 0.0
  %247 = vmatpush.msra.mxu0 0.0
  %248 = vmatpush.msra.mxu0 0.0
  %249 = vmatpush.msra.mxu0 0.0
  %250 = vmatpush.msra.mxu0 0.0
  %251 = vmatpush.msra.mxu0 0.0
  %v252 = vand.u32 %v24, 4294901760
  %253 = vmatpush.msra.mxu0 %v252
  %v254 = vand.u32 %v23, 4294901760
  %255 = vmatpush.msra.mxu0 %v254
  %v256 = vand.u32 %v22, 4294901760
  %257 = vmatpush.msra.mxu0 %v256
  %v258 = vand.u32 %v21, 4294901760
  %259 = vmatpush.msra.mxu0 %v258
  %v260 = vand.u32 %v238, 4294901760
  %v261 = vsub.f32 %v238, %v260
  %v262 = vand.u32 %v261, 4294901760
  %v263 = vsub.f32 %v261, %v262
  %v264 = vand.u32 %v263, 4294901760
  %265 = vmatmul.f32.gmra.mxu0 %v264
  %v266 = vpop.f32.mrf.mxu0
  %v267 = vadd.f32 0.0, %v266
  %268 = vdwg.mxu0
  %269 = vmatpush.msra.mxu0 0.0
  %270 = vmatpush.msra.mxu0 0.0
  %271 = vmatpush.msra.mxu0 0.0
  %272 = vmatpush.msra.mxu0 0.0
  %273 = vmatpush.msra.mxu0 0.0
  %274 = vmatpush.msra.mxu0 0.0
  %275 = vmatpush.msra.mxu0 0.0
  %276 = vmatpush.msra.mxu0 0.0
  %277 = vmatpush.msra.mxu0 0.0
  %278 = vmatpush.msra.mxu0 0.0
  %279 = vmatpush.msra.mxu0 0.0
  %280 = vmatpush.msra.mxu0 0.0
  %v281 = vand.u32 %v24, 4294901760
  %v282 = vsub.f32 %v24, %v281
  %v283 = vand.u32 %v282, 4294901760
  %v284 = vsub.f32 %v282, %v283
  %v285 = vand.u32 %v284, 4294901760
  %286 = vmatpush.msra.mxu0 %v285
  %v287 = vand.u32 %v23, 4294901760
  %v288 = vsub.f32 %v23, %v287
  %v289 = vand.u32 %v288, 4294901760
  %v290 = vsub.f32 %v288, %v289
  %v291 = vand.u32 %v290, 4294901760
  %292 = vmatpush.msra.mxu0 %v291
  %v293 = vand.u32 %v22, 4294901760
  %v294 = vsub.f32 %v22, %v293
  %v295 = vand.u32 %v294, 4294901760
  %v296 = vsub.f32 %v294, %v295
  %v297 = vand.u32 %v296, 4294901760
  %298 = vmatpush.msra.mxu0 %v297
  %v299 = vand.u32 %v21, 4294901760
  %v300 = vsub.f32 %v21, %v299
  %v301 = vand.u32 %v300, 4294901760
  %v302 = vsub.f32 %v300, %v301
  %v303 = vand.u32 %v302, 4294901760
  %304 = vmatpush.msra.mxu0 %v303
  %v305 = vand.u32 %v238, 4294901760
  %306 = vmatmul.f32.gmra.mxu0 %v305
  %v307 = vpop.f32.mrf.mxu0
  %v308 = vadd.f32 %v267, %v307
  %309 = vdwg.mxu0
  %310 = vmatpush.msra.mxu0 0.0
  %311 = vmatpush.msra.mxu0 0.0
  %312 = vmatpush.msra.mxu0 0.0
  %313 = vmatpush.msra.mxu0 0.0
  %314 = vmatpush.msra.mxu0 0.0
  %315 = vmatpush.msra.mxu0 0.0
  %316 = vmatpush.msra.mxu0 0.0
  %317 = vmatpush.msra.mxu0 0.0
  %318 = vmatpush.msra.mxu0 0.0
  %319 = vmatpush.msra.mxu0 0.0
  %320 = vmatpush.msra.mxu0 0.0
  %321 = vmatpush.msra.mxu0 0.0
  %v322 = vand.u32 %v24, 4294901760
  %v323 = vsub.f32 %v24, %v322
  %324 = vmatpush.msra.mxu0 %v323
  %v325 = vand.u32 %v23, 4294901760
  %v326 = vsub.f32 %v23, %v325
  %327 = vmatpush.msra.mxu0 %v326
  %v328 = vand.u32 %v22, 4294901760
  %v329 = vsub.f32 %v22, %v328
  %330 = vmatpush.msra.mxu0 %v329
  %v331 = vand.u32 %v21, 4294901760
  %v332 = vsub.f32 %v21, %v331
  %333 = vmatpush.msra.mxu0 %v332
  %v334 = vand.u32 %v238, 4294901760
  %v335 = vsub.f32 %v238, %v334
  %336 = vmatmul.f32.gmra.mxu0 %v335
  %v337 = vpop.f32.mrf.mxu0
  %v338 = vadd.f32 %v308, %v337
  %339 = vdwg.mxu0
  %340 = vmatpush.msra.mxu0 0.0
  %341 = vmatpush.msra.mxu0 0.0
  %342 = vmatpush.msra.mxu0 0.0
  %343 = vmatpush.msra.mxu0 0.0
  %344 = vmatpush.msra.mxu0 0.0
  %345 = vmatpush.msra.mxu0 0.0
  %346 = vmatpush.msra.mxu0 0.0
  %347 = vmatpush.msra.mxu0 0.0
  %348 = vmatpush.msra.mxu0 0.0
  %349 = vmatpush.msra.mxu0 0.0
  %350 = vmatpush.msra.mxu0 0.0
  %351 = vmatpush.msra.mxu0 0.0
  %v352 = vand.u32 %v24, 4294901760
  %353 = vmatpush.msra.mxu0 %v352
  %v354 = vand.u32 %v23, 4294901760
  %355 = vmatpush.msra.mxu0 %v354
  %v356 = vand.u32 %v22, 4294901760
  %357 = vmatpush.msra.mxu0 %v356
  %v358 = vand.u32 %v21, 4294901760
  %359 = vmatpush.msra.mxu0 %v358
  %v360 = vand.u32 %v238, 4294901760
  %v361 = vsub.f32 %v238, %v360
  %v362 = vand.u32 %v361, 4294901760
  %363 = vmatmul.f32.gmra.mxu0 %v362
  %v364 = vpop.f32.mrf.mxu0
  %v365 = vadd.f32 %v338, %v364
  %366 = vdwg.mxu0
  %367 = vmatpush.msra.mxu0 0.0
  %368 = vmatpush.msra.mxu0 0.0
  %369 = vmatpush.msra.mxu0 0.0
  %370 = vmatpush.msra.mxu0 0.0
  %371 = vmatpush.msra.mxu0 0.0
  %372 = vmatpush.msra.mxu0 0.0
  %373 = vmatpush.msra.mxu0 0.0
  %374 = vmatpush.msra.mxu0 0.0
  %375 = vmatpush.msra.mxu0 0.0
  %376 = vmatpush.msra.mxu0 0.0
  %377 = vmatpush.msra.mxu0 0.0
  %378 = vmatpush.msra.mxu0 0.0
  %v379 = vand.u32 %v24, 4294901760
  %v380 = vsub.f32 %v24, %v379
  %v381 = vand.u32 %v380, 4294901760
  %382 = vmatpush.msra.mxu0 %v381
  %v383 = vand.u32 %v23, 4294901760
  %v384 = vsub.f32 %v23, %v383
  %v385 = vand.u32 %v384, 4294901760
  %386 = vmatpush.msra.mxu0 %v385
  %v387 = vand.u32 %v22, 4294901760
  %v388 = vsub.f32 %v22, %v387
  %v389 = vand.u32 %v388, 4294901760
  %390 = vmatpush.msra.mxu0 %v389
  %v391 = vand.u32 %v21, 4294901760
  %v392 = vsub.f32 %v21, %v391
  %v393 = vand.u32 %v392, 4294901760
  %394 = vmatpush.msra.mxu0 %v393
  %v395 = vand.u32 %v238, 4294901760
  %396 = vmatmul.f32.gmra.mxu0 %v395
  %v397 = vpop.f32.mrf.mxu0
  %v398 = vadd.f32 %v365, %v397
  %399 = vdwg.mxu0
  %400 = vmatpush.msra.mxu0 0.0
  %401 = vmatpush.msra.mxu0 0.0
  %402 = vmatpush.msra.mxu0 0.0
  %403 = vmatpush.msra.mxu0 0.0
  %404 = vmatpush.msra.mxu0 0.0
  %405 = vmatpush.msra.mxu0 0.0
  %406 = vmatpush.msra.mxu0 0.0
  %407 = vmatpush.msra.mxu0 0.0
  %408 = vmatpush.msra.mxu0 0.0
  %409 = vmatpush.msra.mxu0 0.0
  %410 = vmatpush.msra.mxu0 0.0
  %411 = vmatpush.msra.mxu0 0.0
  %v412 = vand.u32 %v24, 4294901760
  %413 = vmatpush.msra.mxu0 %v412
  %v414 = vand.u32 %v23, 4294901760
  %415 = vmatpush.msra.mxu0 %v414
  %v416 = vand.u32 %v22, 4294901760
  %417 = vmatpush.msra.mxu0 %v416
  %v418 = vand.u32 %v21, 4294901760
  %419 = vmatpush.msra.mxu0 %v418
  %v420 = vand.u32 %v238, 4294901760
  %421 = vmatmul.f32.gmra.mxu0 %v420
  %v422 = vpop.f32.mrf.mxu0
  %v423 = vadd.f32 %v398, %v422
  %424 = vdwg.mxu0
  %v425 = vadd.f32 %v235, %v423
  %v426 = vxor.u32 %v425, 2147483648
  %v427 = vmul.f32 %v426, 1.442695
  %v428 = vpow.pop %v427
  %v429 = vadd.f32 %v428, 1.0
  %v430 = vrcp.pop %v429
  %v431 = vmul.f32 %v429, %v430
  %v432 = vsub.f32 1.0, %v431
  %v433 = vmul.f32 %v430, %v432
  %v434 = vadd.f32 %v430, %v433
  %vm435 = vweird.f32 %v429
  %vm436 = vweird.f32 %v430
  %vm437 = vmor %vm435, %vm436
  %v438 = vsel %vm437, %v430, %v434
  %v439 = vand.u32 2147483647, %v429
  %vm440 = vcmp.eq.f32.partialorder %v439, 8.507059e+37
  %v441 = vand.u32 %v429, 2147483648
  %v442 = vor.u32 1.1754944e-38, %v441
  %v443 = vsel %vm440, %v442, %v438
  %v444 = vmul.f32 1.0, %v443
  %v445 = vtanh.pop %v425
  %447 = vrot.lane.b32.xlu0 %v234, 32
  %v448 = vpop.permute.xlu0 %447
  %v450 = vmul.f32 %v444, %v448
  %452 = vrot.lane.b32.xlu0 %v445, 32
  %v453 = vpop.permute.xlu0 %452
  %v455 = vmul.f32 %v444, %v453
  %457 = vrot.lane.b32.xlu0 %v455, 32
  %v458 = vpop.permute.xlu0 %457
  %v460 = vadd.f32 %v450, %v458
  %v461 = vtanh.pop %v460
  %463 = vrot.lane.b32.xlu0 %v461, 32
  %v464 = vpop.permute.xlu0 %463
  %v466 = vmul.f32 %v444, %v464
  %v467 = vperm.slane %v30, 0
  %469 = vrot.lane.b32.xlu0 %v466, 64
  %v470 = vpop.permute.xlu0 %469
  %v471 = vsel %vm236, %v470, 0
  %473 = vmatpush.msra.mxu0 0.0
  %474 = vmatpush.msra.mxu0 0.0
  %475 = vmatpush.msra.mxu0 0.0
  %476 = vmatpush.msra.mxu0 0.0
  %477 = vmatpush.msra.mxu0 0.0
  %478 = vmatpush.msra.mxu0 0.0
  %479 = vmatpush.msra.mxu0 0.0
  %480 = vmatpush.msra.mxu0 0.0
  %481 = vmatpush.msra.mxu0 0.0
  %482 = vmatpush.msra.mxu0 0.0
  %483 = vmatpush.msra.mxu0 0.0
  %484 = vmatpush.msra.mxu0 0.0
  %v485 = vand.u32 %v29, 4294901760
  %486 = vmatpush.msra.mxu0 %v485
  %v487 = vand.u32 %v28, 4294901760
  %488 = vmatpush.msra.mxu0 %v487
  %v489 = vand.u32 %v27, 4294901760
  %490 = vmatpush.msra.mxu0 %v489
  %v491 = vand.u32 %v26, 4294901760
  %492 = vmatpush.msra.mxu0 %v491
  %v493 = vand.u32 %v471, 4294901760
  %v494 = vsub.f32 %v471, %v493
  %v495 = vand.u32 %v494, 4294901760
  %v496 = vsub.f32 %v494, %v495
  %v497 = vand.u32 %v496, 4294901760
  %498 = vmatmul.f32.gmra.mxu0 %v497
  %v499 = vpop.f32.mrf.mxu0
  %v500 = vadd.f32 %v467, %v499
  %501 = vdwg.mxu0
  %502 = vmatpush.msra.mxu0 0.0
  %503 = vmatpush.msra.mxu0 0.0
  %504 = vmatpush.msra.mxu0 0.0
  %505 = vmatpush.msra.mxu0 0.0
  %506 = vmatpush.msra.mxu0 0.0
  %507 = vmatpush.msra.mxu0 0.0
  %508 = vmatpush.msra.mxu0 0.0
  %509 = vmatpush.msra.mxu0 0.0
  %510 = vmatpush.msra.mxu0 0.0
  %511 = vmatpush.msra.mxu0 0.0
  %512 = vmatpush.msra.mxu0 0.0
  %513 = vmatpush.msra.mxu0 0.0
  %v514 = vand.u32 %v29, 4294901760
  %v515 = vsub.f32 %v29, %v514
  %v516 = vand.u32 %v515, 4294901760
  %v517 = vsub.f32 %v515, %v516
  %v518 = vand.u32 %v517, 4294901760
  %519 = vmatpush.msra.mxu0 %v518
  %v520 = vand.u32 %v28, 4294901760
  %v521 = vsub.f32 %v28, %v520
  %v522 = vand.u32 %v521, 4294901760
  %v523 = vsub.f32 %v521, %v522
  %v524 = vand.u32 %v523, 4294901760
  %525 = vmatpush.msra.mxu0 %v524
  %v526 = vand.u32 %v27, 4294901760
  %v527 = vsub.f32 %v27, %v526
  %v528 = vand.u32 %v527, 4294901760
  %v529 = vsub.f32 %v527, %v528
  %v530 = vand.u32 %v529, 4294901760
  %531 = vmatpush.msra.mxu0 %v530
  %v532 = vand.u32 %v26, 4294901760
  %v533 = vsub.f32 %v26, %v532
  %v534 = vand.u32 %v533, 4294901760
  %v535 = vsub.f32 %v533, %v534
  %v536 = vand.u32 %v535, 4294901760
  %537 = vmatpush.msra.mxu0 %v536
  %v538 = vand.u32 %v471, 4294901760
  %539 = vmatmul.f32.gmra.mxu0 %v538
  %v540 = vpop.f32.mrf.mxu0
  %v541 = vadd.f32 %v500, %v540
  %542 = vdwg.mxu0
  %543 = vmatpush.msra.mxu0 0.0
  %544 = vmatpush.msra.mxu0 0.0
  %545 = vmatpush.msra.mxu0 0.0
  %546 = vmatpush.msra.mxu0 0.0
  %547 = vmatpush.msra.mxu0 0.0
  %548 = vmatpush.msra.mxu0 0.0
  %549 = vmatpush.msra.mxu0 0.0
  %550 = vmatpush.msra.mxu0 0.0
  %551 = vmatpush.msra.mxu0 0.0
  %552 = vmatpush.msra.mxu0 0.0
  %553 = vmatpush.msra.mxu0 0.0
  %554 = vmatpush.msra.mxu0 0.0
  %v555 = vand.u32 %v29, 4294901760
  %v556 = vsub.f32 %v29, %v555
  %557 = vmatpush.msra.mxu0 %v556
  %v558 = vand.u32 %v28, 4294901760
  %v559 = vsub.f32 %v28, %v558
  %560 = vmatpush.msra.mxu0 %v559
  %v561 = vand.u32 %v27, 4294901760
  %v562 = vsub.f32 %v27, %v561
  %563 = vmatpush.msra.mxu0 %v562
  %v564 = vand.u32 %v26, 4294901760
  %v565 = vsub.f32 %v26, %v564
  %566 = vmatpush.msra.mxu0 %v565
  %v567 = vand.u32 %v471, 4294901760
  %v568 = vsub.f32 %v471, %v567
  %569 = vmatmul.f32.gmra.mxu0 %v568
  %v570 = vpop.f32.mrf.mxu0
  %v571 = vadd.f32 %v541, %v570
  %572 = vdwg.mxu0
  %573 = vmatpush.msra.mxu0 0.0
  %574 = vmatpush.msra.mxu0 0.0
  %575 = vmatpush.msra.mxu0 0.0
  %576 = vmatpush.msra.mxu0 0.0
  %577 = vmatpush.msra.mxu0 0.0
  %578 = vmatpush.msra.mxu0 0.0
  %579 = vmatpush.msra.mxu0 0.0
  %580 = vmatpush.msra.mxu0 0.0
  %581 = vmatpush.msra.mxu0 0.0
  %582 = vmatpush.msra.mxu0 0.0
  %583 = vmatpush.msra.mxu0 0.0
  %584 = vmatpush.msra.mxu0 0.0
  %v585 = vand.u32 %v29, 4294901760
  %586 = vmatpush.msra.mxu0 %v585
  %v587 = vand.u32 %v28, 4294901760
  %588 = vmatpush.msra.mxu0 %v587
  %v589 = vand.u32 %v27, 4294901760
  %590 = vmatpush.msra.mxu0 %v589
  %v591 = vand.u32 %v26, 4294901760
  %592 = vmatpush.msra.mxu0 %v591
  %v593 = vand.u32 %v471, 4294901760
  %v594 = vsub.f32 %v471, %v593
  %v595 = vand.u32 %v594, 4294901760
  %596 = vmatmul.f32.gmra.mxu0 %v595
  %v597 = vpop.f32.mrf.mxu0
  %v598 = vadd.f32 %v571, %v597
  %599 = vdwg.mxu0
  %600 = vmatpush.msra.mxu0 0.0
  %601 = vmatpush.msra.mxu0 0.0
  %602 = vmatpush.msra.mxu0 0.0
  %603 = vmatpush.msra.mxu0 0.0
  %604 = vmatpush.msra.mxu0 0.0
  %605 = vmatpush.msra.mxu0 0.0
  %606 = vmatpush.msra.mxu0 0.0
  %607 = vmatpush.msra.mxu0 0.0
  %608 = vmatpush.msra.mxu0 0.0
  %609 = vmatpush.msra.mxu0 0.0
  %610 = vmatpush.msra.mxu0 0.0
  %611 = vmatpush.msra.mxu0 0.0
  %v612 = vand.u32 %v29, 4294901760
  %v613 = vsub.f32 %v29, %v612
  %v614 = vand.u32 %v613, 4294901760
  %615 = vmatpush.msra.mxu0 %v614
  %v616 = vand.u32 %v28, 4294901760
  %v617 = vsub.f32 %v28, %v616
  %v618 = vand.u32 %v617, 4294901760
  %619 = vmatpush.msra.mxu0 %v618
  %v620 = vand.u32 %v27, 4294901760
  %v621 = vsub.f32 %v27, %v620
  %v622 = vand.u32 %v621, 4294901760
  %623 = vmatpush.msra.mxu0 %v622
  %v624 = vand.u32 %v26, 4294901760
  %v625 = vsub.f32 %v26, %v624
  %v626 = vand.u32 %v625, 4294901760
  %627 = vmatpush.msra.mxu0 %v626
  %v628 = vand.u32 %v471, 4294901760
  %629 = vmatmul.f32.gmra.mxu0 %v628
  %v630 = vpop.f32.mrf.mxu0
  %v631 = vadd.f32 %v598, %v630
  %632 = vdwg.mxu0
  %633 = vmatpush.msra.mxu0 0.0
  %634 = vmatpush.msra.mxu0 0.0
  %635 = vmatpush.msra.mxu0 0.0
  %636 = vmatpush.msra.mxu0 0.0
  %637 = vmatpush.msra.mxu0 0.0
  %638 = vmatpush.msra.mxu0 0.0
  %639 = vmatpush.msra.mxu0 0.0
  %640 = vmatpush.msra.mxu0 0.0
  %641 = vmatpush.msra.mxu0 0.0
  %642 = vmatpush.msra.mxu0 0.0
  %643 = vmatpush.msra.mxu0 0.0
  %644 = vmatpush.msra.mxu0 0.0
  %v645 = vand.u32 %v29, 4294901760
  %646 = vmatpush.msra.mxu0 %v645
  %v647 = vand.u32 %v28, 4294901760
  %648 = vmatpush.msra.mxu0 %v647
  %v649 = vand.u32 %v27, 4294901760
  %650 = vmatpush.msra.mxu0 %v649
  %v651 = vand.u32 %v26, 4294901760
  %652 = vmatpush.msra.mxu0 %v651
  %v653 = vand.u32 %v471, 4294901760
  %654 = vmatmul.f32.gmra.mxu0 %v653
  %v655 = vpop.f32.mrf.mxu0
  %v656 = vadd.f32 %v631, %v655
  %657 = vdwg.mxu0
  %vm658 = vcmask 123904
  %659 = vst.msk [vmem:[%s4] sm:$0x3] %vm658, %v656
  %v660 = vld [vmem:[#allocation2 + $0x2] sm:$0x3]
  %661 = vmatpush.msra.mxu0 0.0
  %662 = vmatpush.msra.mxu0 0.0
  %663 = vmatpush.msra.mxu0 0.0
  %664 = vmatpush.msra.mxu0 0.0
  %665 = vmatpush.msra.mxu0 0.0
  %666 = vmatpush.msra.mxu0 0.0
  %667 = vmatpush.msra.mxu0 0.0
  %668 = vmatpush.msra.mxu0 0.0
  %669 = vmatpush.msra.mxu0 0.0
  %670 = vmatpush.msra.mxu0 0.0
  %671 = vmatpush.msra.mxu0 0.0
  %672 = vmatpush.msra.mxu0 0.0
  %v673 = vand.u32 %v24, 4294901760
  %674 = vmatpush.msra.mxu0 %v673
  %v675 = vand.u32 %v23, 4294901760
  %676 = vmatpush.msra.mxu0 %v675
  %v677 = vand.u32 %v22, 4294901760
  %678 = vmatpush.msra.mxu0 %v677
  %v679 = vand.u32 %v21, 4294901760
  %680 = vmatpush.msra.mxu0 %v679
  %v681 = vand.u32 %v471, 4294901760
  %v682 = vsub.f32 %v471, %v681
  %v683 = vand.u32 %v682, 4294901760
  %v684 = vsub.f32 %v682, %v683
  %v685 = vand.u32 %v684, 4294901760
  %686 = vmatmul.f32.gmra.mxu0 %v685
  %v687 = vpop.f32.mrf.mxu0
  %v688 = vadd.f32 0.0, %v687
  %689 = vdwg.mxu0
  %690 = vmatpush.msra.mxu0 0.0
  %691 = vmatpush.msra.mxu0 0.0
  %692 = vmatpush.msra.mxu0 0.0
  %693 = vmatpush.msra.mxu0 0.0
  %694 = vmatpush.msra.mxu0 0.0
  %695 = vmatpush.msra.mxu0 0.0
  %696 = vmatpush.msra.mxu0 0.0
  %697 = vmatpush.msra.mxu0 0.0
  %698 = vmatpush.msra.mxu0 0.0
  %699 = vmatpush.msra.mxu0 0.0
  %700 = vmatpush.msra.mxu0 0.0
  %701 = vmatpush.msra.mxu0 0.0
  %v702 = vand.u32 %v24, 4294901760
  %v703 = vsub.f32 %v24, %v702
  %v704 = vand.u32 %v703, 4294901760
  %v705 = vsub.f32 %v703, %v704
  %v706 = vand.u32 %v705, 4294901760
  %707 = vmatpush.msra.mxu0 %v706
  %v708 = vand.u32 %v23, 4294901760
  %v709 = vsub.f32 %v23, %v708
  %v710 = vand.u32 %v709, 4294901760
  %v711 = vsub.f32 %v709, %v710
  %v712 = vand.u32 %v711, 4294901760
  %713 = vmatpush.msra.mxu0 %v712
  %v714 = vand.u32 %v22, 4294901760
  %v715 = vsub.f32 %v22, %v714
  %v716 = vand.u32 %v715, 4294901760
  %v717 = vsub.f32 %v715, %v716
  %v718 = vand.u32 %v717, 4294901760
  %719 = vmatpush.msra.mxu0 %v718
  %v720 = vand.u32 %v21, 4294901760
  %v721 = vsub.f32 %v21, %v720
  %v722 = vand.u32 %v721, 4294901760
  %v723 = vsub.f32 %v721, %v722
  %v724 = vand.u32 %v723, 4294901760
  %725 = vmatpush.msra.mxu0 %v724
  %v726 = vand.u32 %v471, 4294901760
  %727 = vmatmul.f32.gmra.mxu0 %v726
  %v728 = vpop.f32.mrf.mxu0
  %v729 = vadd.f32 %v688, %v728
  %730 = vdwg.mxu0
  %731 = vmatpush.msra.mxu0 0.0
  %732 = vmatpush.msra.mxu0 0.0
  %733 = vmatpush.msra.mxu0 0.0
  %734 = vmatpush.msra.mxu0 0.0
  %735 = vmatpush.msra.mxu0 0.0
  %736 = vmatpush.msra.mxu0 0.0
  %737 = vmatpush.msra.mxu0 0.0
  %738 = vmatpush.msra.mxu0 0.0
  %739 = vmatpush.msra.mxu0 0.0
  %740 = vmatpush.msra.mxu0 0.0
  %741 = vmatpush.msra.mxu0 0.0
  %742 = vmatpush.msra.mxu0 0.0
  %v743 = vand.u32 %v24, 4294901760
  %v744 = vsub.f32 %v24, %v743
  %745 = vmatpush.msra.mxu0 %v744
  %v746 = vand.u32 %v23, 4294901760
  %v747 = vsub.f32 %v23, %v746
  %748 = vmatpush.msra.mxu0 %v747
  %v749 = vand.u32 %v22, 4294901760
  %v750 = vsub.f32 %v22, %v749
  %751 = vmatpush.msra.mxu0 %v750
  %v752 = vand.u32 %v21, 4294901760
  %v753 = vsub.f32 %v21, %v752
  %754 = vmatpush.msra.mxu0 %v753
  %v755 = vand.u32 %v471, 4294901760
  %v756 = vsub.f32 %v471, %v755
  %757 = vmatmul.f32.gmra.mxu0 %v756
  %v758 = vpop.f32.mrf.mxu0
  %v759 = vadd.f32 %v729, %v758
  %760 = vdwg.mxu0
  %761 = vmatpush.msra.mxu0 0.0
  %762 = vmatpush.msra.mxu0 0.0
  %763 = vmatpush.msra.mxu0 0.0
  %764 = vmatpush.msra.mxu0 0.0
  %765 = vmatpush.msra.mxu0 0.0
  %766 = vmatpush.msra.mxu0 0.0
  %767 = vmatpush.msra.mxu0 0.0
  %768 = vmatpush.msra.mxu0 0.0
  %769 = vmatpush.msra.mxu0 0.0
  %770 = vmatpush.msra.mxu0 0.0
  %771 = vmatpush.msra.mxu0 0.0
  %772 = vmatpush.msra.mxu0 0.0
  %v773 = vand.u32 %v24, 4294901760
  %774 = vmatpush.msra.mxu0 %v773
  %v775 = vand.u32 %v23, 4294901760
  %776 = vmatpush.msra.mxu0 %v775
  %v777 = vand.u32 %v22, 4294901760
  %778 = vmatpush.msra.mxu0 %v777
  %v779 = vand.u32 %v21, 4294901760
  %780 = vmatpush.msra.mxu0 %v779
  %v781 = vand.u32 %v471, 4294901760
  %v782 = vsub.f32 %v471, %v781
  %v783 = vand.u32 %v782, 4294901760
  %784 = vmatmul.f32.gmra.mxu0 %v783
  %v785 = vpop.f32.mrf.mxu0
  %v786 = vadd.f32 %v759, %v785
  %787 = vdwg.mxu0
  %788 = vmatpush.msra.mxu0 0.0
  %789 = vmatpush.msra.mxu0 0.0
  %790 = vmatpush.msra.mxu0 0.0
  %791 = vmatpush.msra.mxu0 0.0
  %792 = vmatpush.msra.mxu0 0.0
  %793 = vmatpush.msra.mxu0 0.0
  %794 = vmatpush.msra.mxu0 0.0
  %795 = vmatpush.msra.mxu0 0.0
  %796 = vmatpush.msra.mxu0 0.0
  %797 = vmatpush.msra.mxu0 0.0
  %798 = vmatpush.msra.mxu0 0.0
  %799 = vmatpush.msra.mxu0 0.0
  %v800 = vand.u32 %v24, 4294901760
  %v801 = vsub.f32 %v24, %v800
  %v802 = vand.u32 %v801, 4294901760
  %803 = vmatpush.msra.mxu0 %v802
  %v804 = vand.u32 %v23, 4294901760
  %v805 = vsub.f32 %v23, %v804
  %v806 = vand.u32 %v805, 4294901760
  %807 = vmatpush.msra.mxu0 %v806
  %v808 = vand.u32 %v22, 4294901760
  %v809 = vsub.f32 %v22, %v808
  %v810 = vand.u32 %v809, 4294901760
  %811 = vmatpush.msra.mxu0 %v810
  %v812 = vand.u32 %v21, 4294901760
  %v813 = vsub.f32 %v21, %v812
  %v814 = vand.u32 %v813, 4294901760
  %815 = vmatpush.msra.mxu0 %v814
  %v816 = vand.u32 %v471, 4294901760
  %817 = vmatmul.f32.gmra.mxu0 %v816
  %v818 = vpop.f32.mrf.mxu0
  %v819 = vadd.f32 %v786, %v818
  %820 = vdwg.mxu0
  %821 = vmatpush.msra.mxu0 0.0
  %822 = vmatpush.msra.mxu0 0.0
  %823 = vmatpush.msra.mxu0 0.0
  %824 = vmatpush.msra.mxu0 0.0
  %825 = vmatpush.msra.mxu0 0.0
  %826 = vmatpush.msra.mxu0 0.0
  %827 = vmatpush.msra.mxu0 0.0
  %828 = vmatpush.msra.mxu0 0.0
  %829 = vmatpush.msra.mxu0 0.0
  %830 = vmatpush.msra.mxu0 0.0
  %831 = vmatpush.msra.mxu0 0.0
  %832 = vmatpush.msra.mxu0 0.0
  %v833 = vand.u32 %v24, 4294901760
  %834 = vmatpush.msra.mxu0 %v833
  %v835 = vand.u32 %v23, 4294901760
  %836 = vmatpush.msra.mxu0 %v835
  %v837 = vand.u32 %v22, 4294901760
  %838 = vmatpush.msra.mxu0 %v837
  %v839 = vand.u32 %v21, 4294901760
  %840 = vmatpush.msra.mxu0 %v839
  %v841 = vand.u32 %v471, 4294901760
  %842 = vmatmul.f32.gmra.mxu0 %v841
  %v843 = vpop.f32.mrf.mxu0
  %v844 = vadd.f32 %v819, %v843
  %845 = vdwg.mxu0
  %v846 = vadd.f32 %v660, %v844
  %v847 = vxor.u32 %v846, 2147483648
  %v848 = vmul.f32 %v847, 1.442695
  %v849 = vpow.pop %v848
  %v850 = vadd.f32 %v849, 1.0
  %v851 = vrcp.pop %v850
  %v852 = vmul.f32 %v850, %v851
  %v853 = vsub.f32 1.0, %v852
  %v854 = vmul.f32 %v851, %v853
  %v855 = vadd.f32 %v851, %v854
  %vm856 = vweird.f32 %v850
  %vm857 = vweird.f32 %v851
  %vm858 = vmor %vm856, %vm857
  %v859 = vsel %vm858, %v851, %v855
  %v860 = vand.u32 2147483647, %v850
  %vm861 = vcmp.eq.f32.partialorder %v860, 8.507059e+37
  %v862 = vand.u32 %v850, 2147483648
  %v863 = vor.u32 1.1754944e-38, %v862
  %v864 = vsel %vm861, %v863, %v859
  %v865 = vmul.f32 1.0, %v864
  %v866 = vtanh.pop %v846
  %v867 = vmul.f32 %v865, %v460
  %869 = vrot.lane.b32.xlu0 %v866, 32
  %v870 = vpop.permute.xlu0 %869
  %v872 = vmul.f32 %v865, %v870
  %874 = vrot.lane.b32.xlu0 %v872, 32
  %v875 = vpop.permute.xlu0 %874
  %v877 = vadd.f32 %v867, %v875
  %v878 = vtanh.pop %v877
  %880 = vrot.lane.b32.xlu0 %v878, 32
  %v881 = vpop.permute.xlu0 %880
  %v883 = vmul.f32 %v865, %v881
  %885 = vrot.lane.b32.xlu0 %v883, 64
  %v886 = vpop.permute.xlu0 %885
  %v887 = vsel %vm236, %v886, 0
  %889 = vmatpush.msra.mxu0 0.0
  %890 = vmatpush.msra.mxu0 0.0
  %891 = vmatpush.msra.mxu0 0.0
  %892 = vmatpush.msra.mxu0 0.0
  %893 = vmatpush.msra.mxu0 0.0
  %894 = vmatpush.msra.mxu0 0.0
  %895 = vmatpush.msra.mxu0 0.0
  %896 = vmatpush.msra.mxu0 0.0
  %897 = vmatpush.msra.mxu0 0.0
  %898 = vmatpush.msra.mxu0 0.0
  %899 = vmatpush.msra.mxu0 0.0
  %900 = vmatpush.msra.mxu0 0.0
  %v901 = vand.u32 %v29, 4294901760
  %902 = vmatpush.msra.mxu0 %v901
  %v903 = vand.u32 %v28, 4294901760
  %904 = vmatpush.msra.mxu0 %v903
  %v905 = vand.u32 %v27, 4294901760
  %906 = vmatpush.msra.mxu0 %v905
  %v907 = vand.u32 %v26, 4294901760
  %908 = vmatpush.msra.mxu0 %v907
  %v909 = vand.u32 %v887, 4294901760
  %v910 = vsub.f32 %v887, %v909
  %v911 = vand.u32 %v910, 4294901760
  %v912 = vsub.f32 %v910, %v911
  %v913 = vand.u32 %v912, 4294901760
  %914 = vmatmul.f32.gmra.mxu0 %v913
  %v915 = vpop.f32.mrf.mxu0
  %v916 = vadd.f32 %v467, %v915
  %917 = vdwg.mxu0
  %918 = vmatpush.msra.mxu0 0.0
  %919 = vmatpush.msra.mxu0 0.0
  %920 = vmatpush.msra.mxu0 0.0
  %921 = vmatpush.msra.mxu0 0.0
  %922 = vmatpush.msra.mxu0 0.0
  %923 = vmatpush.msra.mxu0 0.0
  %924 = vmatpush.msra.mxu0 0.0
  %925 = vmatpush.msra.mxu0 0.0
  %926 = vmatpush.msra.mxu0 0.0
  %927 = vmatpush.msra.mxu0 0.0
  %928 = vmatpush.msra.mxu0 0.0
  %929 = vmatpush.msra.mxu0 0.0
  %v930 = vand.u32 %v29, 4294901760
  %v931 = vsub.f32 %v29, %v930
  %v932 = vand.u32 %v931, 4294901760
  %v933 = vsub.f32 %v931, %v932
  %v934 = vand.u32 %v933, 4294901760
  %935 = vmatpush.msra.mxu0 %v934
  %v936 = vand.u32 %v28, 4294901760
  %v937 = vsub.f32 %v28, %v936
  %v938 = vand.u32 %v937, 4294901760
  %v939 = vsub.f32 %v937, %v938
  %v940 = vand.u32 %v939, 4294901760
  %941 = vmatpush.msra.mxu0 %v940
  %v942 = vand.u32 %v27, 4294901760
  %v943 = vsub.f32 %v27, %v942
  %v944 = vand.u32 %v943, 4294901760
  %v945 = vsub.f32 %v943, %v944
  %v946 = vand.u32 %v945, 4294901760
  %947 = vmatpush.msra.mxu0 %v946
  %v948 = vand.u32 %v26, 4294901760
  %v949 = vsub.f32 %v26, %v948
  %v950 = vand.u32 %v949, 4294901760
  %v951 = vsub.f32 %v949, %v950
  %v952 = vand.u32 %v951, 4294901760
  %953 = vmatpush.msra.mxu0 %v952
  %v954 = vand.u32 %v887, 4294901760
  %955 = vmatmul.f32.gmra.mxu0 %v954
  %v956 = vpop.f32.mrf.mxu0
  %v957 = vadd.f32 %v916, %v956
  %958 = vdwg.mxu0
  %959 = vmatpush.msra.mxu0 0.0
  %960 = vmatpush.msra.mxu0 0.0
  %961 = vmatpush.msra.mxu0 0.0
  %962 = vmatpush.msra.mxu0 0.0
  %963 = vmatpush.msra.mxu0 0.0
  %964 = vmatpush.msra.mxu0 0.0
  %965 = vmatpush.msra.mxu0 0.0
  %966 = vmatpush.msra.mxu0 0.0
  %967 = vmatpush.msra.mxu0 0.0
  %968 = vmatpush.msra.mxu0 0.0
  %969 = vmatpush.msra.mxu0 0.0
  %970 = vmatpush.msra.mxu0 0.0
  %v971 = vand.u32 %v29, 4294901760
  %v972 = vsub.f32 %v29, %v971
  %973 = vmatpush.msra.mxu0 %v972
  %v974 = vand.u32 %v28, 4294901760
  %v975 = vsub.f32 %v28, %v974
  %976 = vmatpush.msra.mxu0 %v975
  %v977 = vand.u32 %v27, 4294901760
  %v978 = vsub.f32 %v27, %v977
  %979 = vmatpush.msra.mxu0 %v978
  %v980 = vand.u32 %v26, 4294901760
  %v981 = vsub.f32 %v26, %v980
  %982 = vmatpush.msra.mxu0 %v981
  %v983 = vand.u32 %v887, 4294901760
  %v984 = vsub.f32 %v887, %v983
  %985 = vmatmul.f32.gmra.mxu0 %v984
  %v986 = vpop.f32.mrf.mxu0
  %v987 = vadd.f32 %v957, %v986
  %988 = vdwg.mxu0
  %989 = vmatpush.msra.mxu0 0.0
  %990 = vmatpush.msra.mxu0 0.0
  %991 = vmatpush.msra.mxu0 0.0
  %992 = vmatpush.msra.mxu0 0.0
  %993 = vmatpush.msra.mxu0 0.0
  %994 = vmatpush.msra.mxu0 0.0
  %995 = vmatpush.msra.mxu0 0.0
  %996 = vmatpush.msra.mxu0 0.0
  %997 = vmatpush.msra.mxu0 0.0
  %998 = vmatpush.msra.mxu0 0.0
  %999 = vmatpush.msra.mxu0 0.0
  %1000 = vmatpush.msra.mxu0 0.0
  %v1001 = vand.u32 %v29, 4294901760
  %1002 = vmatpush.msra.mxu0 %v1001
  %v1003 = vand.u32 %v28, 4294901760
  %1004 = vmatpush.msra.mxu0 %v1003
  %v1005 = vand.u32 %v27, 4294901760
  %1006 = vmatpush.msra.mxu0 %v1005
  %v1007 = vand.u32 %v26, 4294901760
  %1008 = vmatpush.msra.mxu0 %v1007
  %v1009 = vand.u32 %v887, 4294901760
  %v1010 = vsub.f32 %v887, %v1009
  %v1011 = vand.u32 %v1010, 4294901760
  %1012 = vmatmul.f32.gmra.mxu0 %v1011
  %v1013 = vpop.f32.mrf.mxu0
  %v1014 = vadd.f32 %v987, %v1013
  %1015 = vdwg.mxu0
  %1016 = vmatpush.msra.mxu0 0.0
  %1017 = vmatpush.msra.mxu0 0.0
  %1018 = vmatpush.msra.mxu0 0.0
  %1019 = vmatpush.msra.mxu0 0.0
  %1020 = vmatpush.msra.mxu0 0.0
  %1021 = vmatpush.msra.mxu0 0.0
  %1022 = vmatpush.msra.mxu0 0.0
  %1023 = vmatpush.msra.mxu0 0.0
  %1024 = vmatpush.msra.mxu0 0.0
  %1025 = vmatpush.msra.mxu0 0.0
  %1026 = vmatpush.msra.mxu0 0.0
  %1027 = vmatpush.msra.mxu0 0.0
  %v1028 = vand.u32 %v29, 4294901760
  %v1029 = vsub.f32 %v29, %v1028
  %v1030 = vand.u32 %v1029, 4294901760
  %1031 = vmatpush.msra.mxu0 %v1030
  %v1032 = vand.u32 %v28, 4294901760
  %v1033 = vsub.f32 %v28, %v1032
  %v1034 = vand.u32 %v1033, 4294901760
  %1035 = vmatpush.msra.mxu0 %v1034
  %v1036 = vand.u32 %v27, 4294901760
  %v1037 = vsub.f32 %v27, %v1036
  %v1038 = vand.u32 %v1037, 4294901760
  %1039 = vmatpush.msra.mxu0 %v1038
  %v1040 = vand.u32 %v26, 4294901760
  %v1041 = vsub.f32 %v26, %v1040
  %v1042 = vand.u32 %v1041, 4294901760
  %1043 = vmatpush.msra.mxu0 %v1042
  %v1044 = vand.u32 %v887, 4294901760
  %1045 = vmatmul.f32.gmra.mxu0 %v1044
  %v1046 = vpop.f32.mrf.mxu0
  %v1047 = vadd.f32 %v1014, %v1046
  %1048 = vdwg.mxu0
  %1049 = vmatpush.msra.mxu0 0.0
  %1050 = vmatpush.msra.mxu0 0.0
  %1051 = vmatpush.msra.mxu0 0.0
  %1052 = vmatpush.msra.mxu0 0.0
  %1053 = vmatpush.msra.mxu0 0.0
  %1054 = vmatpush.msra.mxu0 0.0
  %1055 = vmatpush.msra.mxu0 0.0
  %1056 = vmatpush.msra.mxu0 0.0
  %1057 = vmatpush.msra.mxu0 0.0
  %1058 = vmatpush.msra.mxu0 0.0
  %1059 = vmatpush.msra.mxu0 0.0
  %1060 = vmatpush.msra.mxu0 0.0
  %v1061 = vand.u32 %v29, 4294901760
  %1062 = vmatpush.msra.mxu0 %v1061
  %v1063 = vand.u32 %v28, 4294901760
  %1064 = vmatpush.msra.mxu0 %v1063
  %v1065 = vand.u32 %v27, 4294901760
  %1066 = vmatpush.msra.mxu0 %v1065
  %v1067 = vand.u32 %v26, 4294901760
  %1068 = vmatpush.msra.mxu0 %v1067
  %v1069 = vand.u32 %v887, 4294901760
  %1070 = vmatmul.f32.gmra.mxu0 %v1069
  %v1071 = vpop.f32.mrf.mxu0
  %v1072 = vadd.f32 %v1047, %v1071
  %1073 = vdwg.mxu0
  %1075 = vrot.lane.b32.xlu0 %v1072, 16
  %v1076 = vpop.permute.xlu0 %1075
  %vm1078 = vcmask 255104
  %1079 = vst.msk [vmem:[%s4] sm:$0x3] %vm1078, %v1076
  %v1080 = vld [vmem:[#allocation2 + $0x4] sm:$0x3]
  %1081 = vmatpush.msra.mxu0 0.0
  %1082 = vmatpush.msra.mxu0 0.0
  %1083 = vmatpush.msra.mxu0 0.0
  %1084 = vmatpush.msra.mxu0 0.0
  %1085 = vmatpush.msra.mxu0 0.0
  %1086 = vmatpush.msra.mxu0 0.0
  %1087 = vmatpush.msra.mxu0 0.0
  %1088 = vmatpush.msra.mxu0 0.0
  %1089 = vmatpush.msra.mxu0 0.0
  %1090 = vmatpush.msra.mxu0 0.0
  %1091 = vmatpush.msra.mxu0 0.0
  %1092 = vmatpush.msra.mxu0 0.0
  %v1093 = vand.u32 %v24, 4294901760
  %1094 = vmatpush.msra.mxu0 %v1093
  %v1095 = vand.u32 %v23, 4294901760
  %1096 = vmatpush.msra.mxu0 %v1095
  %v1097 = vand.u32 %v22, 4294901760
  %1098 = vmatpush.msra.mxu0 %v1097
  %v1099 = vand.u32 %v21, 4294901760
  %1100 = vmatpush.msra.mxu0 %v1099
  %v1101 = vand.u32 %v887, 4294901760
  %v1102 = vsub.f32 %v887, %v1101
  %v1103 = vand.u32 %v1102, 4294901760
  %v1104 = vsub.f32 %v1102, %v1103
  %v1105 = vand.u32 %v1104, 4294901760
  %1106 = vmatmul.f32.gmra.mxu0 %v1105
  %v1107 = vpop.f32.mrf.mxu0
  %v1108 = vadd.f32 0.0, %v1107
  %1109 = vdwg.mxu0
  %1110 = vmatpush.msra.mxu0 0.0
  %1111 = vmatpush.msra.mxu0 0.0
  %1112 = vmatpush.msra.mxu0 0.0
  %1113 = vmatpush.msra.mxu0 0.0
  %1114 = vmatpush.msra.mxu0 0.0
  %1115 = vmatpush.msra.mxu0 0.0
  %1116 = vmatpush.msra.mxu0 0.0
  %1117 = vmatpush.msra.mxu0 0.0
  %1118 = vmatpush.msra.mxu0 0.0
  %1119 = vmatpush.msra.mxu0 0.0
  %1120 = vmatpush.msra.mxu0 0.0
  %1121 = vmatpush.msra.mxu0 0.0
  %v1122 = vand.u32 %v24, 4294901760
  %v1123 = vsub.f32 %v24, %v1122
  %v1124 = vand.u32 %v1123, 4294901760
  %v1125 = vsub.f32 %v1123, %v1124
  %v1126 = vand.u32 %v1125, 4294901760
  %1127 = vmatpush.msra.mxu0 %v1126
  %v1128 = vand.u32 %v23, 4294901760
  %v1129 = vsub.f32 %v23, %v1128
  %v1130 = vand.u32 %v1129, 4294901760
  %v1131 = vsub.f32 %v1129, %v1130
  %v1132 = vand.u32 %v1131, 4294901760
  %1133 = vmatpush.msra.mxu0 %v1132
  %v1134 = vand.u32 %v22, 4294901760
  %v1135 = vsub.f32 %v22, %v1134
  %v1136 = vand.u32 %v1135, 4294901760
  %v1137 = vsub.f32 %v1135, %v1136
  %v1138 = vand.u32 %v1137, 4294901760
  %1139 = vmatpush.msra.mxu0 %v1138
  %v1140 = vand.u32 %v21, 4294901760
  %v1141 = vsub.f32 %v21, %v1140
  %v1142 = vand.u32 %v1141, 4294901760
  %v1143 = vsub.f32 %v1141, %v1142
  %v1144 = vand.u32 %v1143, 4294901760
  %1145 = vmatpush.msra.mxu0 %v1144
  %v1146 = vand.u32 %v887, 4294901760
  %1147 = vmatmul.f32.gmra.mxu0 %v1146
  %v1148 = vpop.f32.mrf.mxu0
  %v1149 = vadd.f32 %v1108, %v1148
  %1150 = vdwg.mxu0
  %1151 = vmatpush.msra.mxu0 0.0
  %1152 = vmatpush.msra.mxu0 0.0
  %1153 = vmatpush.msra.mxu0 0.0
  %1154 = vmatpush.msra.mxu0 0.0
  %1155 = vmatpush.msra.mxu0 0.0
  %1156 = vmatpush.msra.mxu0 0.0
  %1157 = vmatpush.msra.mxu0 0.0
  %1158 = vmatpush.msra.mxu0 0.0
  %1159 = vmatpush.msra.mxu0 0.0
  %1160 = vmatpush.msra.mxu0 0.0
  %1161 = vmatpush.msra.mxu0 0.0
  %1162 = vmatpush.msra.mxu0 0.0
  %v1163 = vand.u32 %v24, 4294901760
  %v1164 = vsub.f32 %v24, %v1163
  %1165 = vmatpush.msra.mxu0 %v1164
  %v1166 = vand.u32 %v23, 4294901760
  %v1167 = vsub.f32 %v23, %v1166
  %1168 = vmatpush.msra.mxu0 %v1167
  %v1169 = vand.u32 %v22, 4294901760
  %v1170 = vsub.f32 %v22, %v1169
  %1171 = vmatpush.msra.mxu0 %v1170
  %v1172 = vand.u32 %v21, 4294901760
  %v1173 = vsub.f32 %v21, %v1172
  %1174 = vmatpush.msra.mxu0 %v1173
  %v1175 = vand.u32 %v887, 4294901760
  %v1176 = vsub.f32 %v887, %v1175
  %1177 = vmatmul.f32.gmra.mxu0 %v1176
  %v1178 = vpop.f32.mrf.mxu0
  %v1179 = vadd.f32 %v1149, %v1178
  %1180 = vdwg.mxu0
  %1181 = vmatpush.msra.mxu0 0.0
  %1182 = vmatpush.msra.mxu0 0.0
  %1183 = vmatpush.msra.mxu0 0.0
  %1184 = vmatpush.msra.mxu0 0.0
  %1185 = vmatpush.msra.mxu0 0.0
  %1186 = vmatpush.msra.mxu0 0.0
  %1187 = vmatpush.msra.mxu0 0.0
  %1188 = vmatpush.msra.mxu0 0.0
  %1189 = vmatpush.msra.mxu0 0.0
  %1190 = vmatpush.msra.mxu0 0.0
  %1191 = vmatpush.msra.mxu0 0.0
  %1192 = vmatpush.msra.mxu0 0.0
  %v1193 = vand.u32 %v24, 4294901760
  %1194 = vmatpush.msra.mxu0 %v1193
  %v1195 = vand.u32 %v23, 4294901760
  %1196 = vmatpush.msra.mxu0 %v1195
  %v1197 = vand.u32 %v22, 4294901760
  %1198 = vmatpush.msra.mxu0 %v1197
  %v1199 = vand.u32 %v21, 4294901760
  %1200 = vmatpush.msra.mxu0 %v1199
  %v1201 = vand.u32 %v887, 4294901760
  %v1202 = vsub.f32 %v887, %v1201
  %v1203 = vand.u32 %v1202, 4294901760
  %1204 = vmatmul.f32.gmra.mxu0 %v1203
  %v1205 = vpop.f32.mrf.mxu0
  %v1206 = vadd.f32 %v1179, %v1205
  %1207 = vdwg.mxu0
  %1208 = vmatpush.msra.mxu0 0.0
  %1209 = vmatpush.msra.mxu0 0.0
  %1210 = vmatpush.msra.mxu0 0.0
  %1211 = vmatpush.msra.mxu0 0.0
  %1212 = vmatpush.msra.mxu0 0.0
  %1213 = vmatpush.msra.mxu0 0.0
  %1214 = vmatpush.msra.mxu0 0.0
  %1215 = vmatpush.msra.mxu0 0.0
  %1216 = vmatpush.msra.mxu0 0.0
  %1217 = vmatpush.msra.mxu0 0.0
  %1218 = vmatpush.msra.mxu0 0.0
  %1219 = vmatpush.msra.mxu0 0.0
  %v1220 = vand.u32 %v24, 4294901760
  %v1221 = vsub.f32 %v24, %v1220
  %v1222 = vand.u32 %v1221, 4294901760
  %1223 = vmatpush.msra.mxu0 %v1222
  %v1224 = vand.u32 %v23, 4294901760
  %v1225 = vsub.f32 %v23, %v1224
  %v1226 = vand.u32 %v1225, 4294901760
  %1227 = vmatpush.msra.mxu0 %v1226
  %v1228 = vand.u32 %v22, 4294901760
  %v1229 = vsub.f32 %v22, %v1228
  %v1230 = vand.u32 %v1229, 4294901760
  %1231 = vmatpush.msra.mxu0 %v1230
  %v1232 = vand.u32 %v21, 4294901760
  %v1233 = vsub.f32 %v21, %v1232
  %v1234 = vand.u32 %v1233, 4294901760
  %1235 = vmatpush.msra.mxu0 %v1234
  %v1236 = vand.u32 %v887, 4294901760
  %1237 = vmatmul.f32.gmra.mxu0 %v1236
  %v1238 = vpop.f32.mrf.mxu0
  %v1239 = vadd.f32 %v1206, %v1238
  %1240 = vdwg.mxu0
  %1241 = vmatpush.msra.mxu0 0.0
  %1242 = vmatpush.msra.mxu0 0.0
  %1243 = vmatpush.msra.mxu0 0.0
  %1244 = vmatpush.msra.mxu0 0.0
  %1245 = vmatpush.msra.mxu0 0.0
  %1246 = vmatpush.msra.mxu0 0.0
  %1247 = vmatpush.msra.mxu0 0.0
  %1248 = vmatpush.msra.mxu0 0.0
  %1249 = vmatpush.msra.mxu0 0.0
  %1250 = vmatpush.msra.mxu0 0.0
  %1251 = vmatpush.msra.mxu0 0.0
  %1252 = vmatpush.msra.mxu0 0.0
  %v1253 = vand.u32 %v24, 4294901760
  %1254 = vmatpush.msra.mxu0 %v1253
  %v1255 = vand.u32 %v23, 4294901760
  %1256 = vmatpush.msra.mxu0 %v1255
  %v1257 = vand.u32 %v22, 4294901760
  %1258 = vmatpush.msra.mxu0 %v1257
  %v1259 = vand.u32 %v21, 4294901760
  %1260 = vmatpush.msra.mxu0 %v1259
  %v1261 = vand.u32 %v887, 4294901760
  %1262 = vmatmul.f32.gmra.mxu0 %v1261
  %v1263 = vpop.f32.mrf.mxu0
  %v1264 = vadd.f32 %v1239, %v1263
  %1265 = vdwg.mxu0
  %v1266 = vadd.f32 %v1080, %v1264
  %v1267 = vxor.u32 %v1266, 2147483648
  %v1268 = vmul.f32 %v1267, 1.442695
  %v1269 = vpow.pop %v1268
  %v1270 = vadd.f32 %v1269, 1.0
  %v1271 = vrcp.pop %v1270
  %v1272 = vmul.f32 %v1270, %v1271
  %v1273 = vsub.f32 1.0, %v1272
  %v1274 = vmul.f32 %v1271, %v1273
  %v1275 = vadd.f32 %v1271, %v1274
  %vm1276 = vweird.f32 %v1270
  %vm1277 = vweird.f32 %v1271
  %vm1278 = vmor %vm1276, %vm1277
  %v1279 = vsel %vm1278, %v1271, %v1275
  %v1280 = vand.u32 2147483647, %v1270
  %vm1281 = vcmp.eq.f32.partialorder %v1280, 8.507059e+37
  %v1282 = vand.u32 %v1270, 2147483648
  %v1283 = vor.u32 1.1754944e-38, %v1282
  %v1284 = vsel %vm1281, %v1283, %v1279
  %v1285 = vmul.f32 1.0, %v1284
  %v1286 = vtanh.pop %v1266
  %v1287 = vmul.f32 %v1285, %v877
  %1289 = vrot.lane.b32.xlu0 %v1286, 32
  %v1290 = vpop.permute.xlu0 %1289
  %v1292 = vmul.f32 %v1285, %v1290
  %1294 = vrot.lane.b32.xlu0 %v1292, 32
  %v1295 = vpop.permute.xlu0 %1294
  %v1297 = vadd.f32 %v1287, %v1295
  %v1298 = vtanh.pop %v1297
  %1300 = vrot.lane.b32.xlu0 %v1298, 32
  %v1301 = vpop.permute.xlu0 %1300
  %v1303 = vmul.f32 %v1285, %v1301
  %1305 = vrot.lane.b32.xlu0 %v1303, 64
  %v1306 = vpop.permute.xlu0 %1305
  %v1307 = vsel %vm236, %v1306, 0
  %1309 = vmatpush.msra.mxu0 0.0
  %1310 = vmatpush.msra.mxu0 0.0
  %1311 = vmatpush.msra.mxu0 0.0
  %1312 = vmatpush.msra.mxu0 0.0
  %1313 = vmatpush.msra.mxu0 0.0
  %1314 = vmatpush.msra.mxu0 0.0
  %1315 = vmatpush.msra.mxu0 0.0
  %1316 = vmatpush.msra.mxu0 0.0
  %1317 = vmatpush.msra.mxu0 0.0
  %1318 = vmatpush.msra.mxu0 0.0
  %1319 = vmatpush.msra.mxu0 0.0
  %1320 = vmatpush.msra.mxu0 0.0
  %v1321 = vand.u32 %v29, 4294901760
  %1322 = vmatpush.msra.mxu0 %v1321
  %v1323 = vand.u32 %v28, 4294901760
  %1324 = vmatpush.msra.mxu0 %v1323
  %v1325 = vand.u32 %v27, 4294901760
  %1326 = vmatpush.msra.mxu0 %v1325
  %v1327 = vand.u32 %v26, 4294901760
  %1328 = vmatpush.msra.mxu0 %v1327
  %v1329 = vand.u32 %v1307, 4294901760
  %v1330 = vsub.f32 %v1307, %v1329
  %v1331 = vand.u32 %v1330, 4294901760
  %v1332 = vsub.f32 %v1330, %v1331
  %v1333 = vand.u32 %v1332, 4294901760
  %1334 = vmatmul.f32.gmra.mxu0 %v1333
  %v1335 = vpop.f32.mrf.mxu0
  %v1336 = vadd.f32 %v467, %v1335
  %1337 = vdwg.mxu0
  %1338 = vmatpush.msra.mxu0 0.0
  %1339 = vmatpush.msra.mxu0 0.0
  %1340 = vmatpush.msra.mxu0 0.0
  %1341 = vmatpush.msra.mxu0 0.0
  %1342 = vmatpush.msra.mxu0 0.0
  %1343 = vmatpush.msra.mxu0 0.0
  %1344 = vmatpush.msra.mxu0 0.0
  %1345 = vmatpush.msra.mxu0 0.0
  %1346 = vmatpush.msra.mxu0 0.0
  %1347 = vmatpush.msra.mxu0 0.0
  %1348 = vmatpush.msra.mxu0 0.0
  %1349 = vmatpush.msra.mxu0 0.0
  %v1350 = vand.u32 %v29, 4294901760
  %v1351 = vsub.f32 %v29, %v1350
  %v1352 = vand.u32 %v1351, 4294901760
  %v1353 = vsub.f32 %v1351, %v1352
  %v1354 = vand.u32 %v1353, 4294901760
  %1355 = vmatpush.msra.mxu0 %v1354
  %v1356 = vand.u32 %v28, 4294901760
  %v1357 = vsub.f32 %v28, %v1356
  %v1358 = vand.u32 %v1357, 4294901760
  %v1359 = vsub.f32 %v1357, %v1358
  %v1360 = vand.u32 %v1359, 4294901760
  %1361 = vmatpush.msra.mxu0 %v1360
  %v1362 = vand.u32 %v27, 4294901760
  %v1363 = vsub.f32 %v27, %v1362
  %v1364 = vand.u32 %v1363, 4294901760
  %v1365 = vsub.f32 %v1363, %v1364
  %v1366 = vand.u32 %v1365, 4294901760
  %1367 = vmatpush.msra.mxu0 %v1366
  %v1368 = vand.u32 %v26, 4294901760
  %v1369 = vsub.f32 %v26, %v1368
  %v1370 = vand.u32 %v1369, 4294901760
  %v1371 = vsub.f32 %v1369, %v1370
  %v1372 = vand.u32 %v1371, 4294901760
  %1373 = vmatpush.msra.mxu0 %v1372
  %v1374 = vand.u32 %v1307, 4294901760
  %1375 = vmatmul.f32.gmra.mxu0 %v1374
  %v1376 = vpop.f32.mrf.mxu0
  %v1377 = vadd.f32 %v1336, %v1376
  %1378 = vdwg.mxu0
  %1379 = vmatpush.msra.mxu0 0.0
  %1380 = vmatpush.msra.mxu0 0.0
  %1381 = vmatpush.msra.mxu0 0.0
  %1382 = vmatpush.msra.mxu0 0.0
  %1383 = vmatpush.msra.mxu0 0.0
  %1384 = vmatpush.msra.mxu0 0.0
  %1385 = vmatpush.msra.mxu0 0.0
  %1386 = vmatpush.msra.mxu0 0.0
  %1387 = vmatpush.msra.mxu0 0.0
  %1388 = vmatpush.msra.mxu0 0.0
  %1389 = vmatpush.msra.mxu0 0.0
  %1390 = vmatpush.msra.mxu0 0.0
  %v1391 = vand.u32 %v29, 4294901760
  %v1392 = vsub.f32 %v29, %v1391
  %1393 = vmatpush.msra.mxu0 %v1392
  %v1394 = vand.u32 %v28, 4294901760
  %v1395 = vsub.f32 %v28, %v1394
  %1396 = vmatpush.msra.mxu0 %v1395
  %v1397 = vand.u32 %v27, 4294901760
  %v1398 = vsub.f32 %v27, %v1397
  %1399 = vmatpush.msra.mxu0 %v1398
  %v1400 = vand.u32 %v26, 4294901760
  %v1401 = vsub.f32 %v26, %v1400
  %1402 = vmatpush.msra.mxu0 %v1401
  %v1403 = vand.u32 %v1307, 4294901760
  %v1404 = vsub.f32 %v1307, %v1403
  %1405 = vmatmul.f32.gmra.mxu0 %v1404
  %v1406 = vpop.f32.mrf.mxu0
  %v1407 = vadd.f32 %v1377, %v1406
  %1408 = vdwg.mxu0
  %1409 = vmatpush.msra.mxu0 0.0
  %1410 = vmatpush.msra.mxu0 0.0
  %1411 = vmatpush.msra.mxu0 0.0
  %1412 = vmatpush.msra.mxu0 0.0
  %1413 = vmatpush.msra.mxu0 0.0
  %1414 = vmatpush.msra.mxu0 0.0
  %1415 = vmatpush.msra.mxu0 0.0
  %1416 = vmatpush.msra.mxu0 0.0
  %1417 = vmatpush.msra.mxu0 0.0
  %1418 = vmatpush.msra.mxu0 0.0
  %1419 = vmatpush.msra.mxu0 0.0
  %1420 = vmatpush.msra.mxu0 0.0
  %v1421 = vand.u32 %v29, 4294901760
  %1422 = vmatpush.msra.mxu0 %v1421
  %v1423 = vand.u32 %v28, 4294901760
  %1424 = vmatpush.msra.mxu0 %v1423
  %v1425 = vand.u32 %v27, 4294901760
  %1426 = vmatpush.msra.mxu0 %v1425
  %v1427 = vand.u32 %v26, 4294901760
  %1428 = vmatpush.msra.mxu0 %v1427
  %v1429 = vand.u32 %v1307, 4294901760
  %v1430 = vsub.f32 %v1307, %v1429
  %v1431 = vand.u32 %v1430, 4294901760
  %1432 = vmatmul.f32.gmra.mxu0 %v1431
  %v1433 = vpop.f32.mrf.mxu0
  %v1434 = vadd.f32 %v1407, %v1433
  %1435 = vdwg.mxu0
  %1436 = vmatpush.msra.mxu0 0.0
  %1437 = vmatpush.msra.mxu0 0.0
  %1438 = vmatpush.msra.mxu0 0.0
  %1439 = vmatpush.msra.mxu0 0.0
  %1440 = vmatpush.msra.mxu0 0.0
  %1441 = vmatpush.msra.mxu0 0.0
  %1442 = vmatpush.msra.mxu0 0.0
  %1443 = vmatpush.msra.mxu0 0.0
  %1444 = vmatpush.msra.mxu0 0.0
  %1445 = vmatpush.msra.mxu0 0.0
  %1446 = vmatpush.msra.mxu0 0.0
  %1447 = vmatpush.msra.mxu0 0.0
  %v1448 = vand.u32 %v29, 4294901760
  %v1449 = vsub.f32 %v29, %v1448
  %v1450 = vand.u32 %v1449, 4294901760
  %1451 = vmatpush.msra.mxu0 %v1450
  %v1452 = vand.u32 %v28, 4294901760
  %v1453 = vsub.f32 %v28, %v1452
  %v1454 = vand.u32 %v1453, 4294901760
  %1455 = vmatpush.msra.mxu0 %v1454
  %v1456 = vand.u32 %v27, 4294901760
  %v1457 = vsub.f32 %v27, %v1456
  %v1458 = vand.u32 %v1457, 4294901760
  %1459 = vmatpush.msra.mxu0 %v1458
  %v1460 = vand.u32 %v26, 4294901760
  %v1461 = vsub.f32 %v26, %v1460
  %v1462 = vand.u32 %v1461, 4294901760
  %1463 = vmatpush.msra.mxu0 %v1462
  %v1464 = vand.u32 %v1307, 4294901760
  %1465 = vmatmul.f32.gmra.mxu0 %v1464
  %v1466 = vpop.f32.mrf.mxu0
  %v1467 = vadd.f32 %v1434, %v1466
  %1468 = vdwg.mxu0
  %1469 = vmatpush.msra.mxu0 0.0
  %1470 = vmatpush.msra.mxu0 0.0
  %1471 = vmatpush.msra.mxu0 0.0
  %1472 = vmatpush.msra.mxu0 0.0
  %1473 = vmatpush.msra.mxu0 0.0
  %1474 = vmatpush.msra.mxu0 0.0
  %1475 = vmatpush.msra.mxu0 0.0
  %1476 = vmatpush.msra.mxu0 0.0
  %1477 = vmatpush.msra.mxu0 0.0
  %1478 = vmatpush.msra.mxu0 0.0
  %1479 = vmatpush.msra.mxu0 0.0
  %1480 = vmatpush.msra.mxu0 0.0
  %v1481 = vand.u32 %v29, 4294901760
  %1482 = vmatpush.msra.mxu0 %v1481
  %v1483 = vand.u32 %v28, 4294901760
  %1484 = vmatpush.msra.mxu0 %v1483
  %v1485 = vand.u32 %v27, 4294901760
  %1486 = vmatpush.msra.mxu0 %v1485
  %v1487 = vand.u32 %v26, 4294901760
  %1488 = vmatpush.msra.mxu0 %v1487
  %v1489 = vand.u32 %v1307, 4294901760
  %1490 = vmatmul.f32.gmra.mxu0 %v1489
  %v1491 = vpop.f32.mrf.mxu0
  %v1492 = vadd.f32 %v1467, %v1491
  %1493 = vdwg.mxu0
  %1495 = vrot.lane.b32.xlu0 %v1492, 32
  %v1496 = vpop.permute.xlu0 %1495
  %vm1498 = vcmask 386304
  %1499 = vst.msk [vmem:[%s4] sm:$0x3] %vm1498, %v1496
  %v1500 = vld [vmem:[#allocation2 + $0x6] sm:$0x3]
  %1501 = vmatpush.msra.mxu0 0.0
  %1502 = vmatpush.msra.mxu0 0.0
  %1503 = vmatpush.msra.mxu0 0.0
  %1504 = vmatpush.msra.mxu0 0.0
  %1505 = vmatpush.msra.mxu0 0.0
  %1506 = vmatpush.msra.mxu0 0.0
  %1507 = vmatpush.msra.mxu0 0.0
  %1508 = vmatpush.msra.mxu0 0.0
  %1509 = vmatpush.msra.mxu0 0.0
  %1510 = vmatpush.msra.mxu0 0.0
  %1511 = vmatpush.msra.mxu0 0.0
  %1512 = vmatpush.msra.mxu0 0.0
  %v1513 = vand.u32 %v24, 4294901760
  %1514 = vmatpush.msra.mxu0 %v1513
  %v1515 = vand.u32 %v23, 4294901760
  %1516 = vmatpush.msra.mxu0 %v1515
  %v1517 = vand.u32 %v22, 4294901760
  %1518 = vmatpush.msra.mxu0 %v1517
  %v1519 = vand.u32 %v21, 4294901760
  %1520 = vmatpush.msra.mxu0 %v1519
  %v1521 = vand.u32 %v1307, 4294901760
  %v1522 = vsub.f32 %v1307, %v1521
  %v1523 = vand.u32 %v1522, 4294901760
  %v1524 = vsub.f32 %v1522, %v1523
  %v1525 = vand.u32 %v1524, 4294901760
  %1526 = vmatmul.f32.gmra.mxu0 %v1525
  %v1527 = vpop.f32.mrf.mxu0
  %v1528 = vadd.f32 0.0, %v1527
  %1529 = vdwg.mxu0
  %1530 = vmatpush.msra.mxu0 0.0
  %1531 = vmatpush.msra.mxu0 0.0
  %1532 = vmatpush.msra.mxu0 0.0
  %1533 = vmatpush.msra.mxu0 0.0
  %1534 = vmatpush.msra.mxu0 0.0
  %1535 = vmatpush.msra.mxu0 0.0
  %1536 = vmatpush.msra.mxu0 0.0
  %1537 = vmatpush.msra.mxu0 0.0
  %1538 = vmatpush.msra.mxu0 0.0
  %1539 = vmatpush.msra.mxu0 0.0
  %1540 = vmatpush.msra.mxu0 0.0
  %1541 = vmatpush.msra.mxu0 0.0
  %v1542 = vand.u32 %v24, 4294901760
  %v1543 = vsub.f32 %v24, %v1542
  %v1544 = vand.u32 %v1543, 4294901760
  %v1545 = vsub.f32 %v1543, %v1544
  %v1546 = vand.u32 %v1545, 4294901760
  %1547 = vmatpush.msra.mxu0 %v1546
  %v1548 = vand.u32 %v23, 4294901760
  %v1549 = vsub.f32 %v23, %v1548
  %v1550 = vand.u32 %v1549, 4294901760
  %v1551 = vsub.f32 %v1549, %v1550
  %v1552 = vand.u32 %v1551, 4294901760
  %1553 = vmatpush.msra.mxu0 %v1552
  %v1554 = vand.u32 %v22, 4294901760
  %v1555 = vsub.f32 %v22, %v1554
  %v1556 = vand.u32 %v1555, 4294901760
  %v1557 = vsub.f32 %v1555, %v1556
  %v1558 = vand.u32 %v1557, 4294901760
  %1559 = vmatpush.msra.mxu0 %v1558
  %v1560 = vand.u32 %v21, 4294901760
  %v1561 = vsub.f32 %v21, %v1560
  %v1562 = vand.u32 %v1561, 4294901760
  %v1563 = vsub.f32 %v1561, %v1562
  %v1564 = vand.u32 %v1563, 4294901760
  %1565 = vmatpush.msra.mxu0 %v1564
  %v1566 = vand.u32 %v1307, 4294901760
  %1567 = vmatmul.f32.gmra.mxu0 %v1566
  %v1568 = vpop.f32.mrf.mxu0
  %v1569 = vadd.f32 %v1528, %v1568
  %1570 = vdwg.mxu0
  %1571 = vmatpush.msra.mxu0 0.0
  %1572 = vmatpush.msra.mxu0 0.0
  %1573 = vmatpush.msra.mxu0 0.0
  %1574 = vmatpush.msra.mxu0 0.0
  %1575 = vmatpush.msra.mxu0 0.0
  %1576 = vmatpush.msra.mxu0 0.0
  %1577 = vmatpush.msra.mxu0 0.0
  %1578 = vmatpush.msra.mxu0 0.0
  %1579 = vmatpush.msra.mxu0 0.0
  %1580 = vmatpush.msra.mxu0 0.0
  %1581 = vmatpush.msra.mxu0 0.0
  %1582 = vmatpush.msra.mxu0 0.0
  %v1583 = vand.u32 %v24, 4294901760
  %v1584 = vsub.f32 %v24, %v1583
  %1585 = vmatpush.msra.mxu0 %v1584
  %v1586 = vand.u32 %v23, 4294901760
  %v1587 = vsub.f32 %v23, %v1586
  %1588 = vmatpush.msra.mxu0 %v1587
  %v1589 = vand.u32 %v22, 4294901760
  %v1590 = vsub.f32 %v22, %v1589
  %1591 = vmatpush.msra.mxu0 %v1590
  %v1592 = vand.u32 %v21, 4294901760
  %v1593 = vsub.f32 %v21, %v1592
  %1594 = vmatpush.msra.mxu0 %v1593
  %v1595 = vand.u32 %v1307, 4294901760
  %v1596 = vsub.f32 %v1307, %v1595
  %1597 = vmatmul.f32.gmra.mxu0 %v1596
  %v1598 = vpop.f32.mrf.mxu0
  %v1599 = vadd.f32 %v1569, %v1598
  %1600 = vdwg.mxu0
  %1601 = vmatpush.msra.mxu0 0.0
  %1602 = vmatpush.msra.mxu0 0.0
  %1603 = vmatpush.msra.mxu0 0.0
  %1604 = vmatpush.msra.mxu0 0.0
  %1605 = vmatpush.msra.mxu0 0.0
  %1606 = vmatpush.msra.mxu0 0.0
  %1607 = vmatpush.msra.mxu0 0.0
  %1608 = vmatpush.msra.mxu0 0.0
  %1609 = vmatpush.msra.mxu0 0.0
  %1610 = vmatpush.msra.mxu0 0.0
  %1611 = vmatpush.msra.mxu0 0.0
  %1612 = vmatpush.msra.mxu0 0.0
  %v1613 = vand.u32 %v24, 4294901760
  %1614 = vmatpush.msra.mxu0 %v1613
  %v1615 = vand.u32 %v23, 4294901760
  %1616 = vmatpush.msra.mxu0 %v1615
  %v1617 = vand.u32 %v22, 4294901760
  %1618 = vmatpush.msra.mxu0 %v1617
  %v1619 = vand.u32 %v21, 4294901760
  %1620 = vmatpush.msra.mxu0 %v1619
  %v1621 = vand.u32 %v1307, 4294901760
  %v1622 = vsub.f32 %v1307, %v1621
  %v1623 = vand.u32 %v1622, 4294901760
  %1624 = vmatmul.f32.gmra.mxu0 %v1623
  %v1625 = vpop.f32.mrf.mxu0
  %v1626 = vadd.f32 %v1599, %v1625
  %1627 = vdwg.mxu0
  %1628 = vmatpush.msra.mxu0 0.0
  %1629 = vmatpush.msra.mxu0 0.0
  %1630 = vmatpush.msra.mxu0 0.0
  %1631 = vmatpush.msra.mxu0 0.0
  %1632 = vmatpush.msra.mxu0 0.0
  %1633 = vmatpush.msra.mxu0 0.0
  %1634 = vmatpush.msra.mxu0 0.0
  %1635 = vmatpush.msra.mxu0 0.0
  %1636 = vmatpush.msra.mxu0 0.0
  %1637 = vmatpush.msra.mxu0 0.0
  %1638 = vmatpush.msra.mxu0 0.0
  %1639 = vmatpush.msra.mxu0 0.0
  %v1640 = vand.u32 %v24, 4294901760
  %v1641 = vsub.f32 %v24, %v1640
  %v1642 = vand.u32 %v1641, 4294901760
  %1643 = vmatpush.msra.mxu0 %v1642
  %v1644 = vand.u32 %v23, 4294901760
  %v1645 = vsub.f32 %v23, %v1644
  %v1646 = vand.u32 %v1645, 4294901760
  %1647 = vmatpush.msra.mxu0 %v1646
  %v1648 = vand.u32 %v22, 4294901760
  %v1649 = vsub.f32 %v22, %v1648
  %v1650 = vand.u32 %v1649, 4294901760
  %1651 = vmatpush.msra.mxu0 %v1650
  %v1652 = vand.u32 %v21, 4294901760
  %v1653 = vsub.f32 %v21, %v1652
  %v1654 = vand.u32 %v1653, 4294901760
  %1655 = vmatpush.msra.mxu0 %v1654
  %v1656 = vand.u32 %v1307, 4294901760
  %1657 = vmatmul.f32.gmra.mxu0 %v1656
  %v1658 = vpop.f32.mrf.mxu0
  %v1659 = vadd.f32 %v1626, %v1658
  %1660 = vdwg.mxu0
  %1661 = vmatpush.msra.mxu0 0.0
  %1662 = vmatpush.msra.mxu0 0.0
  %1663 = vmatpush.msra.mxu0 0.0
  %1664 = vmatpush.msra.mxu0 0.0
  %1665 = vmatpush.msra.mxu0 0.0
  %1666 = vmatpush.msra.mxu0 0.0
  %1667 = vmatpush.msra.mxu0 0.0
  %1668 = vmatpush.msra.mxu0 0.0
  %1669 = vmatpush.msra.mxu0 0.0
  %1670 = vmatpush.msra.mxu0 0.0
  %1671 = vmatpush.msra.mxu0 0.0
  %1672 = vmatpush.msra.mxu0 0.0
  %v1673 = vand.u32 %v24, 4294901760
  %1674 = vmatpush.msra.mxu0 %v1673
  %v1675 = vand.u32 %v23, 4294901760
  %1676 = vmatpush.msra.mxu0 %v1675
  %v1677 = vand.u32 %v22, 4294901760
  %1678 = vmatpush.msra.mxu0 %v1677
  %v1679 = vand.u32 %v21, 4294901760
  %1680 = vmatpush.msra.mxu0 %v1679
  %v1681 = vand.u32 %v1307, 4294901760
  %1682 = vmatmul.f32.gmra.mxu0 %v1681
  %v1683 = vpop.f32.mrf.mxu0
  %v1684 = vadd.f32 %v1659, %v1683
  %1685 = vdwg.mxu0
  %v1686 = vadd.f32 %v1500, %v1684
  %v1687 = vxor.u32 %v1686, 2147483648
  %v1688 = vmul.f32 %v1687, 1.442695
  %v1689 = vpow.pop %v1688
  %v1690 = vadd.f32 %v1689, 1.0
  %v1691 = vrcp.pop %v1690
  %v1692 = vmul.f32 %v1690, %v1691
  %v1693 = vsub.f32 1.0, %v1692
  %v1694 = vmul.f32 %v1691, %v1693
  %v1695 = vadd.f32 %v1691, %v1694
  %vm1696 = vweird.f32 %v1690
  %vm1697 = vweird.f32 %v1691
  %vm1698 = vmor %vm1696, %vm1697
  %v1699 = vsel %vm1698, %v1691, %v1695
  %v1700 = vand.u32 2147483647, %v1690
  %vm1701 = vcmp.eq.f32.partialorder %v1700, 8.507059e+37
  %v1702 = vand.u32 %v1690, 2147483648
  %v1703 = vor.u32 1.1754944e-38, %v1702
  %v1704 = vsel %vm1701, %v1703, %v1699
  %v1705 = vmul.f32 1.0, %v1704
  %v1706 = vtanh.pop %v1686
  %v1707 = vmul.f32 %v1705, %v1297
  %1709 = vrot.lane.b32.xlu0 %v1706, 32
  %v1710 = vpop.permute.xlu0 %1709
  %v1712 = vmul.f32 %v1705, %v1710
  %1714 = vrot.lane.b32.xlu0 %v1712, 32
  %v1715 = vpop.permute.xlu0 %1714
  %v1717 = vadd.f32 %v1707, %v1715
  %v1718 = vtanh.pop %v1717
  %1720 = vrot.lane.b32.xlu0 %v1718, 32
  %v1721 = vpop.permute.xlu0 %1720
  %v1723 = vmul.f32 %v1705, %v1721
  %1725 = vrot.lane.b32.xlu0 %v1723, 64
  %v1726 = vpop.permute.xlu0 %1725
  %v1727 = vsel %vm236, %v1726, 0
  %1729 = vmatpush.msra.mxu0 0.0
  %1730 = vmatpush.msra.mxu0 0.0
  %1731 = vmatpush.msra.mxu0 0.0
  %1732 = vmatpush.msra.mxu0 0.0
  %1733 = vmatpush.msra.mxu0 0.0
  %1734 = vmatpush.msra.mxu0 0.0
  %1735 = vmatpush.msra.mxu0 0.0
  %1736 = vmatpush.msra.mxu0 0.0
  %1737 = vmatpush.msra.mxu0 0.0
  %1738 = vmatpush.msra.mxu0 0.0
  %1739 = vmatpush.msra.mxu0 0.0
  %1740 = vmatpush.msra.mxu0 0.0
  %v1741 = vand.u32 %v29, 4294901760
  %1742 = vmatpush.msra.mxu0 %v1741
  %v1743 = vand.u32 %v28, 4294901760
  %1744 = vmatpush.msra.mxu0 %v1743
  %v1745 = vand.u32 %v27, 4294901760
  %1746 = vmatpush.msra.mxu0 %v1745
  %v1747 = vand.u32 %v26, 4294901760
  %1748 = vmatpush.msra.mxu0 %v1747
  %v1749 = vand.u32 %v1727, 4294901760
  %v1750 = vsub.f32 %v1727, %v1749
  %v1751 = vand.u32 %v1750, 4294901760
  %v1752 = vsub.f32 %v1750, %v1751
  %v1753 = vand.u32 %v1752, 4294901760
  %1754 = vmatmul.f32.gmra.mxu0 %v1753
  %v1755 = vpop.f32.mrf.mxu0
  %v1756 = vadd.f32 %v467, %v1755
  %1757 = vdwg.mxu0
  %1758 = vmatpush.msra.mxu0 0.0
  %1759 = vmatpush.msra.mxu0 0.0
  %1760 = vmatpush.msra.mxu0 0.0
  %1761 = vmatpush.msra.mxu0 0.0
  %1762 = vmatpush.msra.mxu0 0.0
  %1763 = vmatpush.msra.mxu0 0.0
  %1764 = vmatpush.msra.mxu0 0.0
  %1765 = vmatpush.msra.mxu0 0.0
  %1766 = vmatpush.msra.mxu0 0.0
  %1767 = vmatpush.msra.mxu0 0.0
  %1768 = vmatpush.msra.mxu0 0.0
  %1769 = vmatpush.msra.mxu0 0.0
  %v1770 = vand.u32 %v29, 4294901760
  %v1771 = vsub.f32 %v29, %v1770
  %v1772 = vand.u32 %v1771, 4294901760
  %v1773 = vsub.f32 %v1771, %v1772
  %v1774 = vand.u32 %v1773, 4294901760
  %1775 = vmatpush.msra.mxu0 %v1774
  %v1776 = vand.u32 %v28, 4294901760
  %v1777 = vsub.f32 %v28, %v1776
  %v1778 = vand.u32 %v1777, 4294901760
  %v1779 = vsub.f32 %v1777, %v1778
  %v1780 = vand.u32 %v1779, 4294901760
  %1781 = vmatpush.msra.mxu0 %v1780
  %v1782 = vand.u32 %v27, 4294901760
  %v1783 = vsub.f32 %v27, %v1782
  %v1784 = vand.u32 %v1783, 4294901760
  %v1785 = vsub.f32 %v1783, %v1784
  %v1786 = vand.u32 %v1785, 4294901760
  %1787 = vmatpush.msra.mxu0 %v1786
  %v1788 = vand.u32 %v26, 4294901760
  %v1789 = vsub.f32 %v26, %v1788
  %v1790 = vand.u32 %v1789, 4294901760
  %v1791 = vsub.f32 %v1789, %v1790
  %v1792 = vand.u32 %v1791, 4294901760
  %1793 = vmatpush.msra.mxu0 %v1792
  %v1794 = vand.u32 %v1727, 4294901760
  %1795 = vmatmul.f32.gmra.mxu0 %v1794
  %v1796 = vpop.f32.mrf.mxu0
  %v1797 = vadd.f32 %v1756, %v1796
  %1798 = vdwg.mxu0
  %1799 = vmatpush.msra.mxu0 0.0
  %1800 = vmatpush.msra.mxu0 0.0
  %1801 = vmatpush.msra.mxu0 0.0
  %1802 = vmatpush.msra.mxu0 0.0
  %1803 = vmatpush.msra.mxu0 0.0
  %1804 = vmatpush.msra.mxu0 0.0
  %1805 = vmatpush.msra.mxu0 0.0
  %1806 = vmatpush.msra.mxu0 0.0
  %1807 = vmatpush.msra.mxu0 0.0
  %1808 = vmatpush.msra.mxu0 0.0
  %1809 = vmatpush.msra.mxu0 0.0
  %1810 = vmatpush.msra.mxu0 0.0
  %v1811 = vand.u32 %v29, 4294901760
  %v1812 = vsub.f32 %v29, %v1811
  %1813 = vmatpush.msra.mxu0 %v1812
  %v1814 = vand.u32 %v28, 4294901760
  %v1815 = vsub.f32 %v28, %v1814
  %1816 = vmatpush.msra.mxu0 %v1815
  %v1817 = vand.u32 %v27, 4294901760
  %v1818 = vsub.f32 %v27, %v1817
  %1819 = vmatpush.msra.mxu0 %v1818
  %v1820 = vand.u32 %v26, 4294901760
  %v1821 = vsub.f32 %v26, %v1820
  %1822 = vmatpush.msra.mxu0 %v1821
  %v1823 = vand.u32 %v1727, 4294901760
  %v1824 = vsub.f32 %v1727, %v1823
  %1825 = vmatmul.f32.gmra.mxu0 %v1824
  %v1826 = vpop.f32.mrf.mxu0
  %v1827 = vadd.f32 %v1797, %v1826
  %1828 = vdwg.mxu0
  %1829 = vmatpush.msra.mxu0 0.0
  %1830 = vmatpush.msra.mxu0 0.0
  %1831 = vmatpush.msra.mxu0 0.0
  %1832 = vmatpush.msra.mxu0 0.0
  %1833 = vmatpush.msra.mxu0 0.0
  %1834 = vmatpush.msra.mxu0 0.0
  %1835 = vmatpush.msra.mxu0 0.0
  %1836 = vmatpush.msra.mxu0 0.0
  %1837 = vmatpush.msra.mxu0 0.0
  %1838 = vmatpush.msra.mxu0 0.0
  %1839 = vmatpush.msra.mxu0 0.0
  %1840 = vmatpush.msra.mxu0 0.0
  %v1841 = vand.u32 %v29, 4294901760
  %1842 = vmatpush.msra.mxu0 %v1841
  %v1843 = vand.u32 %v28, 4294901760
  %1844 = vmatpush.msra.mxu0 %v1843
  %v1845 = vand.u32 %v27, 4294901760
  %1846 = vmatpush.msra.mxu0 %v1845
  %v1847 = vand.u32 %v26, 4294901760
  %1848 = vmatpush.msra.mxu0 %v1847
  %v1849 = vand.u32 %v1727, 4294901760
  %v1850 = vsub.f32 %v1727, %v1849
  %v1851 = vand.u32 %v1850, 4294901760
  %1852 = vmatmul.f32.gmra.mxu0 %v1851
  %v1853 = vpop.f32.mrf.mxu0
  %v1854 = vadd.f32 %v1827, %v1853
  %1855 = vdwg.mxu0
  %1856 = vmatpush.msra.mxu0 0.0
  %1857 = vmatpush.msra.mxu0 0.0
  %1858 = vmatpush.msra.mxu0 0.0
  %1859 = vmatpush.msra.mxu0 0.0
  %1860 = vmatpush.msra.mxu0 0.0
  %1861 = vmatpush.msra.mxu0 0.0
  %1862 = vmatpush.msra.mxu0 0.0
  %1863 = vmatpush.msra.mxu0 0.0
  %1864 = vmatpush.msra.mxu0 0.0
  %1865 = vmatpush.msra.mxu0 0.0
  %1866 = vmatpush.msra.mxu0 0.0
  %1867 = vmatpush.msra.mxu0 0.0
  %v1868 = vand.u32 %v29, 4294901760
  %v1869 = vsub.f32 %v29, %v1868
  %v1870 = vand.u32 %v1869, 4294901760
  %1871 = vmatpush.msra.mxu0 %v1870
  %v1872 = vand.u32 %v28, 4294901760
  %v1873 = vsub.f32 %v28, %v1872
  %v1874 = vand.u32 %v1873, 4294901760
  %1875 = vmatpush.msra.mxu0 %v1874
  %v1876 = vand.u32 %v27, 4294901760
  %v1877 = vsub.f32 %v27, %v1876
  %v1878 = vand.u32 %v1877, 4294901760
  %1879 = vmatpush.msra.mxu0 %v1878
  %v1880 = vand.u32 %v26, 4294901760
  %v1881 = vsub.f32 %v26, %v1880
  %v1882 = vand.u32 %v1881, 4294901760
  %1883 = vmatpush.msra.mxu0 %v1882
  %v1884 = vand.u32 %v1727, 4294901760
  %1885 = vmatmul.f32.gmra.mxu0 %v1884
  %v1886 = vpop.f32.mrf.mxu0
  %v1887 = vadd.f32 %v1854, %v1886
  %1888 = vdwg.mxu0
  %1889 = vmatpush.msra.mxu0 0.0
  %1890 = vmatpush.msra.mxu0 0.0
  %1891 = vmatpush.msra.mxu0 0.0
  %1892 = vmatpush.msra.mxu0 0.0
  %1893 = vmatpush.msra.mxu0 0.0
  %1894 = vmatpush.msra.mxu0 0.0
  %1895 = vmatpush.msra.mxu0 0.0
  %1896 = vmatpush.msra.mxu0 0.0
  %1897 = vmatpush.msra.mxu0 0.0
  %1898 = vmatpush.msra.mxu0 0.0
  %1899 = vmatpush.msra.mxu0 0.0
  %1900 = vmatpush.msra.mxu0 0.0
  %v1901 = vand.u32 %v29, 4294901760
  %1902 = vmatpush.msra.mxu0 %v1901
  %v1903 = vand.u32 %v28, 4294901760
  %1904 = vmatpush.msra.mxu0 %v1903
  %v1905 = vand.u32 %v27, 4294901760
  %1906 = vmatpush.msra.mxu0 %v1905
  %v1907 = vand.u32 %v26, 4294901760
  %1908 = vmatpush.msra.mxu0 %v1907
  %v1909 = vand.u32 %v1727, 4294901760
  %1910 = vmatmul.f32.gmra.mxu0 %v1909
  %v1911 = vpop.f32.mrf.mxu0
  %v1912 = vadd.f32 %v1887, %v1911
  %1913 = vdwg.mxu0
  %1915 = vrot.lane.b32.xlu0 %v1912, 48
  %v1916 = vpop.permute.xlu0 %1915
  %vm1918 = vcmask 517504
  %1919 = vst.msk [vmem:[%s4] sm:$0x3] %vm1918, %v1916
  %v1920 = vld [vmem:[#allocation2 + $0x8] sm:$0x3]
  %1921 = vmatpush.msra.mxu0 0.0
  %1922 = vmatpush.msra.mxu0 0.0
  %1923 = vmatpush.msra.mxu0 0.0
  %1924 = vmatpush.msra.mxu0 0.0
  %1925 = vmatpush.msra.mxu0 0.0
  %1926 = vmatpush.msra.mxu0 0.0
  %1927 = vmatpush.msra.mxu0 0.0
  %1928 = vmatpush.msra.mxu0 0.0
  %1929 = vmatpush.msra.mxu0 0.0
  %1930 = vmatpush.msra.mxu0 0.0
  %1931 = vmatpush.msra.mxu0 0.0
  %1932 = vmatpush.msra.mxu0 0.0
  %v1933 = vand.u32 %v24, 4294901760
  %1934 = vmatpush.msra.mxu0 %v1933
  %v1935 = vand.u32 %v23, 4294901760
  %1936 = vmatpush.msra.mxu0 %v1935
  %v1937 = vand.u32 %v22, 4294901760
  %1938 = vmatpush.msra.mxu0 %v1937
  %v1939 = vand.u32 %v21, 4294901760
  %1940 = vmatpush.msra.mxu0 %v1939
  %v1941 = vand.u32 %v1727, 4294901760
  %v1942 = vsub.f32 %v1727, %v1941
  %v1943 = vand.u32 %v1942, 4294901760
  %v1944 = vsub.f32 %v1942, %v1943
  %v1945 = vand.u32 %v1944, 4294901760
  %1946 = vmatmul.f32.gmra.mxu0 %v1945
  %v1947 = vpop.f32.mrf.mxu0
  %v1948 = vadd.f32 0.0, %v1947
  %1949 = vdwg.mxu0
  %1950 = vmatpush.msra.mxu0 0.0
  %1951 = vmatpush.msra.mxu0 0.0
  %1952 = vmatpush.msra.mxu0 0.0
  %1953 = vmatpush.msra.mxu0 0.0
  %1954 = vmatpush.msra.mxu0 0.0
  %1955 = vmatpush.msra.mxu0 0.0
  %1956 = vmatpush.msra.mxu0 0.0
  %1957 = vmatpush.msra.mxu0 0.0
  %1958 = vmatpush.msra.mxu0 0.0
  %1959 = vmatpush.msra.mxu0 0.0
  %1960 = vmatpush.msra.mxu0 0.0
  %1961 = vmatpush.msra.mxu0 0.0
  %v1962 = vand.u32 %v24, 4294901760
  %v1963 = vsub.f32 %v24, %v1962
  %v1964 = vand.u32 %v1963, 4294901760
  %v1965 = vsub.f32 %v1963, %v1964
  %v1966 = vand.u32 %v1965, 4294901760
  %1967 = vmatpush.msra.mxu0 %v1966
  %v1968 = vand.u32 %v23, 4294901760
  %v1969 = vsub.f32 %v23, %v1968
  %v1970 = vand.u32 %v1969, 4294901760
  %v1971 = vsub.f32 %v1969, %v1970
  %v1972 = vand.u32 %v1971, 4294901760
  %1973 = vmatpush.msra.mxu0 %v1972
  %v1974 = vand.u32 %v22, 4294901760
  %v1975 = vsub.f32 %v22, %v1974
  %v1976 = vand.u32 %v1975, 4294901760
  %v1977 = vsub.f32 %v1975, %v1976
  %v1978 = vand.u32 %v1977, 4294901760
  %1979 = vmatpush.msra.mxu0 %v1978
  %v1980 = vand.u32 %v21, 4294901760
  %v1981 = vsub.f32 %v21, %v1980
  %v1982 = vand.u32 %v1981, 4294901760
  %v1983 = vsub.f32 %v1981, %v1982
  %v1984 = vand.u32 %v1983, 4294901760
  %1985 = vmatpush.msra.mxu0 %v1984
  %v1986 = vand.u32 %v1727, 4294901760
  %1987 = vmatmul.f32.gmra.mxu0 %v1986
  %v1988 = vpop.f32.mrf.mxu0
  %v1989 = vadd.f32 %v1948, %v1988
  %1990 = vdwg.mxu0
  %1991 = vmatpush.msra.mxu0 0.0
  %1992 = vmatpush.msra.mxu0 0.0
  %1993 = vmatpush.msra.mxu0 0.0
  %1994 = vmatpush.msra.mxu0 0.0
  %1995 = vmatpush.msra.mxu0 0.0
  %1996 = vmatpush.msra.mxu0 0.0
  %1997 = vmatpush.msra.mxu0 0.0
  %1998 = vmatpush.msra.mxu0 0.0
  %1999 = vmatpush.msra.mxu0 0.0
  %2000 = vmatpush.msra.mxu0 0.0
  %2001 = vmatpush.msra.mxu0 0.0
  %2002 = vmatpush.msra.mxu0 0.0
  %v2003 = vand.u32 %v24, 4294901760
  %v2004 = vsub.f32 %v24, %v2003
  %2005 = vmatpush.msra.mxu0 %v2004
  %v2006 = vand.u32 %v23, 4294901760
  %v2007 = vsub.f32 %v23, %v2006
  %2008 = vmatpush.msra.mxu0 %v2007
  %v2009 = vand.u32 %v22, 4294901760
  %v2010 = vsub.f32 %v22, %v2009
  %2011 = vmatpush.msra.mxu0 %v2010
  %v2012 = vand.u32 %v21, 4294901760
  %v2013 = vsub.f32 %v21, %v2012
  %2014 = vmatpush.msra.mxu0 %v2013
  %v2015 = vand.u32 %v1727, 4294901760
  %v2016 = vsub.f32 %v1727, %v2015
  %2017 = vmatmul.f32.gmra.mxu0 %v2016
  %v2018 = vpop.f32.mrf.mxu0
  %v2019 = vadd.f32 %v1989, %v2018
  %2020 = vdwg.mxu0
  %2021 = vmatpush.msra.mxu0 0.0
  %2022 = vmatpush.msra.mxu0 0.0
  %2023 = vmatpush.msra.mxu0 0.0
  %2024 = vmatpush.msra.mxu0 0.0
  %2025 = vmatpush.msra.mxu0 0.0
  %2026 = vmatpush.msra.mxu0 0.0
  %2027 = vmatpush.msra.mxu0 0.0
  %2028 = vmatpush.msra.mxu0 0.0
  %2029 = vmatpush.msra.mxu0 0.0
  %2030 = vmatpush.msra.mxu0 0.0
  %2031 = vmatpush.msra.mxu0 0.0
  %2032 = vmatpush.msra.mxu0 0.0
  %v2033 = vand.u32 %v24, 4294901760
  %2034 = vmatpush.msra.mxu0 %v2033
  %v2035 = vand.u32 %v23, 4294901760
  %2036 = vmatpush.msra.mxu0 %v2035
  %v2037 = vand.u32 %v22, 4294901760
  %2038 = vmatpush.msra.mxu0 %v2037
  %v2039 = vand.u32 %v21, 4294901760
  %2040 = vmatpush.msra.mxu0 %v2039
  %v2041 = vand.u32 %v1727, 4294901760
  %v2042 = vsub.f32 %v1727, %v2041
  %v2043 = vand.u32 %v2042, 4294901760
  %2044 = vmatmul.f32.gmra.mxu0 %v2043
  %v2045 = vpop.f32.mrf.mxu0
  %v2046 = vadd.f32 %v2019, %v2045
  %2047 = vdwg.mxu0
  %2048 = vmatpush.msra.mxu0 0.0
  %2049 = vmatpush.msra.mxu0 0.0
  %2050 = vmatpush.msra.mxu0 0.0
  %2051 = vmatpush.msra.mxu0 0.0
  %2052 = vmatpush.msra.mxu0 0.0
  %2053 = vmatpush.msra.mxu0 0.0
  %2054 = vmatpush.msra.mxu0 0.0
  %2055 = vmatpush.msra.mxu0 0.0
  %2056 = vmatpush.msra.mxu0 0.0
  %2057 = vmatpush.msra.mxu0 0.0
  %2058 = vmatpush.msra.mxu0 0.0
  %2059 = vmatpush.msra.mxu0 0.0
  %v2060 = vand.u32 %v24, 4294901760
  %v2061 = vsub.f32 %v24, %v2060
  %v2062 = vand.u32 %v2061, 4294901760
  %2063 = vmatpush.msra.mxu0 %v2062
  %v2064 = vand.u32 %v23, 4294901760
  %v2065 = vsub.f32 %v23, %v2064
  %v2066 = vand.u32 %v2065, 4294901760
  %2067 = vmatpush.msra.mxu0 %v2066
  %v2068 = vand.u32 %v22, 4294901760
  %v2069 = vsub.f32 %v22, %v2068
  %v2070 = vand.u32 %v2069, 4294901760
  %2071 = vmatpush.msra.mxu0 %v2070
  %v2072 = vand.u32 %v21, 4294901760
  %v2073 = vsub.f32 %v21, %v2072
  %v2074 = vand.u32 %v2073, 4294901760
  %2075 = vmatpush.msra.mxu0 %v2074
  %v2076 = vand.u32 %v1727, 4294901760
  %2077 = vmatmul.f32.gmra.mxu0 %v2076
  %v2078 = vpop.f32.mrf.mxu0
  %v2079 = vadd.f32 %v2046, %v2078
  %2080 = vdwg.mxu0
  %2081 = vmatpush.msra.mxu0 0.0
  %2082 = vmatpush.msra.mxu0 0.0
  %2083 = vmatpush.msra.mxu0 0.0
  %2084 = vmatpush.msra.mxu0 0.0
  %2085 = vmatpush.msra.mxu0 0.0
  %2086 = vmatpush.msra.mxu0 0.0
  %2087 = vmatpush.msra.mxu0 0.0
  %2088 = vmatpush.msra.mxu0 0.0
  %2089 = vmatpush.msra.mxu0 0.0
  %2090 = vmatpush.msra.mxu0 0.0
  %2091 = vmatpush.msra.mxu0 0.0
  %2092 = vmatpush.msra.mxu0 0.0
  %v2093 = vand.u32 %v24, 4294901760
  %2094 = vmatpush.msra.mxu0 %v2093
  %v2095 = vand.u32 %v23, 4294901760
  %2096 = vmatpush.msra.mxu0 %v2095
  %v2097 = vand.u32 %v22, 4294901760
  %2098 = vmatpush.msra.mxu0 %v2097
  %v2099 = vand.u32 %v21, 4294901760
  %2100 = vmatpush.msra.mxu0 %v2099
  %v2101 = vand.u32 %v1727, 4294901760
  %2102 = vmatmul.f32.gmra.mxu0 %v2101
  %v2103 = vpop.f32.mrf.mxu0
  %v2104 = vadd.f32 %v2079, %v2103
  %2105 = vdwg.mxu0
  %v2106 = vadd.f32 %v1920, %v2104
  %v2107 = vxor.u32 %v2106, 2147483648
  %v2108 = vmul.f32 %v2107, 1.442695
  %v2109 = vpow.pop %v2108
  %v2110 = vadd.f32 %v2109, 1.0
  %v2111 = vrcp.pop %v2110
  %v2112 = vmul.f32 %v2110, %v2111
  %v2113 = vsub.f32 1.0, %v2112
  %v2114 = vmul.f32 %v2111, %v2113
  %v2115 = vadd.f32 %v2111, %v2114
  %vm2116 = vweird.f32 %v2110
  %vm2117 = vweird.f32 %v2111
  %vm2118 = vmor %vm2116, %vm2117
  %v2119 = vsel %vm2118, %v2111, %v2115
  %v2120 = vand.u32 2147483647, %v2110
  %vm2121 = vcmp.eq.f32.partialorder %v2120, 8.507059e+37
  %v2122 = vand.u32 %v2110, 2147483648
  %v2123 = vor.u32 1.1754944e-38, %v2122
  %v2124 = vsel %vm2121, %v2123, %v2119
  %v2125 = vmul.f32 1.0, %v2124
  %v2126 = vtanh.pop %v2106
  %v2127 = vmul.f32 %v2125, %v1717
  %2129 = vrot.lane.b32.xlu0 %v2126, 32
  %v2130 = vpop.permute.xlu0 %2129
  %v2132 = vmul.f32 %v2125, %v2130
  %2134 = vrot.lane.b32.xlu0 %v2132, 32
  %v2135 = vpop.permute.xlu0 %2134
  %v2137 = vadd.f32 %v2127, %v2135
  %v2138 = vtanh.pop %v2137
  %2140 = vrot.lane.b32.xlu0 %v2138, 32
  %v2141 = vpop.permute.xlu0 %2140
  %v2143 = vmul.f32 %v2125, %v2141
  %2145 = vrot.lane.b32.xlu0 %v2143, 64
  %v2146 = vpop.permute.xlu0 %2145
  %v2147 = vsel %vm236, %v2146, 0
  %2149 = vmatpush.msra.mxu0 0.0
  %2150 = vmatpush.msra.mxu0 0.0
  %2151 = vmatpush.msra.mxu0 0.0
  %2152 = vmatpush.msra.mxu0 0.0
  %2153 = vmatpush.msra.mxu0 0.0
  %2154 = vmatpush.msra.mxu0 0.0
  %2155 = vmatpush.msra.mxu0 0.0
  %2156 = vmatpush.msra.mxu0 0.0
  %2157 = vmatpush.msra.mxu0 0.0
  %2158 = vmatpush.msra.mxu0 0.0
  %2159 = vmatpush.msra.mxu0 0.0
  %2160 = vmatpush.msra.mxu0 0.0
  %v2161 = vand.u32 %v29, 4294901760
  %2162 = vmatpush.msra.mxu0 %v2161
  %v2163 = vand.u32 %v28, 4294901760
  %2164 = vmatpush.msra.mxu0 %v2163
  %v2165 = vand.u32 %v27, 4294901760
  %2166 = vmatpush.msra.mxu0 %v2165
  %v2167 = vand.u32 %v26, 4294901760
  %2168 = vmatpush.msra.mxu0 %v2167
  %v2169 = vand.u32 %v2147, 4294901760
  %v2170 = vsub.f32 %v2147, %v2169
  %v2171 = vand.u32 %v2170, 4294901760
  %v2172 = vsub.f32 %v2170, %v2171
  %v2173 = vand.u32 %v2172, 4294901760
  %2174 = vmatmul.f32.gmra.mxu0 %v2173
  %v2175 = vpop.f32.mrf.mxu0
  %v2176 = vadd.f32 %v467, %v2175
  %2177 = vdwg.mxu0
  %2178 = vmatpush.msra.mxu0 0.0
  %2179 = vmatpush.msra.mxu0 0.0
  %2180 = vmatpush.msra.mxu0 0.0
  %2181 = vmatpush.msra.mxu0 0.0
  %2182 = vmatpush.msra.mxu0 0.0
  %2183 = vmatpush.msra.mxu0 0.0
  %2184 = vmatpush.msra.mxu0 0.0
  %2185 = vmatpush.msra.mxu0 0.0
  %2186 = vmatpush.msra.mxu0 0.0
  %2187 = vmatpush.msra.mxu0 0.0
  %2188 = vmatpush.msra.mxu0 0.0
  %2189 = vmatpush.msra.mxu0 0.0
  %v2190 = vand.u32 %v29, 4294901760
  %v2191 = vsub.f32 %v29, %v2190
  %v2192 = vand.u32 %v2191, 4294901760
  %v2193 = vsub.f32 %v2191, %v2192
  %v2194 = vand.u32 %v2193, 4294901760
  %2195 = vmatpush.msra.mxu0 %v2194
  %v2196 = vand.u32 %v28, 4294901760
  %v2197 = vsub.f32 %v28, %v2196
  %v2198 = vand.u32 %v2197, 4294901760
  %v2199 = vsub.f32 %v2197, %v2198
  %v2200 = vand.u32 %v2199, 4294901760
  %2201 = vmatpush.msra.mxu0 %v2200
  %v2202 = vand.u32 %v27, 4294901760
  %v2203 = vsub.f32 %v27, %v2202
  %v2204 = vand.u32 %v2203, 4294901760
  %v2205 = vsub.f32 %v2203, %v2204
  %v2206 = vand.u32 %v2205, 4294901760
  %2207 = vmatpush.msra.mxu0 %v2206
  %v2208 = vand.u32 %v26, 4294901760
  %v2209 = vsub.f32 %v26, %v2208
  %v2210 = vand.u32 %v2209, 4294901760
  %v2211 = vsub.f32 %v2209, %v2210
  %v2212 = vand.u32 %v2211, 4294901760
  %2213 = vmatpush.msra.mxu0 %v2212
  %v2214 = vand.u32 %v2147, 4294901760
  %2215 = vmatmul.f32.gmra.mxu0 %v2214
  %v2216 = vpop.f32.mrf.mxu0
  %v2217 = vadd.f32 %v2176, %v2216
  %2218 = vdwg.mxu0
  %2219 = vmatpush.msra.mxu0 0.0
  %2220 = vmatpush.msra.mxu0 0.0
  %2221 = vmatpush.msra.mxu0 0.0
  %2222 = vmatpush.msra.mxu0 0.0
  %2223 = vmatpush.msra.mxu0 0.0
  %2224 = vmatpush.msra.mxu0 0.0
  %2225 = vmatpush.msra.mxu0 0.0
  %2226 = vmatpush.msra.mxu0 0.0
  %2227 = vmatpush.msra.mxu0 0.0
  %2228 = vmatpush.msra.mxu0 0.0
  %2229 = vmatpush.msra.mxu0 0.0
  %2230 = vmatpush.msra.mxu0 0.0
  %v2231 = vand.u32 %v29, 4294901760
  %v2232 = vsub.f32 %v29, %v2231
  %2233 = vmatpush.msra.mxu0 %v2232
  %v2234 = vand.u32 %v28, 4294901760
  %v2235 = vsub.f32 %v28, %v2234
  %2236 = vmatpush.msra.mxu0 %v2235
  %v2237 = vand.u32 %v27, 4294901760
  %v2238 = vsub.f32 %v27, %v2237
  %2239 = vmatpush.msra.mxu0 %v2238
  %v2240 = vand.u32 %v26, 4294901760
  %v2241 = vsub.f32 %v26, %v2240
  %2242 = vmatpush.msra.mxu0 %v2241
  %v2243 = vand.u32 %v2147, 4294901760
  %v2244 = vsub.f32 %v2147, %v2243
  %2245 = vmatmul.f32.gmra.mxu0 %v2244
  %v2246 = vpop.f32.mrf.mxu0
  %v2247 = vadd.f32 %v2217, %v2246
  %2248 = vdwg.mxu0
  %2249 = vmatpush.msra.mxu0 0.0
  %2250 = vmatpush.msra.mxu0 0.0
  %2251 = vmatpush.msra.mxu0 0.0
  %2252 = vmatpush.msra.mxu0 0.0
  %2253 = vmatpush.msra.mxu0 0.0
  %2254 = vmatpush.msra.mxu0 0.0
  %2255 = vmatpush.msra.mxu0 0.0
  %2256 = vmatpush.msra.mxu0 0.0
  %2257 = vmatpush.msra.mxu0 0.0
  %2258 = vmatpush.msra.mxu0 0.0
  %2259 = vmatpush.msra.mxu0 0.0
  %2260 = vmatpush.msra.mxu0 0.0
  %v2261 = vand.u32 %v29, 4294901760
  %2262 = vmatpush.msra.mxu0 %v2261
  %v2263 = vand.u32 %v28, 4294901760
  %2264 = vmatpush.msra.mxu0 %v2263
  %v2265 = vand.u32 %v27, 4294901760
  %2266 = vmatpush.msra.mxu0 %v2265
  %v2267 = vand.u32 %v26, 4294901760
  %2268 = vmatpush.msra.mxu0 %v2267
  %v2269 = vand.u32 %v2147, 4294901760
  %v2270 = vsub.f32 %v2147, %v2269
  %v2271 = vand.u32 %v2270, 4294901760
  %2272 = vmatmul.f32.gmra.mxu0 %v2271
  %v2273 = vpop.f32.mrf.mxu0
  %v2274 = vadd.f32 %v2247, %v2273
  %2275 = vdwg.mxu0
  %2276 = vmatpush.msra.mxu0 0.0
  %2277 = vmatpush.msra.mxu0 0.0
  %2278 = vmatpush.msra.mxu0 0.0
  %2279 = vmatpush.msra.mxu0 0.0
  %2280 = vmatpush.msra.mxu0 0.0
  %2281 = vmatpush.msra.mxu0 0.0
  %2282 = vmatpush.msra.mxu0 0.0
  %2283 = vmatpush.msra.mxu0 0.0
  %2284 = vmatpush.msra.mxu0 0.0
  %2285 = vmatpush.msra.mxu0 0.0
  %2286 = vmatpush.msra.mxu0 0.0
  %2287 = vmatpush.msra.mxu0 0.0
  %v2288 = vand.u32 %v29, 4294901760
  %v2289 = vsub.f32 %v29, %v2288
  %v2290 = vand.u32 %v2289, 4294901760
  %2291 = vmatpush.msra.mxu0 %v2290
  %v2292 = vand.u32 %v28, 4294901760
  %v2293 = vsub.f32 %v28, %v2292
  %v2294 = vand.u32 %v2293, 4294901760
  %2295 = vmatpush.msra.mxu0 %v2294
  %v2296 = vand.u32 %v27, 4294901760
  %v2297 = vsub.f32 %v27, %v2296
  %v2298 = vand.u32 %v2297, 4294901760
  %2299 = vmatpush.msra.mxu0 %v2298
  %v2300 = vand.u32 %v26, 4294901760
  %v2301 = vsub.f32 %v26, %v2300
  %v2302 = vand.u32 %v2301, 4294901760
  %2303 = vmatpush.msra.mxu0 %v2302
  %v2304 = vand.u32 %v2147, 4294901760
  %2305 = vmatmul.f32.gmra.mxu0 %v2304
  %v2306 = vpop.f32.mrf.mxu0
  %v2307 = vadd.f32 %v2274, %v2306
  %2308 = vdwg.mxu0
  %2309 = vmatpush.msra.mxu0 0.0
  %2310 = vmatpush.msra.mxu0 0.0
  %2311 = vmatpush.msra.mxu0 0.0
  %2312 = vmatpush.msra.mxu0 0.0
  %2313 = vmatpush.msra.mxu0 0.0
  %2314 = vmatpush.msra.mxu0 0.0
  %2315 = vmatpush.msra.mxu0 0.0
  %2316 = vmatpush.msra.mxu0 0.0
  %2317 = vmatpush.msra.mxu0 0.0
  %2318 = vmatpush.msra.mxu0 0.0
  %2319 = vmatpush.msra.mxu0 0.0
  %2320 = vmatpush.msra.mxu0 0.0
  %v2321 = vand.u32 %v29, 4294901760
  %2322 = vmatpush.msra.mxu0 %v2321
  %v2323 = vand.u32 %v28, 4294901760
  %2324 = vmatpush.msra.mxu0 %v2323
  %v2325 = vand.u32 %v27, 4294901760
  %2326 = vmatpush.msra.mxu0 %v2325
  %v2327 = vand.u32 %v26, 4294901760
  %2328 = vmatpush.msra.mxu0 %v2327
  %v2329 = vand.u32 %v2147, 4294901760
  %2330 = vmatmul.f32.gmra.mxu0 %v2329
  %v2331 = vpop.f32.mrf.mxu0
  %v2332 = vadd.f32 %v2307, %v2331
  %2333 = vdwg.mxu0
  %2335 = vrot.lane.b32.xlu0 %v2332, 64
  %v2336 = vpop.permute.xlu0 %2335
  %vm2338 = vcmask 648704
  %2339 = vst.msk [vmem:[%s4] sm:$0x3] %vm2338, %v2336
  %v2340 = vld [vmem:[#allocation2 + $0xa] sm:$0x3]
  %2341 = vmatpush.msra.mxu0 0.0
  %2342 = vmatpush.msra.mxu0 0.0
  %2343 = vmatpush.msra.mxu0 0.0
  %2344 = vmatpush.msra.mxu0 0.0
  %2345 = vmatpush.msra.mxu0 0.0
  %2346 = vmatpush.msra.mxu0 0.0
  %2347 = vmatpush.msra.mxu0 0.0
  %2348 = vmatpush.msra.mxu0 0.0
  %2349 = vmatpush.msra.mxu0 0.0
  %2350 = vmatpush.msra.mxu0 0.0
  %2351 = vmatpush.msra.mxu0 0.0
  %2352 = vmatpush.msra.mxu0 0.0
  %v2353 = vand.u32 %v24, 4294901760
  %2354 = vmatpush.msra.mxu0 %v2353
  %v2355 = vand.u32 %v23, 4294901760
  %2356 = vmatpush.msra.mxu0 %v2355
  %v2357 = vand.u32 %v22, 4294901760
  %2358 = vmatpush.msra.mxu0 %v2357
  %v2359 = vand.u32 %v21, 4294901760
  %2360 = vmatpush.msra.mxu0 %v2359
  %v2361 = vand.u32 %v2147, 4294901760
  %v2362 = vsub.f32 %v2147, %v2361
  %v2363 = vand.u32 %v2362, 4294901760
  %v2364 = vsub.f32 %v2362, %v2363
  %v2365 = vand.u32 %v2364, 4294901760
  %2366 = vmatmul.f32.gmra.mxu0 %v2365
  %v2367 = vpop.f32.mrf.mxu0
  %v2368 = vadd.f32 0.0, %v2367
  %2369 = vdwg.mxu0
  %2370 = vmatpush.msra.mxu0 0.0
  %2371 = vmatpush.msra.mxu0 0.0
  %2372 = vmatpush.msra.mxu0 0.0
  %2373 = vmatpush.msra.mxu0 0.0
  %2374 = vmatpush.msra.mxu0 0.0
  %2375 = vmatpush.msra.mxu0 0.0
  %2376 = vmatpush.msra.mxu0 0.0
  %2377 = vmatpush.msra.mxu0 0.0
  %2378 = vmatpush.msra.mxu0 0.0
  %2379 = vmatpush.msra.mxu0 0.0
  %2380 = vmatpush.msra.mxu0 0.0
  %2381 = vmatpush.msra.mxu0 0.0
  %v2382 = vand.u32 %v24, 4294901760
  %v2383 = vsub.f32 %v24, %v2382
  %v2384 = vand.u32 %v2383, 4294901760
  %v2385 = vsub.f32 %v2383, %v2384
  %v2386 = vand.u32 %v2385, 4294901760
  %2387 = vmatpush.msra.mxu0 %v2386
  %v2388 = vand.u32 %v23, 4294901760
  %v2389 = vsub.f32 %v23, %v2388
  %v2390 = vand.u32 %v2389, 4294901760
  %v2391 = vsub.f32 %v2389, %v2390
  %v2392 = vand.u32 %v2391, 4294901760
  %2393 = vmatpush.msra.mxu0 %v2392
  %v2394 = vand.u32 %v22, 4294901760
  %v2395 = vsub.f32 %v22, %v2394
  %v2396 = vand.u32 %v2395, 4294901760
  %v2397 = vsub.f32 %v2395, %v2396
  %v2398 = vand.u32 %v2397, 4294901760
  %2399 = vmatpush.msra.mxu0 %v2398
  %v2400 = vand.u32 %v21, 4294901760
  %v2401 = vsub.f32 %v21, %v2400
  %v2402 = vand.u32 %v2401, 4294901760
  %v2403 = vsub.f32 %v2401, %v2402
  %v2404 = vand.u32 %v2403, 4294901760
  %2405 = vmatpush.msra.mxu0 %v2404
  %v2406 = vand.u32 %v2147, 4294901760
  %2407 = vmatmul.f32.gmra.mxu0 %v2406
  %v2408 = vpop.f32.mrf.mxu0
  %v2409 = vadd.f32 %v2368, %v2408
  %2410 = vdwg.mxu0
  %2411 = vmatpush.msra.mxu0 0.0
  %2412 = vmatpush.msra.mxu0 0.0
  %2413 = vmatpush.msra.mxu0 0.0
  %2414 = vmatpush.msra.mxu0 0.0
  %2415 = vmatpush.msra.mxu0 0.0
  %2416 = vmatpush.msra.mxu0 0.0
  %2417 = vmatpush.msra.mxu0 0.0
  %2418 = vmatpush.msra.mxu0 0.0
  %2419 = vmatpush.msra.mxu0 0.0
  %2420 = vmatpush.msra.mxu0 0.0
  %2421 = vmatpush.msra.mxu0 0.0
  %2422 = vmatpush.msra.mxu0 0.0
  %v2423 = vand.u32 %v24, 4294901760
  %v2424 = vsub.f32 %v24, %v2423
  %2425 = vmatpush.msra.mxu0 %v2424
  %v2426 = vand.u32 %v23, 4294901760
  %v2427 = vsub.f32 %v23, %v2426
  %2428 = vmatpush.msra.mxu0 %v2427
  %v2429 = vand.u32 %v22, 4294901760
  %v2430 = vsub.f32 %v22, %v2429
  %2431 = vmatpush.msra.mxu0 %v2430
  %v2432 = vand.u32 %v21, 4294901760
  %v2433 = vsub.f32 %v21, %v2432
  %2434 = vmatpush.msra.mxu0 %v2433
  %v2435 = vand.u32 %v2147, 4294901760
  %v2436 = vsub.f32 %v2147, %v2435
  %2437 = vmatmul.f32.gmra.mxu0 %v2436
  %v2438 = vpop.f32.mrf.mxu0
  %v2439 = vadd.f32 %v2409, %v2438
  %2440 = vdwg.mxu0
  %2441 = vmatpush.msra.mxu0 0.0
  %2442 = vmatpush.msra.mxu0 0.0
  %2443 = vmatpush.msra.mxu0 0.0
  %2444 = vmatpush.msra.mxu0 0.0
  %2445 = vmatpush.msra.mxu0 0.0
  %2446 = vmatpush.msra.mxu0 0.0
  %2447 = vmatpush.msra.mxu0 0.0
  %2448 = vmatpush.msra.mxu0 0.0
  %2449 = vmatpush.msra.mxu0 0.0
  %2450 = vmatpush.msra.mxu0 0.0
  %2451 = vmatpush.msra.mxu0 0.0
  %2452 = vmatpush.msra.mxu0 0.0
  %v2453 = vand.u32 %v24, 4294901760
  %2454 = vmatpush.msra.mxu0 %v2453
  %v2455 = vand.u32 %v23, 4294901760
  %2456 = vmatpush.msra.mxu0 %v2455
  %v2457 = vand.u32 %v22, 4294901760
  %2458 = vmatpush.msra.mxu0 %v2457
  %v2459 = vand.u32 %v21, 4294901760
  %2460 = vmatpush.msra.mxu0 %v2459
  %v2461 = vand.u32 %v2147, 4294901760
  %v2462 = vsub.f32 %v2147, %v2461
  %v2463 = vand.u32 %v2462, 4294901760
  %2464 = vmatmul.f32.gmra.mxu0 %v2463
  %v2465 = vpop.f32.mrf.mxu0
  %v2466 = vadd.f32 %v2439, %v2465
  %2467 = vdwg.mxu0
  %2468 = vmatpush.msra.mxu0 0.0
  %2469 = vmatpush.msra.mxu0 0.0
  %2470 = vmatpush.msra.mxu0 0.0
  %2471 = vmatpush.msra.mxu0 0.0
  %2472 = vmatpush.msra.mxu0 0.0
  %2473 = vmatpush.msra.mxu0 0.0
  %2474 = vmatpush.msra.mxu0 0.0
  %2475 = vmatpush.msra.mxu0 0.0
  %2476 = vmatpush.msra.mxu0 0.0
  %2477 = vmatpush.msra.mxu0 0.0
  %2478 = vmatpush.msra.mxu0 0.0
  %2479 = vmatpush.msra.mxu0 0.0
  %v2480 = vand.u32 %v24, 4294901760
  %v2481 = vsub.f32 %v24, %v2480
  %v2482 = vand.u32 %v2481, 4294901760
  %2483 = vmatpush.msra.mxu0 %v2482
  %v2484 = vand.u32 %v23, 4294901760
  %v2485 = vsub.f32 %v23, %v2484
  %v2486 = vand.u32 %v2485, 4294901760
  %2487 = vmatpush.msra.mxu0 %v2486
  %v2488 = vand.u32 %v22, 4294901760
  %v2489 = vsub.f32 %v22, %v2488
  %v2490 = vand.u32 %v2489, 4294901760
  %2491 = vmatpush.msra.mxu0 %v2490
  %v2492 = vand.u32 %v21, 4294901760
  %v2493 = vsub.f32 %v21, %v2492
  %v2494 = vand.u32 %v2493, 4294901760
  %2495 = vmatpush.msra.mxu0 %v2494
  %v2496 = vand.u32 %v2147, 4294901760
  %2497 = vmatmul.f32.gmra.mxu0 %v2496
  %v2498 = vpop.f32.mrf.mxu0
  %v2499 = vadd.f32 %v2466, %v2498
  %2500 = vdwg.mxu0
  %2501 = vmatpush.msra.mxu0 0.0
  %2502 = vmatpush.msra.mxu0 0.0
  %2503 = vmatpush.msra.mxu0 0.0
  %2504 = vmatpush.msra.mxu0 0.0
  %2505 = vmatpush.msra.mxu0 0.0
  %2506 = vmatpush.msra.mxu0 0.0
  %2507 = vmatpush.msra.mxu0 0.0
  %2508 = vmatpush.msra.mxu0 0.0
  %2509 = vmatpush.msra.mxu0 0.0
  %2510 = vmatpush.msra.mxu0 0.0
  %2511 = vmatpush.msra.mxu0 0.0
  %2512 = vmatpush.msra.mxu0 0.0
  %v2513 = vand.u32 %v24, 4294901760
  %2514 = vmatpush.msra.mxu0 %v2513
  %v2515 = vand.u32 %v23, 4294901760
  %2516 = vmatpush.msra.mxu0 %v2515
  %v2517 = vand.u32 %v22, 4294901760
  %2518 = vmatpush.msra.mxu0 %v2517
  %v2519 = vand.u32 %v21, 4294901760
  %2520 = vmatpush.msra.mxu0 %v2519
  %v2521 = vand.u32 %v2147, 4294901760
  %2522 = vmatmul.f32.gmra.mxu0 %v2521
  %v2523 = vpop.f32.mrf.mxu0
  %v2524 = vadd.f32 %v2499, %v2523
  %2525 = vdwg.mxu0
  %v2526 = vadd.f32 %v2340, %v2524
  %v2527 = vxor.u32 %v2526, 2147483648
  %v2528 = vmul.f32 %v2527, 1.442695
  %v2529 = vpow.pop %v2528
  %v2530 = vadd.f32 %v2529, 1.0
  %v2531 = vrcp.pop %v2530
  %v2532 = vmul.f32 %v2530, %v2531
  %v2533 = vsub.f32 1.0, %v2532
  %v2534 = vmul.f32 %v2531, %v2533
  %v2535 = vadd.f32 %v2531, %v2534
  %vm2536 = vweird.f32 %v2530
  %vm2537 = vweird.f32 %v2531
  %vm2538 = vmor %vm2536, %vm2537
  %v2539 = vsel %vm2538, %v2531, %v2535
  %v2540 = vand.u32 2147483647, %v2530
  %vm2541 = vcmp.eq.f32.partialorder %v2540, 8.507059e+37
  %v2542 = vand.u32 %v2530, 2147483648
  %v2543 = vor.u32 1.1754944e-38, %v2542
  %v2544 = vsel %vm2541, %v2543, %v2539
  %v2545 = vmul.f32 1.0, %v2544
  %v2546 = vtanh.pop %v2526
  %v2547 = vmul.f32 %v2545, %v2137
  %2549 = vrot.lane.b32.xlu0 %v2546, 32
  %v2550 = vpop.permute.xlu0 %2549
  %v2552 = vmul.f32 %v2545, %v2550
  %2554 = vrot.lane.b32.xlu0 %v2552, 32
  %v2555 = vpop.permute.xlu0 %2554
  %v2557 = vadd.f32 %v2547, %v2555
  %v2558 = vtanh.pop %v2557
  %2560 = vrot.lane.b32.xlu0 %v2558, 32
  %v2561 = vpop.permute.xlu0 %2560
  %v2563 = vmul.f32 %v2545, %v2561
  %2565 = vrot.lane.b32.xlu0 %v2563, 64
  %v2566 = vpop.permute.xlu0 %2565
  %v2567 = vsel %vm236, %v2566, 0
  %2569 = vmatpush.msra.mxu0 0.0
  %2570 = vmatpush.msra.mxu0 0.0
  %2571 = vmatpush.msra.mxu0 0.0
  %2572 = vmatpush.msra.mxu0 0.0
  %2573 = vmatpush.msra.mxu0 0.0
  %2574 = vmatpush.msra.mxu0 0.0
  %2575 = vmatpush.msra.mxu0 0.0
  %2576 = vmatpush.msra.mxu0 0.0
  %2577 = vmatpush.msra.mxu0 0.0
  %2578 = vmatpush.msra.mxu0 0.0
  %2579 = vmatpush.msra.mxu0 0.0
  %2580 = vmatpush.msra.mxu0 0.0
  %v2581 = vand.u32 %v29, 4294901760
  %2582 = vmatpush.msra.mxu0 %v2581
  %v2583 = vand.u32 %v28, 4294901760
  %2584 = vmatpush.msra.mxu0 %v2583
  %v2585 = vand.u32 %v27, 4294901760
  %2586 = vmatpush.msra.mxu0 %v2585
  %v2587 = vand.u32 %v26, 4294901760
  %2588 = vmatpush.msra.mxu0 %v2587
  %v2589 = vand.u32 %v2567, 4294901760
  %v2590 = vsub.f32 %v2567, %v2589
  %v2591 = vand.u32 %v2590, 4294901760
  %v2592 = vsub.f32 %v2590, %v2591
  %v2593 = vand.u32 %v2592, 4294901760
  %2594 = vmatmul.f32.gmra.mxu0 %v2593
  %v2595 = vpop.f32.mrf.mxu0
  %v2596 = vadd.f32 %v467, %v2595
  %2597 = vdwg.mxu0
  %2598 = vmatpush.msra.mxu0 0.0
  %2599 = vmatpush.msra.mxu0 0.0
  %2600 = vmatpush.msra.mxu0 0.0
  %2601 = vmatpush.msra.mxu0 0.0
  %2602 = vmatpush.msra.mxu0 0.0
  %2603 = vmatpush.msra.mxu0 0.0
  %2604 = vmatpush.msra.mxu0 0.0
  %2605 = vmatpush.msra.mxu0 0.0
  %2606 = vmatpush.msra.mxu0 0.0
  %2607 = vmatpush.msra.mxu0 0.0
  %2608 = vmatpush.msra.mxu0 0.0
  %2609 = vmatpush.msra.mxu0 0.0
  %v2610 = vand.u32 %v29, 4294901760
  %v2611 = vsub.f32 %v29, %v2610
  %v2612 = vand.u32 %v2611, 4294901760
  %v2613 = vsub.f32 %v2611, %v2612
  %v2614 = vand.u32 %v2613, 4294901760
  %2615 = vmatpush.msra.mxu0 %v2614
  %v2616 = vand.u32 %v28, 4294901760
  %v2617 = vsub.f32 %v28, %v2616
  %v2618 = vand.u32 %v2617, 4294901760
  %v2619 = vsub.f32 %v2617, %v2618
  %v2620 = vand.u32 %v2619, 4294901760
  %2621 = vmatpush.msra.mxu0 %v2620
  %v2622 = vand.u32 %v27, 4294901760
  %v2623 = vsub.f32 %v27, %v2622
  %v2624 = vand.u32 %v2623, 4294901760
  %v2625 = vsub.f32 %v2623, %v2624
  %v2626 = vand.u32 %v2625, 4294901760
  %2627 = vmatpush.msra.mxu0 %v2626
  %v2628 = vand.u32 %v26, 4294901760
  %v2629 = vsub.f32 %v26, %v2628
  %v2630 = vand.u32 %v2629, 4294901760
  %v2631 = vsub.f32 %v2629, %v2630
  %v2632 = vand.u32 %v2631, 4294901760
  %2633 = vmatpush.msra.mxu0 %v2632
  %v2634 = vand.u32 %v2567, 4294901760
  %2635 = vmatmul.f32.gmra.mxu0 %v2634
  %v2636 = vpop.f32.mrf.mxu0
  %v2637 = vadd.f32 %v2596, %v2636
  %2638 = vdwg.mxu0
  %2639 = vmatpush.msra.mxu0 0.0
  %2640 = vmatpush.msra.mxu0 0.0
  %2641 = vmatpush.msra.mxu0 0.0
  %2642 = vmatpush.msra.mxu0 0.0
  %2643 = vmatpush.msra.mxu0 0.0
  %2644 = vmatpush.msra.mxu0 0.0
  %2645 = vmatpush.msra.mxu0 0.0
  %2646 = vmatpush.msra.mxu0 0.0
  %2647 = vmatpush.msra.mxu0 0.0
  %2648 = vmatpush.msra.mxu0 0.0
  %2649 = vmatpush.msra.mxu0 0.0
  %2650 = vmatpush.msra.mxu0 0.0
  %v2651 = vand.u32 %v29, 4294901760
  %v2652 = vsub.f32 %v29, %v2651
  %2653 = vmatpush.msra.mxu0 %v2652
  %v2654 = vand.u32 %v28, 4294901760
  %v2655 = vsub.f32 %v28, %v2654
  %2656 = vmatpush.msra.mxu0 %v2655
  %v2657 = vand.u32 %v27, 4294901760
  %v2658 = vsub.f32 %v27, %v2657
  %2659 = vmatpush.msra.mxu0 %v2658
  %v2660 = vand.u32 %v26, 4294901760
  %v2661 = vsub.f32 %v26, %v2660
  %2662 = vmatpush.msra.mxu0 %v2661
  %v2663 = vand.u32 %v2567, 4294901760
  %v2664 = vsub.f32 %v2567, %v2663
  %2665 = vmatmul.f32.gmra.mxu0 %v2664
  %v2666 = vpop.f32.mrf.mxu0
  %v2667 = vadd.f32 %v2637, %v2666
  %2668 = vdwg.mxu0
  %2669 = vmatpush.msra.mxu0 0.0
  %2670 = vmatpush.msra.mxu0 0.0
  %2671 = vmatpush.msra.mxu0 0.0
  %2672 = vmatpush.msra.mxu0 0.0
  %2673 = vmatpush.msra.mxu0 0.0
  %2674 = vmatpush.msra.mxu0 0.0
  %2675 = vmatpush.msra.mxu0 0.0
  %2676 = vmatpush.msra.mxu0 0.0
  %2677 = vmatpush.msra.mxu0 0.0
  %2678 = vmatpush.msra.mxu0 0.0
  %2679 = vmatpush.msra.mxu0 0.0
  %2680 = vmatpush.msra.mxu0 0.0
  %v2681 = vand.u32 %v29, 4294901760
  %2682 = vmatpush.msra.mxu0 %v2681
  %v2683 = vand.u32 %v28, 4294901760
  %2684 = vmatpush.msra.mxu0 %v2683
  %v2685 = vand.u32 %v27, 4294901760
  %2686 = vmatpush.msra.mxu0 %v2685
  %v2687 = vand.u32 %v26, 4294901760
  %2688 = vmatpush.msra.mxu0 %v2687
  %v2689 = vand.u32 %v2567, 4294901760
  %v2690 = vsub.f32 %v2567, %v2689
  %v2691 = vand.u32 %v2690, 4294901760
  %2692 = vmatmul.f32.gmra.mxu0 %v2691
  %v2693 = vpop.f32.mrf.mxu0
  %v2694 = vadd.f32 %v2667, %v2693
  %2695 = vdwg.mxu0
  %2696 = vmatpush.msra.mxu0 0.0
  %2697 = vmatpush.msra.mxu0 0.0
  %2698 = vmatpush.msra.mxu0 0.0
  %2699 = vmatpush.msra.mxu0 0.0
  %2700 = vmatpush.msra.mxu0 0.0
  %2701 = vmatpush.msra.mxu0 0.0
  %2702 = vmatpush.msra.mxu0 0.0
  %2703 = vmatpush.msra.mxu0 0.0
  %2704 = vmatpush.msra.mxu0 0.0
  %2705 = vmatpush.msra.mxu0 0.0
  %2706 = vmatpush.msra.mxu0 0.0
  %2707 = vmatpush.msra.mxu0 0.0
  %v2708 = vand.u32 %v29, 4294901760
  %v2709 = vsub.f32 %v29, %v2708
  %v2710 = vand.u32 %v2709, 4294901760
  %2711 = vmatpush.msra.mxu0 %v2710
  %v2712 = vand.u32 %v28, 4294901760
  %v2713 = vsub.f32 %v28, %v2712
  %v2714 = vand.u32 %v2713, 4294901760
  %2715 = vmatpush.msra.mxu0 %v2714
  %v2716 = vand.u32 %v27, 4294901760
  %v2717 = vsub.f32 %v27, %v2716
  %v2718 = vand.u32 %v2717, 4294901760
  %2719 = vmatpush.msra.mxu0 %v2718
  %v2720 = vand.u32 %v26, 4294901760
  %v2721 = vsub.f32 %v26, %v2720
  %v2722 = vand.u32 %v2721, 4294901760
  %2723 = vmatpush.msra.mxu0 %v2722
  %v2724 = vand.u32 %v2567, 4294901760
  %2725 = vmatmul.f32.gmra.mxu0 %v2724
  %v2726 = vpop.f32.mrf.mxu0
  %v2727 = vadd.f32 %v2694, %v2726
  %2728 = vdwg.mxu0
  %2729 = vmatpush.msra.mxu0 0.0
  %2730 = vmatpush.msra.mxu0 0.0
  %2731 = vmatpush.msra.mxu0 0.0
  %2732 = vmatpush.msra.mxu0 0.0
  %2733 = vmatpush.msra.mxu0 0.0
  %2734 = vmatpush.msra.mxu0 0.0
  %2735 = vmatpush.msra.mxu0 0.0
  %2736 = vmatpush.msra.mxu0 0.0
  %2737 = vmatpush.msra.mxu0 0.0
  %2738 = vmatpush.msra.mxu0 0.0
  %2739 = vmatpush.msra.mxu0 0.0
  %2740 = vmatpush.msra.mxu0 0.0
  %v2741 = vand.u32 %v29, 4294901760
  %2742 = vmatpush.msra.mxu0 %v2741
  %v2743 = vand.u32 %v28, 4294901760
  %2744 = vmatpush.msra.mxu0 %v2743
  %v2745 = vand.u32 %v27, 4294901760
  %2746 = vmatpush.msra.mxu0 %v2745
  %v2747 = vand.u32 %v26, 4294901760
  %2748 = vmatpush.msra.mxu0 %v2747
  %v2749 = vand.u32 %v2567, 4294901760
  %2750 = vmatmul.f32.gmra.mxu0 %v2749
  %v2751 = vpop.f32.mrf.mxu0
  %v2752 = vadd.f32 %v2727, %v2751
  %2753 = vdwg.mxu0
  %2755 = vrot.lane.b32.xlu0 %v2752, 80
  %v2756 = vpop.permute.xlu0 %2755
  %vm2758 = vcmask 779904
  %2759 = vst.msk [vmem:[%s4] sm:$0x3] %vm2758, %v2756
  %v2760 = vld [vmem:[#allocation2 + $0xc] sm:$0x3]
  %2761 = vmatpush.msra.mxu0 0.0
  %2762 = vmatpush.msra.mxu0 0.0
  %2763 = vmatpush.msra.mxu0 0.0
  %2764 = vmatpush.msra.mxu0 0.0
  %2765 = vmatpush.msra.mxu0 0.0
  %2766 = vmatpush.msra.mxu0 0.0
  %2767 = vmatpush.msra.mxu0 0.0
  %2768 = vmatpush.msra.mxu0 0.0
  %2769 = vmatpush.msra.mxu0 0.0
  %2770 = vmatpush.msra.mxu0 0.0
  %2771 = vmatpush.msra.mxu0 0.0
  %2772 = vmatpush.msra.mxu0 0.0
  %v2773 = vand.u32 %v24, 4294901760
  %2774 = vmatpush.msra.mxu0 %v2773
  %v2775 = vand.u32 %v23, 4294901760
  %2776 = vmatpush.msra.mxu0 %v2775
  %v2777 = vand.u32 %v22, 4294901760
  %2778 = vmatpush.msra.mxu0 %v2777
  %v2779 = vand.u32 %v21, 4294901760
  %2780 = vmatpush.msra.mxu0 %v2779
  %v2781 = vand.u32 %v2567, 4294901760
  %v2782 = vsub.f32 %v2567, %v2781
  %v2783 = vand.u32 %v2782, 4294901760
  %v2784 = vsub.f32 %v2782, %v2783
  %v2785 = vand.u32 %v2784, 4294901760
  %2786 = vmatmul.f32.gmra.mxu0 %v2785
  %v2787 = vpop.f32.mrf.mxu0
  %v2788 = vadd.f32 0.0, %v2787
  %2789 = vdwg.mxu0
  %2790 = vmatpush.msra.mxu0 0.0
  %2791 = vmatpush.msra.mxu0 0.0
  %2792 = vmatpush.msra.mxu0 0.0
  %2793 = vmatpush.msra.mxu0 0.0
  %2794 = vmatpush.msra.mxu0 0.0
  %2795 = vmatpush.msra.mxu0 0.0
  %2796 = vmatpush.msra.mxu0 0.0
  %2797 = vmatpush.msra.mxu0 0.0
  %2798 = vmatpush.msra.mxu0 0.0
  %2799 = vmatpush.msra.mxu0 0.0
  %2800 = vmatpush.msra.mxu0 0.0
  %2801 = vmatpush.msra.mxu0 0.0
  %v2802 = vand.u32 %v24, 4294901760
  %v2803 = vsub.f32 %v24, %v2802
  %v2804 = vand.u32 %v2803, 4294901760
  %v2805 = vsub.f32 %v2803, %v2804
  %v2806 = vand.u32 %v2805, 4294901760
  %2807 = vmatpush.msra.mxu0 %v2806
  %v2808 = vand.u32 %v23, 4294901760
  %v2809 = vsub.f32 %v23, %v2808
  %v2810 = vand.u32 %v2809, 4294901760
  %v2811 = vsub.f32 %v2809, %v2810
  %v2812 = vand.u32 %v2811, 4294901760
  %2813 = vmatpush.msra.mxu0 %v2812
  %v2814 = vand.u32 %v22, 4294901760
  %v2815 = vsub.f32 %v22, %v2814
  %v2816 = vand.u32 %v2815, 4294901760
  %v2817 = vsub.f32 %v2815, %v2816
  %v2818 = vand.u32 %v2817, 4294901760
  %2819 = vmatpush.msra.mxu0 %v2818
  %v2820 = vand.u32 %v21, 4294901760
  %v2821 = vsub.f32 %v21, %v2820
  %v2822 = vand.u32 %v2821, 4294901760
  %v2823 = vsub.f32 %v2821, %v2822
  %v2824 = vand.u32 %v2823, 4294901760
  %2825 = vmatpush.msra.mxu0 %v2824
  %v2826 = vand.u32 %v2567, 4294901760
  %2827 = vmatmul.f32.gmra.mxu0 %v2826
  %v2828 = vpop.f32.mrf.mxu0
  %v2829 = vadd.f32 %v2788, %v2828
  %2830 = vdwg.mxu0
  %2831 = vmatpush.msra.mxu0 0.0
  %2832 = vmatpush.msra.mxu0 0.0
  %2833 = vmatpush.msra.mxu0 0.0
  %2834 = vmatpush.msra.mxu0 0.0
  %2835 = vmatpush.msra.mxu0 0.0
  %2836 = vmatpush.msra.mxu0 0.0
  %2837 = vmatpush.msra.mxu0 0.0
  %2838 = vmatpush.msra.mxu0 0.0
  %2839 = vmatpush.msra.mxu0 0.0
  %2840 = vmatpush.msra.mxu0 0.0
  %2841 = vmatpush.msra.mxu0 0.0
  %2842 = vmatpush.msra.mxu0 0.0
  %v2843 = vand.u32 %v24, 4294901760
  %v2844 = vsub.f32 %v24, %v2843
  %2845 = vmatpush.msra.mxu0 %v2844
  %v2846 = vand.u32 %v23, 4294901760
  %v2847 = vsub.f32 %v23, %v2846
  %2848 = vmatpush.msra.mxu0 %v2847
  %v2849 = vand.u32 %v22, 4294901760
  %v2850 = vsub.f32 %v22, %v2849
  %2851 = vmatpush.msra.mxu0 %v2850
  %v2852 = vand.u32 %v21, 4294901760
  %v2853 = vsub.f32 %v21, %v2852
  %2854 = vmatpush.msra.mxu0 %v2853
  %v2855 = vand.u32 %v2567, 4294901760
  %v2856 = vsub.f32 %v2567, %v2855
  %2857 = vmatmul.f32.gmra.mxu0 %v2856
  %v2858 = vpop.f32.mrf.mxu0
  %v2859 = vadd.f32 %v2829, %v2858
  %2860 = vdwg.mxu0
  %2861 = vmatpush.msra.mxu0 0.0
  %2862 = vmatpush.msra.mxu0 0.0
  %2863 = vmatpush.msra.mxu0 0.0
  %2864 = vmatpush.msra.mxu0 0.0
  %2865 = vmatpush.msra.mxu0 0.0
  %2866 = vmatpush.msra.mxu0 0.0
  %2867 = vmatpush.msra.mxu0 0.0
  %2868 = vmatpush.msra.mxu0 0.0
  %2869 = vmatpush.msra.mxu0 0.0
  %2870 = vmatpush.msra.mxu0 0.0
  %2871 = vmatpush.msra.mxu0 0.0
  %2872 = vmatpush.msra.mxu0 0.0
  %v2873 = vand.u32 %v24, 4294901760
  %2874 = vmatpush.msra.mxu0 %v2873
  %v2875 = vand.u32 %v23, 4294901760
  %2876 = vmatpush.msra.mxu0 %v2875
  %v2877 = vand.u32 %v22, 4294901760
  %2878 = vmatpush.msra.mxu0 %v2877
  %v2879 = vand.u32 %v21, 4294901760
  %2880 = vmatpush.msra.mxu0 %v2879
  %v2881 = vand.u32 %v2567, 4294901760
  %v2882 = vsub.f32 %v2567, %v2881
  %v2883 = vand.u32 %v2882, 4294901760
  %2884 = vmatmul.f32.gmra.mxu0 %v2883
  %v2885 = vpop.f32.mrf.mxu0
  %v2886 = vadd.f32 %v2859, %v2885
  %2887 = vdwg.mxu0
  %2888 = vmatpush.msra.mxu0 0.0
  %2889 = vmatpush.msra.mxu0 0.0
  %2890 = vmatpush.msra.mxu0 0.0
  %2891 = vmatpush.msra.mxu0 0.0
  %2892 = vmatpush.msra.mxu0 0.0
  %2893 = vmatpush.msra.mxu0 0.0
  %2894 = vmatpush.msra.mxu0 0.0
  %2895 = vmatpush.msra.mxu0 0.0
  %2896 = vmatpush.msra.mxu0 0.0
  %2897 = vmatpush.msra.mxu0 0.0
  %2898 = vmatpush.msra.mxu0 0.0
  %2899 = vmatpush.msra.mxu0 0.0
  %v2900 = vand.u32 %v24, 4294901760
  %v2901 = vsub.f32 %v24, %v2900
  %v2902 = vand.u32 %v2901, 4294901760
  %2903 = vmatpush.msra.mxu0 %v2902
  %v2904 = vand.u32 %v23, 4294901760
  %v2905 = vsub.f32 %v23, %v2904
  %v2906 = vand.u32 %v2905, 4294901760
  %2907 = vmatpush.msra.mxu0 %v2906
  %v2908 = vand.u32 %v22, 4294901760
  %v2909 = vsub.f32 %v22, %v2908
  %v2910 = vand.u32 %v2909, 4294901760
  %2911 = vmatpush.msra.mxu0 %v2910
  %v2912 = vand.u32 %v21, 4294901760
  %v2913 = vsub.f32 %v21, %v2912
  %v2914 = vand.u32 %v2913, 4294901760
  %2915 = vmatpush.msra.mxu0 %v2914
  %v2916 = vand.u32 %v2567, 4294901760
  %2917 = vmatmul.f32.gmra.mxu0 %v2916
  %v2918 = vpop.f32.mrf.mxu0
  %v2919 = vadd.f32 %v2886, %v2918
  %2920 = vdwg.mxu0
  %2921 = vmatpush.msra.mxu0 0.0
  %2922 = vmatpush.msra.mxu0 0.0
  %2923 = vmatpush.msra.mxu0 0.0
  %2924 = vmatpush.msra.mxu0 0.0
  %2925 = vmatpush.msra.mxu0 0.0
  %2926 = vmatpush.msra.mxu0 0.0
  %2927 = vmatpush.msra.mxu0 0.0
  %2928 = vmatpush.msra.mxu0 0.0
  %2929 = vmatpush.msra.mxu0 0.0
  %2930 = vmatpush.msra.mxu0 0.0
  %2931 = vmatpush.msra.mxu0 0.0
  %2932 = vmatpush.msra.mxu0 0.0
  %v2933 = vand.u32 %v24, 4294901760
  %2934 = vmatpush.msra.mxu0 %v2933
  %v2935 = vand.u32 %v23, 4294901760
  %2936 = vmatpush.msra.mxu0 %v2935
  %v2937 = vand.u32 %v22, 4294901760
  %2938 = vmatpush.msra.mxu0 %v2937
  %v2939 = vand.u32 %v21, 4294901760
  %2940 = vmatpush.msra.mxu0 %v2939
  %v2941 = vand.u32 %v2567, 4294901760
  %2942 = vmatmul.f32.gmra.mxu0 %v2941
  %v2943 = vpop.f32.mrf.mxu0
  %v2944 = vadd.f32 %v2919, %v2943
  %2945 = vdwg.mxu0
  %v2946 = vadd.f32 %v2760, %v2944
  %v2947 = vxor.u32 %v2946, 2147483648
  %v2948 = vmul.f32 %v2947, 1.442695
  %v2949 = vpow.pop %v2948
  %v2950 = vadd.f32 %v2949, 1.0
  %v2951 = vrcp.pop %v2950
  %v2952 = vmul.f32 %v2950, %v2951
  %v2953 = vsub.f32 1.0, %v2952
  %v2954 = vmul.f32 %v2951, %v2953
  %v2955 = vadd.f32 %v2951, %v2954
  %vm2956 = vweird.f32 %v2950
  %vm2957 = vweird.f32 %v2951
  %vm2958 = vmor %vm2956, %vm2957
  %v2959 = vsel %vm2958, %v2951, %v2955
  %v2960 = vand.u32 2147483647, %v2950
  %vm2961 = vcmp.eq.f32.partialorder %v2960, 8.507059e+37
  %v2962 = vand.u32 %v2950, 2147483648
  %v2963 = vor.u32 1.1754944e-38, %v2962
  %v2964 = vsel %vm2961, %v2963, %v2959
  %v2965 = vmul.f32 1.0, %v2964
  %v2966 = vtanh.pop %v2946
  %v2967 = vmul.f32 %v2965, %v2557
  %2969 = vrot.lane.b32.xlu0 %v2966, 32
  %v2970 = vpop.permute.xlu0 %2969
  %v2972 = vmul.f32 %v2965, %v2970
  %2974 = vrot.lane.b32.xlu0 %v2972, 32
  %v2975 = vpop.permute.xlu0 %2974
  %v2977 = vadd.f32 %v2967, %v2975
  %v2978 = vtanh.pop %v2977
  %2980 = vrot.lane.b32.xlu0 %v2978, 32
  %v2981 = vpop.permute.xlu0 %2980
  %v2983 = vmul.f32 %v2965, %v2981
  %2985 = vrot.lane.b32.xlu0 %v2983, 64
  %v2986 = vpop.permute.xlu0 %2985
  %v2987 = vsel %vm236, %v2986, 0
  %2989 = vmatpush.msra.mxu0 0.0
  %2990 = vmatpush.msra.mxu0 0.0
  %2991 = vmatpush.msra.mxu0 0.0
  %2992 = vmatpush.msra.mxu0 0.0
  %2993 = vmatpush.msra.mxu0 0.0
  %2994 = vmatpush.msra.mxu0 0.0
  %2995 = vmatpush.msra.mxu0 0.0
  %2996 = vmatpush.msra.mxu0 0.0
  %2997 = vmatpush.msra.mxu0 0.0
  %2998 = vmatpush.msra.mxu0 0.0
  %2999 = vmatpush.msra.mxu0 0.0
  %3000 = vmatpush.msra.mxu0 0.0
  %v3001 = vand.u32 %v29, 4294901760
  %3002 = vmatpush.msra.mxu0 %v3001
  %v3003 = vand.u32 %v28, 4294901760
  %3004 = vmatpush.msra.mxu0 %v3003
  %v3005 = vand.u32 %v27, 4294901760
  %3006 = vmatpush.msra.mxu0 %v3005
  %v3007 = vand.u32 %v26, 4294901760
  %3008 = vmatpush.msra.mxu0 %v3007
  %v3009 = vand.u32 %v2987, 4294901760
  %v3010 = vsub.f32 %v2987, %v3009
  %v3011 = vand.u32 %v3010, 4294901760
  %v3012 = vsub.f32 %v3010, %v3011
  %v3013 = vand.u32 %v3012, 4294901760
  %3014 = vmatmul.f32.gmra.mxu0 %v3013
  %v3015 = vpop.f32.mrf.mxu0
  %v3016 = vadd.f32 %v467, %v3015
  %3017 = vdwg.mxu0
  %3018 = vmatpush.msra.mxu0 0.0
  %3019 = vmatpush.msra.mxu0 0.0
  %3020 = vmatpush.msra.mxu0 0.0
  %3021 = vmatpush.msra.mxu0 0.0
  %3022 = vmatpush.msra.mxu0 0.0
  %3023 = vmatpush.msra.mxu0 0.0
  %3024 = vmatpush.msra.mxu0 0.0
  %3025 = vmatpush.msra.mxu0 0.0
  %3026 = vmatpush.msra.mxu0 0.0
  %3027 = vmatpush.msra.mxu0 0.0
  %3028 = vmatpush.msra.mxu0 0.0
  %3029 = vmatpush.msra.mxu0 0.0
  %v3030 = vand.u32 %v29, 4294901760
  %v3031 = vsub.f32 %v29, %v3030
  %v3032 = vand.u32 %v3031, 4294901760
  %v3033 = vsub.f32 %v3031, %v3032
  %v3034 = vand.u32 %v3033, 4294901760
  %3035 = vmatpush.msra.mxu0 %v3034
  %v3036 = vand.u32 %v28, 4294901760
  %v3037 = vsub.f32 %v28, %v3036
  %v3038 = vand.u32 %v3037, 4294901760
  %v3039 = vsub.f32 %v3037, %v3038
  %v3040 = vand.u32 %v3039, 4294901760
  %3041 = vmatpush.msra.mxu0 %v3040
  %v3042 = vand.u32 %v27, 4294901760
  %v3043 = vsub.f32 %v27, %v3042
  %v3044 = vand.u32 %v3043, 4294901760
  %v3045 = vsub.f32 %v3043, %v3044
  %v3046 = vand.u32 %v3045, 4294901760
  %3047 = vmatpush.msra.mxu0 %v3046
  %v3048 = vand.u32 %v26, 4294901760
  %v3049 = vsub.f32 %v26, %v3048
  %v3050 = vand.u32 %v3049, 4294901760
  %v3051 = vsub.f32 %v3049, %v3050
  %v3052 = vand.u32 %v3051, 4294901760
  %3053 = vmatpush.msra.mxu0 %v3052
  %v3054 = vand.u32 %v2987, 4294901760
  %3055 = vmatmul.f32.gmra.mxu0 %v3054
  %v3056 = vpop.f32.mrf.mxu0
  %v3057 = vadd.f32 %v3016, %v3056
  %3058 = vdwg.mxu0
  %3059 = vmatpush.msra.mxu0 0.0
  %3060 = vmatpush.msra.mxu0 0.0
  %3061 = vmatpush.msra.mxu0 0.0
  %3062 = vmatpush.msra.mxu0 0.0
  %3063 = vmatpush.msra.mxu0 0.0
  %3064 = vmatpush.msra.mxu0 0.0
  %3065 = vmatpush.msra.mxu0 0.0
  %3066 = vmatpush.msra.mxu0 0.0
  %3067 = vmatpush.msra.mxu0 0.0
  %3068 = vmatpush.msra.mxu0 0.0
  %3069 = vmatpush.msra.mxu0 0.0
  %3070 = vmatpush.msra.mxu0 0.0
  %v3071 = vand.u32 %v29, 4294901760
  %v3072 = vsub.f32 %v29, %v3071
  %3073 = vmatpush.msra.mxu0 %v3072
  %v3074 = vand.u32 %v28, 4294901760
  %v3075 = vsub.f32 %v28, %v3074
  %3076 = vmatpush.msra.mxu0 %v3075
  %v3077 = vand.u32 %v27, 4294901760
  %v3078 = vsub.f32 %v27, %v3077
  %3079 = vmatpush.msra.mxu0 %v3078
  %v3080 = vand.u32 %v26, 4294901760
  %v3081 = vsub.f32 %v26, %v3080
  %3082 = vmatpush.msra.mxu0 %v3081
  %v3083 = vand.u32 %v2987, 4294901760
  %v3084 = vsub.f32 %v2987, %v3083
  %3085 = vmatmul.f32.gmra.mxu0 %v3084
  %v3086 = vpop.f32.mrf.mxu0
  %v3087 = vadd.f32 %v3057, %v3086
  %3088 = vdwg.mxu0
  %3089 = vmatpush.msra.mxu0 0.0
  %3090 = vmatpush.msra.mxu0 0.0
  %3091 = vmatpush.msra.mxu0 0.0
  %3092 = vmatpush.msra.mxu0 0.0
  %3093 = vmatpush.msra.mxu0 0.0
  %3094 = vmatpush.msra.mxu0 0.0
  %3095 = vmatpush.msra.mxu0 0.0
  %3096 = vmatpush.msra.mxu0 0.0
  %3097 = vmatpush.msra.mxu0 0.0
  %3098 = vmatpush.msra.mxu0 0.0
  %3099 = vmatpush.msra.mxu0 0.0
  %3100 = vmatpush.msra.mxu0 0.0
  %v3101 = vand.u32 %v29, 4294901760
  %3102 = vmatpush.msra.mxu0 %v3101
  %v3103 = vand.u32 %v28, 4294901760
  %3104 = vmatpush.msra.mxu0 %v3103
  %v3105 = vand.u32 %v27, 4294901760
  %3106 = vmatpush.msra.mxu0 %v3105
  %v3107 = vand.u32 %v26, 4294901760
  %3108 = vmatpush.msra.mxu0 %v3107
  %v3109 = vand.u32 %v2987, 4294901760
  %v3110 = vsub.f32 %v2987, %v3109
  %v3111 = vand.u32 %v3110, 4294901760
  %3112 = vmatmul.f32.gmra.mxu0 %v3111
  %v3113 = vpop.f32.mrf.mxu0
  %v3114 = vadd.f32 %v3087, %v3113
  %3115 = vdwg.mxu0
  %3116 = vmatpush.msra.mxu0 0.0
  %3117 = vmatpush.msra.mxu0 0.0
  %3118 = vmatpush.msra.mxu0 0.0
  %3119 = vmatpush.msra.mxu0 0.0
  %3120 = vmatpush.msra.mxu0 0.0
  %3121 = vmatpush.msra.mxu0 0.0
  %3122 = vmatpush.msra.mxu0 0.0
  %3123 = vmatpush.msra.mxu0 0.0
  %3124 = vmatpush.msra.mxu0 0.0
  %3125 = vmatpush.msra.mxu0 0.0
  %3126 = vmatpush.msra.mxu0 0.0
  %3127 = vmatpush.msra.mxu0 0.0
  %v3128 = vand.u32 %v29, 4294901760
  %v3129 = vsub.f32 %v29, %v3128
  %v3130 = vand.u32 %v3129, 4294901760
  %3131 = vmatpush.msra.mxu0 %v3130
  %v3132 = vand.u32 %v28, 4294901760
  %v3133 = vsub.f32 %v28, %v3132
  %v3134 = vand.u32 %v3133, 4294901760
  %3135 = vmatpush.msra.mxu0 %v3134
  %v3136 = vand.u32 %v27, 4294901760
  %v3137 = vsub.f32 %v27, %v3136
  %v3138 = vand.u32 %v3137, 4294901760
  %3139 = vmatpush.msra.mxu0 %v3138
  %v3140 = vand.u32 %v26, 4294901760
  %v3141 = vsub.f32 %v26, %v3140
  %v3142 = vand.u32 %v3141, 4294901760
  %3143 = vmatpush.msra.mxu0 %v3142
  %v3144 = vand.u32 %v2987, 4294901760
  %3145 = vmatmul.f32.gmra.mxu0 %v3144
  %v3146 = vpop.f32.mrf.mxu0
  %v3147 = vadd.f32 %v3114, %v3146
  %3148 = vdwg.mxu0
  %3149 = vmatpush.msra.mxu0 0.0
  %3150 = vmatpush.msra.mxu0 0.0
  %3151 = vmatpush.msra.mxu0 0.0
  %3152 = vmatpush.msra.mxu0 0.0
  %3153 = vmatpush.msra.mxu0 0.0
  %3154 = vmatpush.msra.mxu0 0.0
  %3155 = vmatpush.msra.mxu0 0.0
  %3156 = vmatpush.msra.mxu0 0.0
  %3157 = vmatpush.msra.mxu0 0.0
  %3158 = vmatpush.msra.mxu0 0.0
  %3159 = vmatpush.msra.mxu0 0.0
  %3160 = vmatpush.msra.mxu0 0.0
  %v3161 = vand.u32 %v29, 4294901760
  %3162 = vmatpush.msra.mxu0 %v3161
  %v3163 = vand.u32 %v28, 4294901760
  %3164 = vmatpush.msra.mxu0 %v3163
  %v3165 = vand.u32 %v27, 4294901760
  %3166 = vmatpush.msra.mxu0 %v3165
  %v3167 = vand.u32 %v26, 4294901760
  %3168 = vmatpush.msra.mxu0 %v3167
  %v3169 = vand.u32 %v2987, 4294901760
  %3170 = vmatmul.f32.gmra.mxu0 %v3169
  %v3171 = vpop.f32.mrf.mxu0
  %v3172 = vadd.f32 %v3147, %v3171
  %3173 = vdwg.mxu0
  %3175 = vrot.lane.b32.xlu0 %v3172, 96
  %v3176 = vpop.permute.xlu0 %3175
  %vm3178 = vcmask 911104
  %3179 = vst.msk [vmem:[%s4] sm:$0x3] %vm3178, %v3176
  %v3180 = vld [vmem:[#allocation2 + $0xe] sm:$0x3]
  %3181 = vmatpush.msra.mxu0 0.0
  %3182 = vmatpush.msra.mxu0 0.0
  %3183 = vmatpush.msra.mxu0 0.0
  %3184 = vmatpush.msra.mxu0 0.0
  %3185 = vmatpush.msra.mxu0 0.0
  %3186 = vmatpush.msra.mxu0 0.0
  %3187 = vmatpush.msra.mxu0 0.0
  %3188 = vmatpush.msra.mxu0 0.0
  %3189 = vmatpush.msra.mxu0 0.0
  %3190 = vmatpush.msra.mxu0 0.0
  %3191 = vmatpush.msra.mxu0 0.0
  %3192 = vmatpush.msra.mxu0 0.0
  %v3193 = vand.u32 %v24, 4294901760
  %3194 = vmatpush.msra.mxu0 %v3193
  %v3195 = vand.u32 %v23, 4294901760
  %3196 = vmatpush.msra.mxu0 %v3195
  %v3197 = vand.u32 %v22, 4294901760
  %3198 = vmatpush.msra.mxu0 %v3197
  %v3199 = vand.u32 %v21, 4294901760
  %3200 = vmatpush.msra.mxu0 %v3199
  %v3201 = vand.u32 %v2987, 4294901760
  %v3202 = vsub.f32 %v2987, %v3201
  %v3203 = vand.u32 %v3202, 4294901760
  %v3204 = vsub.f32 %v3202, %v3203
  %v3205 = vand.u32 %v3204, 4294901760
  %3206 = vmatmul.f32.gmra.mxu0 %v3205
  %v3207 = vpop.f32.mrf.mxu0
  %v3208 = vadd.f32 0.0, %v3207
  %3209 = vdwg.mxu0
  %3210 = vmatpush.msra.mxu0 0.0
  %3211 = vmatpush.msra.mxu0 0.0
  %3212 = vmatpush.msra.mxu0 0.0
  %3213 = vmatpush.msra.mxu0 0.0
  %3214 = vmatpush.msra.mxu0 0.0
  %3215 = vmatpush.msra.mxu0 0.0
  %3216 = vmatpush.msra.mxu0 0.0
  %3217 = vmatpush.msra.mxu0 0.0
  %3218 = vmatpush.msra.mxu0 0.0
  %3219 = vmatpush.msra.mxu0 0.0
  %3220 = vmatpush.msra.mxu0 0.0
  %3221 = vmatpush.msra.mxu0 0.0
  %v3222 = vand.u32 %v24, 4294901760
  %v3223 = vsub.f32 %v24, %v3222
  %v3224 = vand.u32 %v3223, 4294901760
  %v3225 = vsub.f32 %v3223, %v3224
  %v3226 = vand.u32 %v3225, 4294901760
  %3227 = vmatpush.msra.mxu0 %v3226
  %v3228 = vand.u32 %v23, 4294901760
  %v3229 = vsub.f32 %v23, %v3228
  %v3230 = vand.u32 %v3229, 4294901760
  %v3231 = vsub.f32 %v3229, %v3230
  %v3232 = vand.u32 %v3231, 4294901760
  %3233 = vmatpush.msra.mxu0 %v3232
  %v3234 = vand.u32 %v22, 4294901760
  %v3235 = vsub.f32 %v22, %v3234
  %v3236 = vand.u32 %v3235, 4294901760
  %v3237 = vsub.f32 %v3235, %v3236
  %v3238 = vand.u32 %v3237, 4294901760
  %3239 = vmatpush.msra.mxu0 %v3238
  %v3240 = vand.u32 %v21, 4294901760
  %v3241 = vsub.f32 %v21, %v3240
  %v3242 = vand.u32 %v3241, 4294901760
  %v3243 = vsub.f32 %v3241, %v3242
  %v3244 = vand.u32 %v3243, 4294901760
  %3245 = vmatpush.msra.mxu0 %v3244
  %v3246 = vand.u32 %v2987, 4294901760
  %3247 = vmatmul.f32.gmra.mxu0 %v3246
  %v3248 = vpop.f32.mrf.mxu0
  %v3249 = vadd.f32 %v3208, %v3248
  %3250 = vdwg.mxu0
  %3251 = vmatpush.msra.mxu0 0.0
  %3252 = vmatpush.msra.mxu0 0.0
  %3253 = vmatpush.msra.mxu0 0.0
  %3254 = vmatpush.msra.mxu0 0.0
  %3255 = vmatpush.msra.mxu0 0.0
  %3256 = vmatpush.msra.mxu0 0.0
  %3257 = vmatpush.msra.mxu0 0.0
  %3258 = vmatpush.msra.mxu0 0.0
  %3259 = vmatpush.msra.mxu0 0.0
  %3260 = vmatpush.msra.mxu0 0.0
  %3261 = vmatpush.msra.mxu0 0.0
  %3262 = vmatpush.msra.mxu0 0.0
  %v3263 = vand.u32 %v24, 4294901760
  %v3264 = vsub.f32 %v24, %v3263
  %3265 = vmatpush.msra.mxu0 %v3264
  %v3266 = vand.u32 %v23, 4294901760
  %v3267 = vsub.f32 %v23, %v3266
  %3268 = vmatpush.msra.mxu0 %v3267
  %v3269 = vand.u32 %v22, 4294901760
  %v3270 = vsub.f32 %v22, %v3269
  %3271 = vmatpush.msra.mxu0 %v3270
  %v3272 = vand.u32 %v21, 4294901760
  %v3273 = vsub.f32 %v21, %v3272
  %3274 = vmatpush.msra.mxu0 %v3273
  %v3275 = vand.u32 %v2987, 4294901760
  %v3276 = vsub.f32 %v2987, %v3275
  %3277 = vmatmul.f32.gmra.mxu0 %v3276
  %v3278 = vpop.f32.mrf.mxu0
  %v3279 = vadd.f32 %v3249, %v3278
  %3280 = vdwg.mxu0
  %3281 = vmatpush.msra.mxu0 0.0
  %3282 = vmatpush.msra.mxu0 0.0
  %3283 = vmatpush.msra.mxu0 0.0
  %3284 = vmatpush.msra.mxu0 0.0
  %3285 = vmatpush.msra.mxu0 0.0
  %3286 = vmatpush.msra.mxu0 0.0
  %3287 = vmatpush.msra.mxu0 0.0
  %3288 = vmatpush.msra.mxu0 0.0
  %3289 = vmatpush.msra.mxu0 0.0
  %3290 = vmatpush.msra.mxu0 0.0
  %3291 = vmatpush.msra.mxu0 0.0
  %3292 = vmatpush.msra.mxu0 0.0
  %v3293 = vand.u32 %v24, 4294901760
  %3294 = vmatpush.msra.mxu0 %v3293
  %v3295 = vand.u32 %v23, 4294901760
  %3296 = vmatpush.msra.mxu0 %v3295
  %v3297 = vand.u32 %v22, 4294901760
  %3298 = vmatpush.msra.mxu0 %v3297
  %v3299 = vand.u32 %v21, 4294901760
  %3300 = vmatpush.msra.mxu0 %v3299
  %v3301 = vand.u32 %v2987, 4294901760
  %v3302 = vsub.f32 %v2987, %v3301
  %v3303 = vand.u32 %v3302, 4294901760
  %3304 = vmatmul.f32.gmra.mxu0 %v3303
  %v3305 = vpop.f32.mrf.mxu0
  %v3306 = vadd.f32 %v3279, %v3305
  %3307 = vdwg.mxu0
  %3308 = vmatpush.msra.mxu0 0.0
  %3309 = vmatpush.msra.mxu0 0.0
  %3310 = vmatpush.msra.mxu0 0.0
  %3311 = vmatpush.msra.mxu0 0.0
  %3312 = vmatpush.msra.mxu0 0.0
  %3313 = vmatpush.msra.mxu0 0.0
  %3314 = vmatpush.msra.mxu0 0.0
  %3315 = vmatpush.msra.mxu0 0.0
  %3316 = vmatpush.msra.mxu0 0.0
  %3317 = vmatpush.msra.mxu0 0.0
  %3318 = vmatpush.msra.mxu0 0.0
  %3319 = vmatpush.msra.mxu0 0.0
  %v3320 = vand.u32 %v24, 4294901760
  %v3321 = vsub.f32 %v24, %v3320
  %v3322 = vand.u32 %v3321, 4294901760
  %3323 = vmatpush.msra.mxu0 %v3322
  %v3324 = vand.u32 %v23, 4294901760
  %v3325 = vsub.f32 %v23, %v3324
  %v3326 = vand.u32 %v3325, 4294901760
  %3327 = vmatpush.msra.mxu0 %v3326
  %v3328 = vand.u32 %v22, 4294901760
  %v3329 = vsub.f32 %v22, %v3328
  %v3330 = vand.u32 %v3329, 4294901760
  %3331 = vmatpush.msra.mxu0 %v3330
  %v3332 = vand.u32 %v21, 4294901760
  %v3333 = vsub.f32 %v21, %v3332
  %v3334 = vand.u32 %v3333, 4294901760
  %3335 = vmatpush.msra.mxu0 %v3334
  %v3336 = vand.u32 %v2987, 4294901760
  %3337 = vmatmul.f32.gmra.mxu0 %v3336
  %v3338 = vpop.f32.mrf.mxu0
  %v3339 = vadd.f32 %v3306, %v3338
  %3340 = vdwg.mxu0
  %3341 = vmatpush.msra.mxu0 0.0
  %3342 = vmatpush.msra.mxu0 0.0
  %3343 = vmatpush.msra.mxu0 0.0
  %3344 = vmatpush.msra.mxu0 0.0
  %3345 = vmatpush.msra.mxu0 0.0
  %3346 = vmatpush.msra.mxu0 0.0
  %3347 = vmatpush.msra.mxu0 0.0
  %3348 = vmatpush.msra.mxu0 0.0
  %3349 = vmatpush.msra.mxu0 0.0
  %3350 = vmatpush.msra.mxu0 0.0
  %3351 = vmatpush.msra.mxu0 0.0
  %3352 = vmatpush.msra.mxu0 0.0
  %v3353 = vand.u32 %v24, 4294901760
  %3354 = vmatpush.msra.mxu0 %v3353
  %v3355 = vand.u32 %v23, 4294901760
  %3356 = vmatpush.msra.mxu0 %v3355
  %v3357 = vand.u32 %v22, 4294901760
  %3358 = vmatpush.msra.mxu0 %v3357
  %v3359 = vand.u32 %v21, 4294901760
  %3360 = vmatpush.msra.mxu0 %v3359
  %v3361 = vand.u32 %v2987, 4294901760
  %3362 = vmatmul.f32.gmra.mxu0 %v3361
  %v3363 = vpop.f32.mrf.mxu0
  %v3364 = vadd.f32 %v3339, %v3363
  %3365 = vdwg.mxu0
  %v3366 = vadd.f32 %v3180, %v3364
  %v3367 = vxor.u32 %v3366, 2147483648
  %v3368 = vmul.f32 %v3367, 1.442695
  %v3369 = vpow.pop %v3368
  %v3370 = vadd.f32 %v3369, 1.0
  %v3371 = vrcp.pop %v3370
  %v3372 = vmul.f32 %v3370, %v3371
  %v3373 = vsub.f32 1.0, %v3372
  %v3374 = vmul.f32 %v3371, %v3373
  %v3375 = vadd.f32 %v3371, %v3374
  %vm3376 = vweird.f32 %v3370
  %vm3377 = vweird.f32 %v3371
  %vm3378 = vmor %vm3376, %vm3377
  %v3379 = vsel %vm3378, %v3371, %v3375
  %v3380 = vand.u32 2147483647, %v3370
  %vm3381 = vcmp.eq.f32.partialorder %v3380, 8.507059e+37
  %v3382 = vand.u32 %v3370, 2147483648
  %v3383 = vor.u32 1.1754944e-38, %v3382
  %v3384 = vsel %vm3381, %v3383, %v3379
  %v3385 = vmul.f32 1.0, %v3384
  %v3386 = vtanh.pop %v3366
  %v3387 = vmul.f32 %v3385, %v2977
  %3389 = vrot.lane.b32.xlu0 %v3386, 32
  %v3390 = vpop.permute.xlu0 %3389
  %v3392 = vmul.f32 %v3385, %v3390
  %3394 = vrot.lane.b32.xlu0 %v3392, 32
  %v3395 = vpop.permute.xlu0 %3394
  %v3397 = vadd.f32 %v3387, %v3395
  %v3398 = vtanh.pop %v3397
  %3400 = vrot.lane.b32.xlu0 %v3398, 32
  %v3401 = vpop.permute.xlu0 %3400
  %v3403 = vmul.f32 %v3385, %v3401
  %3405 = vrot.lane.b32.xlu0 %v3403, 64
  %v3406 = vpop.permute.xlu0 %3405
  %v3407 = vsel %vm236, %v3406, 0
  %3409 = vmatpush.msra.mxu0 0.0
  %3410 = vmatpush.msra.mxu0 0.0
  %3411 = vmatpush.msra.mxu0 0.0
  %3412 = vmatpush.msra.mxu0 0.0
  %3413 = vmatpush.msra.mxu0 0.0
  %3414 = vmatpush.msra.mxu0 0.0
  %3415 = vmatpush.msra.mxu0 0.0
  %3416 = vmatpush.msra.mxu0 0.0
  %3417 = vmatpush.msra.mxu0 0.0
  %3418 = vmatpush.msra.mxu0 0.0
  %3419 = vmatpush.msra.mxu0 0.0
  %3420 = vmatpush.msra.mxu0 0.0
  %v3421 = vand.u32 %v29, 4294901760
  %3422 = vmatpush.msra.mxu0 %v3421
  %v3423 = vand.u32 %v28, 4294901760
  %3424 = vmatpush.msra.mxu0 %v3423
  %v3425 = vand.u32 %v27, 4294901760
  %3426 = vmatpush.msra.mxu0 %v3425
  %v3427 = vand.u32 %v26, 4294901760
  %3428 = vmatpush.msra.mxu0 %v3427
  %v3429 = vand.u32 %v3407, 4294901760
  %v3430 = vsub.f32 %v3407, %v3429
  %v3431 = vand.u32 %v3430, 4294901760
  %v3432 = vsub.f32 %v3430, %v3431
  %v3433 = vand.u32 %v3432, 4294901760
  %3434 = vmatmul.f32.gmra.mxu0 %v3433
  %v3435 = vpop.f32.mrf.mxu0
  %v3436 = vadd.f32 %v467, %v3435
  %3437 = vdwg.mxu0
  %3438 = vmatpush.msra.mxu0 0.0
  %3439 = vmatpush.msra.mxu0 0.0
  %3440 = vmatpush.msra.mxu0 0.0
  %3441 = vmatpush.msra.mxu0 0.0
  %3442 = vmatpush.msra.mxu0 0.0
  %3443 = vmatpush.msra.mxu0 0.0
  %3444 = vmatpush.msra.mxu0 0.0
  %3445 = vmatpush.msra.mxu0 0.0
  %3446 = vmatpush.msra.mxu0 0.0
  %3447 = vmatpush.msra.mxu0 0.0
  %3448 = vmatpush.msra.mxu0 0.0
  %3449 = vmatpush.msra.mxu0 0.0
  %v3450 = vand.u32 %v29, 4294901760
  %v3451 = vsub.f32 %v29, %v3450
  %v3452 = vand.u32 %v3451, 4294901760
  %v3453 = vsub.f32 %v3451, %v3452
  %v3454 = vand.u32 %v3453, 4294901760
  %3455 = vmatpush.msra.mxu0 %v3454
  %v3456 = vand.u32 %v28, 4294901760
  %v3457 = vsub.f32 %v28, %v3456
  %v3458 = vand.u32 %v3457, 4294901760
  %v3459 = vsub.f32 %v3457, %v3458
  %v3460 = vand.u32 %v3459, 4294901760
  %3461 = vmatpush.msra.mxu0 %v3460
  %v3462 = vand.u32 %v27, 4294901760
  %v3463 = vsub.f32 %v27, %v3462
  %v3464 = vand.u32 %v3463, 4294901760
  %v3465 = vsub.f32 %v3463, %v3464
  %v3466 = vand.u32 %v3465, 4294901760
  %3467 = vmatpush.msra.mxu0 %v3466
  %v3468 = vand.u32 %v26, 4294901760
  %v3469 = vsub.f32 %v26, %v3468
  %v3470 = vand.u32 %v3469, 4294901760
  %v3471 = vsub.f32 %v3469, %v3470
  %v3472 = vand.u32 %v3471, 4294901760
  %3473 = vmatpush.msra.mxu0 %v3472
  %v3474 = vand.u32 %v3407, 4294901760
  %3475 = vmatmul.f32.gmra.mxu0 %v3474
  %v3476 = vpop.f32.mrf.mxu0
  %v3477 = vadd.f32 %v3436, %v3476
  %3478 = vdwg.mxu0
  %3479 = vmatpush.msra.mxu0 0.0
  %3480 = vmatpush.msra.mxu0 0.0
  %3481 = vmatpush.msra.mxu0 0.0
  %3482 = vmatpush.msra.mxu0 0.0
  %3483 = vmatpush.msra.mxu0 0.0
  %3484 = vmatpush.msra.mxu0 0.0
  %3485 = vmatpush.msra.mxu0 0.0
  %3486 = vmatpush.msra.mxu0 0.0
  %3487 = vmatpush.msra.mxu0 0.0
  %3488 = vmatpush.msra.mxu0 0.0
  %3489 = vmatpush.msra.mxu0 0.0
  %3490 = vmatpush.msra.mxu0 0.0
  %v3491 = vand.u32 %v29, 4294901760
  %v3492 = vsub.f32 %v29, %v3491
  %3493 = vmatpush.msra.mxu0 %v3492
  %v3494 = vand.u32 %v28, 4294901760
  %v3495 = vsub.f32 %v28, %v3494
  %3496 = vmatpush.msra.mxu0 %v3495
  %v3497 = vand.u32 %v27, 4294901760
  %v3498 = vsub.f32 %v27, %v3497
  %3499 = vmatpush.msra.mxu0 %v3498
  %v3500 = vand.u32 %v26, 4294901760
  %v3501 = vsub.f32 %v26, %v3500
  %3502 = vmatpush.msra.mxu0 %v3501
  %v3503 = vand.u32 %v3407, 4294901760
  %v3504 = vsub.f32 %v3407, %v3503
  %3505 = vmatmul.f32.gmra.mxu0 %v3504
  %v3506 = vpop.f32.mrf.mxu0
  %v3507 = vadd.f32 %v3477, %v3506
  %3508 = vdwg.mxu0
  %3509 = vmatpush.msra.mxu0 0.0
  %3510 = vmatpush.msra.mxu0 0.0
  %3511 = vmatpush.msra.mxu0 0.0
  %3512 = vmatpush.msra.mxu0 0.0
  %3513 = vmatpush.msra.mxu0 0.0
  %3514 = vmatpush.msra.mxu0 0.0
  %3515 = vmatpush.msra.mxu0 0.0
  %3516 = vmatpush.msra.mxu0 0.0
  %3517 = vmatpush.msra.mxu0 0.0
  %3518 = vmatpush.msra.mxu0 0.0
  %3519 = vmatpush.msra.mxu0 0.0
  %3520 = vmatpush.msra.mxu0 0.0
  %v3521 = vand.u32 %v29, 4294901760
  %3522 = vmatpush.msra.mxu0 %v3521
  %v3523 = vand.u32 %v28, 4294901760
  %3524 = vmatpush.msra.mxu0 %v3523
  %v3525 = vand.u32 %v27, 4294901760
  %3526 = vmatpush.msra.mxu0 %v3525
  %v3527 = vand.u32 %v26, 4294901760
  %3528 = vmatpush.msra.mxu0 %v3527
  %v3529 = vand.u32 %v3407, 4294901760
  %v3530 = vsub.f32 %v3407, %v3529
  %v3531 = vand.u32 %v3530, 4294901760
  %3532 = vmatmul.f32.gmra.mxu0 %v3531
  %v3533 = vpop.f32.mrf.mxu0
  %v3534 = vadd.f32 %v3507, %v3533
  %3535 = vdwg.mxu0
  %3536 = vmatpush.msra.mxu0 0.0
  %3537 = vmatpush.msra.mxu0 0.0
  %3538 = vmatpush.msra.mxu0 0.0
  %3539 = vmatpush.msra.mxu0 0.0
  %3540 = vmatpush.msra.mxu0 0.0
  %3541 = vmatpush.msra.mxu0 0.0
  %3542 = vmatpush.msra.mxu0 0.0
  %3543 = vmatpush.msra.mxu0 0.0
  %3544 = vmatpush.msra.mxu0 0.0
  %3545 = vmatpush.msra.mxu0 0.0
  %3546 = vmatpush.msra.mxu0 0.0
  %3547 = vmatpush.msra.mxu0 0.0
  %v3548 = vand.u32 %v29, 4294901760
  %v3549 = vsub.f32 %v29, %v3548
  %v3550 = vand.u32 %v3549, 4294901760
  %3551 = vmatpush.msra.mxu0 %v3550
  %v3552 = vand.u32 %v28, 4294901760
  %v3553 = vsub.f32 %v28, %v3552
  %v3554 = vand.u32 %v3553, 4294901760
  %3555 = vmatpush.msra.mxu0 %v3554
  %v3556 = vand.u32 %v27, 4294901760
  %v3557 = vsub.f32 %v27, %v3556
  %v3558 = vand.u32 %v3557, 4294901760
  %3559 = vmatpush.msra.mxu0 %v3558
  %v3560 = vand.u32 %v26, 4294901760
  %v3561 = vsub.f32 %v26, %v3560
  %v3562 = vand.u32 %v3561, 4294901760
  %3563 = vmatpush.msra.mxu0 %v3562
  %v3564 = vand.u32 %v3407, 4294901760
  %3565 = vmatmul.f32.gmra.mxu0 %v3564
  %v3566 = vpop.f32.mrf.mxu0
  %v3567 = vadd.f32 %v3534, %v3566
  %3568 = vdwg.mxu0
  %3569 = vmatpush.msra.mxu0 0.0
  %3570 = vmatpush.msra.mxu0 0.0
  %3571 = vmatpush.msra.mxu0 0.0
  %3572 = vmatpush.msra.mxu0 0.0
  %3573 = vmatpush.msra.mxu0 0.0
  %3574 = vmatpush.msra.mxu0 0.0
  %3575 = vmatpush.msra.mxu0 0.0
  %3576 = vmatpush.msra.mxu0 0.0
  %3577 = vmatpush.msra.mxu0 0.0
  %3578 = vmatpush.msra.mxu0 0.0
  %3579 = vmatpush.msra.mxu0 0.0
  %3580 = vmatpush.msra.mxu0 0.0
  %v3581 = vand.u32 %v29, 4294901760
  %3582 = vmatpush.msra.mxu0 %v3581
  %v3583 = vand.u32 %v28, 4294901760
  %3584 = vmatpush.msra.mxu0 %v3583
  %v3585 = vand.u32 %v27, 4294901760
  %3586 = vmatpush.msra.mxu0 %v3585
  %v3587 = vand.u32 %v26, 4294901760
  %3588 = vmatpush.msra.mxu0 %v3587
  %v3589 = vand.u32 %v3407, 4294901760
  %3590 = vmatmul.f32.gmra.mxu0 %v3589
  %v3591 = vpop.f32.mrf.mxu0
  %v3592 = vadd.f32 %v3567, %v3591
  %3593 = vdwg.mxu0
  %3595 = vrot.lane.b32.xlu0 %v3592, 112
  %v3596 = vpop.permute.xlu0 %3595
  %vm3598 = vcmask 1042304
  %3599 = vst.msk [vmem:[%s4] sm:$0x3] %vm3598, %v3596
  %vm3601 = vcmask 254976
  %3602 = vst.msk [vmem:[%s5] sm:$0x3] %vm3601, %v3406
  %3604 = vrot.lane.b32.xlu0 %v3397, 96
  %v3605 = vpop.permute.xlu0 %3604
  %3607 = vst.msk [vmem:[%s5 + $0x2] sm:$0x3] %vm3601, %v3605
  // Predicated region
  $region18: #{decoder_model_lstm_forward.1} parent=0 // pred_check
    _
  $region19: #{decoder_model_lstm_forward.1} parent=0 // pred_check_branch
    %3609 = sbr.rel (0) target = $region21
  $region20: #{decoder_model_lstm_forward.1} parent=0 // pred_region
    _
  $region21: #{decoder_model_lstm_forward.1} parent=0 // pred_fallthru
    _
  // Predicated region
  $region22: #{decoder_model_lstm_forward.1} parent=0 // pred_check
    _
  $region23: #{decoder_model_lstm_forward.1} parent=0 // pred_check_branch
    %3611 = sbr.rel (0) target = $region25
  $region24: #{decoder_model_lstm_forward.1} parent=0 // pred_region
    _
  $region25: #{decoder_model_lstm_forward.1} parent=0 // pred_fallthru
    _
  // Predicated region
  $region26: #{decoder_model_lstm_forward.1} parent=0 // pred_check
    _
  $region27: #{decoder_model_lstm_forward.1} parent=0 // pred_check_branch
    %3613 = sbr.rel (0) target = $region29
  $region28: #{decoder_model_lstm_forward.1} parent=0 // pred_region
    _
  $region29: #{decoder_model_lstm_forward.1} parent=0 // pred_fallthru
    _
  // Predicated region
  $region30: #{decoder_model_lstm_forward.1} parent=0 // pred_check
    _
  $region31: #{decoder_model_lstm_forward.1} parent=0 // pred_check_branch
    %3615 = sbr.rel (0) target = $region33
  $region32: #{decoder_model_lstm_forward.1} parent=0 // pred_region
    _
  $region33: #{decoder_model_lstm_forward.1} parent=0 // pred_fallthru
    _

</llo_original>
